<compile_context>
chip_gen: v7x
topology: tpu7x:2x2x1
jax: 0.10.0
libtpu: 0.0.40
codegen_flags: <defaults>
</compile_context>

<pallas_src>
import math

import jax
import jax.numpy as jnp
from jax.experimental import pallas as pl
from jax.experimental.pallas import tpu as pltpu

# ---------------- small, module-consistent config ----------------
IMG = 16          # img_size
PATCH = 4         # patch_size
IN_CH = 4         # in_chans
EMBED = 32        # embed_dim
DEPTH = 2         # depth
HEADS = 4         # num_heads
MLP_RATIO = 4.0
HIDDEN = int(EMBED * MLP_RATIO)          # dim_feedforward = 128
NUM_PATCHES = (IMG // PATCH) ** 2        # 16
SEQ = NUM_PATCHES + 1                    # 17 (CLS + patches)
HEAD_DIM = EMBED // HEADS                # 8
EPS = 1e-5                               # LayerNorm eps (PyTorch default)
CPP = IN_CH * PATCH * PATCH              # flattened patch size = 64
NEG_INF = -1e30                          # cross-batch attention mask value

# Bias packing below puts [bq|bk|bv|bo] (width 4*EMBED) and b1 (width HIDDEN)
# in the same (DEPTH, 2, 4*EMBED) tensor; that relies on mlp_ratio == 4.
assert HIDDEN == 4 * EMBED


def _vmem_full():
    # whole array resident in VMEM (gridless call, no tiling)
    return pl.BlockSpec(memory_space=pltpu.MemorySpace.VMEM)


def _layernorm(x, gamma, beta):
    mu = jnp.mean(x, axis=-1, keepdims=True)
    var = jnp.mean((x - mu) ** 2, axis=-1, keepdims=True)
    return (x - mu) * jax.lax.rsqrt(var + EPS) * gamma + beta


# ---------------- single fused forward kernel ----------------
def fused_forward_kernel(
    patches_ref,   # (B*SEQ, CPP)    zero rows at the CLS positions
    w_pe_ref,      # (CPP, EMBED)    patch-embed weight
    add_ref,       # (SEQ, EMBED)    cls/pos/conv-bias additive base (per seq pos)
    mask_ref,      # (B*SEQ, B*SEQ)  0 inside a batch block, NEG_INF across
    w_attn_ref,    # (DEPTH, EMBED, 4*EMBED)  [wq|wk|wv|wo]
    b_attn_ref,    # (DEPTH, 2, 4*EMBED)      row0 = [bq|bk|bv|bo], row1 = b1
    w_mlp1_ref,    # (DEPTH, EMBED, HIDDEN)
    w_mlp2_ref,    # (DEPTH, HIDDEN, EMBED)
    ln_ref,        # (DEPTH, 5, EMBED)        rows: g1, be1, b2, g2, be2
    final_ref,     # (2, EMBED)               rows: g_f, b_f
    out_ref,       # (B, EMBED)
):
    n_rows = patches_ref.shape[0]     # B*SEQ (static)
    bsz = n_rows // SEQ

    # Patch embedding for the whole batch in one matmul.  CLS rows are zero
    # patch rows; their content comes entirely from the additive base.
    add_full = jnp.concatenate([add_ref[...]] * bsz, axis=0)       # (B*SEQ, E)
    x = (
        jnp.dot(patches_ref[...], w_pe_ref[...],
                preferred_element_type=jnp.float32)
        + add_full
    )                                                              # (B*SEQ, E)

    mask = mask_ref[...]                                           # (B*SEQ, B*SEQ)
    scale = 1.0 / math.sqrt(HEAD_DIM)

    for li in range(DEPTH):
        w_full = w_attn_ref[li]        # (E, 4E)  [wq|wk|wv|wo]
        b_rows = b_attn_ref[li]        # (2, 4E)
        w1 = w_mlp1_ref[li]            # (E, H)
        w2 = w_mlp2_ref[li]            # (H, E)
        lv = ln_ref[li]                # (5, E)

        # ---- fused Q/K/V projection: ONE MXU matmul per layer ----
        # (the trailing wo columns of proj are computed but unused)
        proj = (
            jnp.dot(x, w_full, preferred_element_type=jnp.float32)
            + b_rows[0:1, :]
        )                                                          # (B*SEQ, 4E)
        q = proj[:, 0:EMBED] * scale   # fold 1/sqrt(head_dim) into Q once
        k = proj[:, EMBED:2 * EMBED]
        v = proj[:, 2 * EMBED:3 * EMBED]

        # ---- attention batched over B, static unroll over heads ----
        heads = []
        for h in range(HEADS):
            lo = h * HEAD_DIM
            hi = lo + HEAD_DIM
            # scores: contract head_dim without explicit transpose
            s = jax.lax.dot_general(
                q[:, lo:hi], k[:, lo:hi],
                (((1,), (1,)), ((), ())),
                preferred_element_type=jnp.float32,
            ) + mask                                               # (B*SEQ, B*SEQ)
            s = s - jnp.max(s, axis=-1, keepdims=True)
            p = jnp.exp(s)
            p = p * pl.reciprocal(
                jnp.sum(p, axis=-1, keepdims=True), approx=True
            )
            heads.append(
                jnp.dot(p, v[:, lo:hi], preferred_element_type=jnp.float32)
            )
        # head outputs stay in vregs -> straight into the out-projection
        attn = jnp.concatenate(heads, axis=-1)                     # (B*SEQ, E)

        wo = w_full[:, 3 * EMBED:4 * EMBED]
        bo = b_rows[0:1, 3 * EMBED:4 * EMBED]
        attn = jnp.dot(attn, wo, preferred_element_type=jnp.float32) + bo

        # ---- residual + LayerNorm1 (post-norm) ----
        x = _layernorm(x + attn, lv[0:1, :], lv[1:2, :])

        # ---- feed-forward (relu) + residual + LayerNorm2 ----
        h1 = jnp.maximum(
            jnp.dot(x, w1, preferred_element_type=jnp.float32) + b_rows[1:2, :],
            0.0,
        )
        h2 = jnp.dot(h1, w2, preferred_element_type=jnp.float32) + lv[2:3, :]
        x = _layernorm(x + h2, lv[3:4, :], lv[4:5, :])

    # ---- final LayerNorm on the gathered CLS rows; single HBM store ----
    cls_rows = jnp.concatenate(
        [x[b * SEQ:b * SEQ + 1, :] for b in range(bsz)], axis=0
    )                                                              # (B, E)
    fin = final_ref[...]
    out_ref[...] = _layernorm(cls_rows, fin[0:1, :], fin[1:2, :])


def fused_forward_call(inputs, batch):
    return pl.pallas_call(
        fused_forward_kernel,
        out_shape=jax.ShapeDtypeStruct((batch, EMBED), jnp.float32),
        in_specs=[_vmem_full() for _ in inputs],
        out_specs=_vmem_full(),
    )(*inputs)


# ---------------- parameter init (deterministic, synthetic) ----------------
def init_params(key):
    keys = iter(jax.random.split(key, 4 + DEPTH * 8))

    def tn(shape, std=0.02):  # stand-in for trunc_normal_(std=0.02)
        return (std * jax.random.normal(next(keys), shape)).astype(jnp.float32)

    params = {}
    # Conv2d patch embed, kaiming_normal_(mode='fan_out'): std = sqrt(2/fan_out)
    fan_out = EMBED * PATCH * PATCH
    w_conv = (
        jax.random.normal(next(keys), (EMBED, IN_CH, PATCH, PATCH))
        * math.sqrt(2.0 / fan_out)
    ).astype(jnp.float32)
    # flatten to (C*P*P, E) matching the (c, kh, kw) patch-flatten order
    params["w_pe"] = w_conv.reshape(EMBED, CPP).T
    params["b_pe"] = jnp.zeros((1, EMBED), jnp.float32)
    params["cls"] = tn((1, 1, EMBED))
    params["pos"] = tn((1, SEQ, EMBED))

    layers = []
    for _ in range(DEPTH):
        lp = {
            "wq": tn((EMBED, EMBED)), "bq": jnp.zeros((1, EMBED), jnp.float32),
            "wk": tn((EMBED, EMBED)), "bk": jnp.zeros((1, EMBED), jnp.float32),
            "wv": tn((EMBED, EMBED)), "bv": jnp.zeros((1, EMBED), jnp.float32),
            "wo": tn((EMBED, EMBED)), "bo": jnp.zeros((1, EMBED), jnp.float32),
            "g1": jnp.ones((1, EMBED), jnp.float32),
            "be1": jnp.zeros((1, EMBED), jnp.float32),
            "w1": tn((EMBED, HIDDEN)), "b1": jnp.zeros((1, HIDDEN), jnp.float32),
            "w2": tn((HIDDEN, EMBED)), "b2": jnp.zeros((1, EMBED), jnp.float32),
            "g2": jnp.ones((1, EMBED), jnp.float32),
            "be2": jnp.zeros((1, EMBED), jnp.float32),
        }
        layers.append(lp)
    params["layers"] = layers
    params["g_f"] = jnp.ones((1, EMBED), jnp.float32)
    params["b_f"] = jnp.zeros((1, EMBED), jnp.float32)
    return params


# ---------------- full forward (layout plumbing + one kernel) ----------
def image_bert_forward(x, params):
    B = x.shape[0]
    p = PATCH

    # non-overlapping patch extraction (pure reshape/transpose), patch row
    # flatten order (c, kh, kw) matches the w_pe flattening above.
    xp = x.reshape(B, IN_CH, IMG // p, p, IMG // p, p)
    xp = xp.transpose(0, 2, 4, 1, 3, 5).reshape(B, NUM_PATCHES, CPP)
    # prepend a zero "patch" per batch element for the CLS position so the
    # kernel's single matmul produces the full (B*SEQ, EMBED) sequence.
    patches = jnp.concatenate(
        [jnp.zeros((B, 1, CPP), jnp.float32), xp], axis=1
    ).reshape(B * SEQ, CPP)

    # additive base (SEQ, EMBED): row 0 = cls + pos[0]; rows 1.. = pos + b_pe.
    # NOT tiled to (B*SEQ, EMBED) — the kernel broadcasts it per batch block.
    pos = params["pos"].reshape(SEQ, EMBED)
    cls = params["cls"].reshape(1, EMBED)
    add_base = jnp.concatenate([cls + pos[0:1], pos[1:] + params["b_pe"]], axis=0)

    # block-diagonal cross-batch attention mask (constant-folded under jit).
    bid = jnp.arange(B * SEQ, dtype=jnp.int32) // SEQ
    mask = jnp.where(bid[:, None] == bid[None, :], 0.0, NEG_INF).astype(jnp.float32)

    # ---- pack per-layer weights into a handful of stacked operands ----
    layers = params["layers"]
    w_attn = jnp.stack([
        jnp.concatenate([lp["wq"], lp["wk"], lp["wv"], lp["wo"]], axis=1)
        for lp in layers
    ])                                                    # (DEPTH, E, 4E)
    b_attn = jnp.stack([
        jnp.concatenate([
            jnp.concatenate([lp["bq"], lp["bk"], lp["bv"], lp["bo"]], axis=1),
            lp["b1"],
        ], axis=0)
        for lp in layers
    ])                                                    # (DEPTH, 2, 4E)
    w_mlp1 = jnp.stack([lp["w1"] for lp in layers])       # (DEPTH, E, H)
    w_mlp2 = jnp.stack([lp["w2"] for lp in layers])       # (DEPTH, H, E)
    ln_vecs = jnp.stack([
        jnp.concatenate([lp["g1"], lp["be1"], lp["b2"], lp["g2"], lp["be2"]],
                        axis=0)
        for lp in layers
    ])                                                    # (DEPTH, 5, E)
    final_ln = jnp.concatenate([params["g_f"], params["b_f"]], axis=0)  # (2, E)

    inputs = [patches, params["w_pe"], add_base, mask,
              w_attn, b_attn, w_mlp1, w_mlp2, ln_vecs, final_ln]

    return fused_forward_call(inputs, B)  # (B, EMBED) CLS embedding


if __name__ == "__main__":
    key = jax.random.PRNGKey(0)
    pkey, xkey = jax.random.split(key)
    params = init_params(pkey)
    x = jax.random.normal(xkey, (2, IN_CH, IMG, IMG), dtype=jnp.float32)

    fwd = jax.jit(image_bert_forward)
    out = fwd(x, params)
    out = jax.block_until_ready(out)

    assert out.shape == (2, EMBED), out.shape
    assert bool(jnp.all(jnp.isfinite(out)))
    print("KERNEL_OK")
</pallas_src>

<mosaic_0001>
module attributes {stable_mosaic.version = 11 : i64} {
  func.func @fused_forward_kernel(%arg0: memref<34x64xf32, #tpu.memory_space<vmem>>, %arg1: memref<64x32xf32, #tpu.memory_space<vmem>>, %arg2: memref<17x32xf32, #tpu.memory_space<vmem>>, %arg3: memref<34x34xf32, #tpu.memory_space<vmem>>, %arg4: memref<2x32x128xf32, #tpu.memory_space<vmem>>, %arg5: memref<2x2x128xf32, #tpu.memory_space<vmem>>, %arg6: memref<2x32x128xf32, #tpu.memory_space<vmem>>, %arg7: memref<2x128x32xf32, #tpu.memory_space<vmem>>, %arg8: memref<2x5x32xf32, #tpu.memory_space<vmem>>, %arg9: memref<2x32xf32, #tpu.memory_space<vmem>>, %arg10: memref<2x32xf32, #tpu.memory_space<vmem>>) attributes {dimension_semantics = [], scalar_prefetch = 0 : i64, scratch_operands = 0 : i64, tpu.core_type = #tpu.core_type<tc>} {
    %c0 = arith.constant 0 : index
    %c0_0 = arith.constant 0 : index
    %0 = vector.load %arg2[%c0, %c0_0] : memref<17x32xf32, #tpu.memory_space<vmem>>, vector<17x32xf32>
    %1 = tpu.concatenate %0, %0 in 0 : vector<17x32xf32>, vector<17x32xf32> -> vector<34x32xf32>
    %c0_1 = arith.constant 0 : index
    %c0_2 = arith.constant 0 : index
    %2 = vector.load %arg0[%c0_1, %c0_2] : memref<34x64xf32, #tpu.memory_space<vmem>>, vector<34x64xf32>
    %c0_3 = arith.constant 0 : index
    %c0_4 = arith.constant 0 : index
    %3 = vector.load %arg1[%c0_3, %c0_4] : memref<64x32xf32, #tpu.memory_space<vmem>>, vector<64x32xf32>
    %cst = arith.constant dense<0.000000e+00> : vector<34x32xf32>
    %4 = tpu.matmul %2, %3, %cst {dimension_numbers = #tpu.dot_dimension_numbers<[1], [0], [0], [1], [0, 0, 1, 1], [], []>} : vector<34x64xf32>, vector<64x32xf32>, vector<34x32xf32> -> vector<34x32xf32>
    %5 = arith.addf %4, %1 : vector<34x32xf32>
    %c0_5 = arith.constant 0 : index
    %c0_6 = arith.constant 0 : index
    %6 = vector.load %arg3[%c0_5, %c0_6] : memref<34x34xf32, #tpu.memory_space<vmem>>, vector<34x34xf32>
    %c0_7 = arith.constant 0 : index
    %c0_8 = arith.constant 0 : index
    %c0_9 = arith.constant 0 : index
    %7 = vector.load %arg4[%c0_7, %c0_8, %c0_9] : memref<2x32x128xf32, #tpu.memory_space<vmem>>, vector<1x32x128xf32>
    %8 = vector.shape_cast %7 : vector<1x32x128xf32> to vector<32x128xf32>
    %c0_10 = arith.constant 0 : index
    %c0_11 = arith.constant 0 : index
    %c0_12 = arith.constant 0 : index
    %9 = vector.load %arg5[%c0_10, %c0_11, %c0_12] : memref<2x2x128xf32, #tpu.memory_space<vmem>>, vector<1x2x128xf32>
    %10 = vector.shape_cast %9 : vector<1x2x128xf32> to vector<2x128xf32>
    %c0_13 = arith.constant 0 : index
    %c0_14 = arith.constant 0 : index
    %c0_15 = arith.constant 0 : index
    %11 = vector.load %arg6[%c0_13, %c0_14, %c0_15] : memref<2x32x128xf32, #tpu.memory_space<vmem>>, vector<1x32x128xf32>
    %12 = vector.shape_cast %11 : vector<1x32x128xf32> to vector<32x128xf32>
    %c0_16 = arith.constant 0 : index
    %c0_17 = arith.constant 0 : index
    %c0_18 = arith.constant 0 : index
    %13 = vector.load %arg7[%c0_16, %c0_17, %c0_18] : memref<2x128x32xf32, #tpu.memory_space<vmem>>, vector<1x128x32xf32>
    %14 = vector.shape_cast %13 : vector<1x128x32xf32> to vector<128x32xf32>
    %c0_19 = arith.constant 0 : index
    %c0_20 = arith.constant 0 : index
    %c0_21 = arith.constant 0 : index
    %15 = vector.load %arg8[%c0_19, %c0_20, %c0_21] : memref<2x5x32xf32, #tpu.memory_space<vmem>>, vector<1x5x32xf32>
    %16 = vector.shape_cast %15 : vector<1x5x32xf32> to vector<5x32xf32>
    %cst_22 = arith.constant dense<0.000000e+00> : vector<34x128xf32>
    %17 = tpu.matmul %5, %8, %cst_22 {dimension_numbers = #tpu.dot_dimension_numbers<[1], [0], [0], [1], [0, 0, 1, 1], [], []>} : vector<34x32xf32>, vector<32x128xf32>, vector<34x128xf32> -> vector<34x128xf32>
    %18 = vector.extract_strided_slice %10 {offsets = [0, 0], sizes = [1, 128], strides = [1, 1]} : vector<2x128xf32> to vector<1x128xf32>
    %19 = vector.broadcast %18 : vector<1x128xf32> to vector<34x128xf32>
    %20 = arith.addf %17, %19 : vector<34x128xf32>
    %21 = vector.extract_strided_slice %20 {offsets = [0, 0], sizes = [34, 32], strides = [1, 1]} : vector<34x128xf32> to vector<34x32xf32>
    %cst_23 = arith.constant 0.353553385 : f32
    %22 = vector.broadcast %cst_23 : f32 to vector<34x32xf32>
    %23 = arith.mulf %21, %22 : vector<34x32xf32>
    %24 = vector.extract_strided_slice %20 {offsets = [0, 32], sizes = [34, 32], strides = [1, 1]} : vector<34x128xf32> to vector<34x32xf32>
    %25 = vector.extract_strided_slice %20 {offsets = [0, 64], sizes = [34, 32], strides = [1, 1]} : vector<34x128xf32> to vector<34x32xf32>
    %26 = vector.extract_strided_slice %23 {offsets = [0, 0], sizes = [34, 8], strides = [1, 1]} : vector<34x32xf32> to vector<34x8xf32>
    %27 = vector.extract_strided_slice %24 {offsets = [0, 0], sizes = [34, 8], strides = [1, 1]} : vector<34x32xf32> to vector<34x8xf32>
    %cst_24 = arith.constant dense<0.000000e+00> : vector<34x34xf32>
    %28 = tpu.matmul %26, %27, %cst_24 {dimension_numbers = #tpu.dot_dimension_numbers<[1], [1], [0], [0], [0, 0, 1, 0], [], []>} : vector<34x8xf32>, vector<34x8xf32>, vector<34x34xf32> -> vector<34x34xf32>
    %29 = arith.addf %28, %6 : vector<34x34xf32>
    %cst_25 = arith.constant dense<0xFF800000> : vector<34xf32>
    %30 = vector.multi_reduction <maximumf>, %29, %cst_25 [1] : vector<34x34xf32> to vector<34xf32>
    %31 = vector.shape_cast %30 : vector<34xf32> to vector<34x1xf32>
    %32 = vector.broadcast %31 : vector<34x1xf32> to vector<34x34xf32>
    %33 = arith.subf %29, %32 : vector<34x34xf32>
    %34 = math.exp %33 : vector<34x34xf32>
    %cst_26 = arith.constant dense<0.000000e+00> : vector<34xf32>
    %35 = vector.multi_reduction <add>, %34, %cst_26 [1] : vector<34x34xf32> to vector<34xf32>
    %36 = vector.shape_cast %35 : vector<34xf32> to vector<34x1xf32>
    %37 = tpu.reciprocal %36 {approx = true} : vector<34x1xf32> -> vector<34x1xf32>
    %38 = vector.broadcast %37 : vector<34x1xf32> to vector<34x34xf32>
    %39 = arith.mulf %34, %38 : vector<34x34xf32>
    %40 = vector.extract_strided_slice %25 {offsets = [0, 0], sizes = [34, 8], strides = [1, 1]} : vector<34x32xf32> to vector<34x8xf32>
    %cst_27 = arith.constant dense<0.000000e+00> : vector<34x8xf32>
    %41 = tpu.matmul %39, %40, %cst_27 {dimension_numbers = #tpu.dot_dimension_numbers<[1], [0], [0], [1], [0, 0, 1, 1], [], []>} : vector<34x34xf32>, vector<34x8xf32>, vector<34x8xf32> -> vector<34x8xf32>
    %42 = vector.extract_strided_slice %23 {offsets = [0, 8], sizes = [34, 8], strides = [1, 1]} : vector<34x32xf32> to vector<34x8xf32>
    %43 = vector.extract_strided_slice %24 {offsets = [0, 8], sizes = [34, 8], strides = [1, 1]} : vector<34x32xf32> to vector<34x8xf32>
    %cst_28 = arith.constant dense<0.000000e+00> : vector<34x34xf32>
    %44 = tpu.matmul %42, %43, %cst_28 {dimension_numbers = #tpu.dot_dimension_numbers<[1], [1], [0], [0], [0, 0, 1, 0], [], []>} : vector<34x8xf32>, vector<34x8xf32>, vector<34x34xf32> -> vector<34x34xf32>
    %45 = arith.addf %44, %6 : vector<34x34xf32>
    %cst_29 = arith.constant dense<0xFF800000> : vector<34xf32>
    %46 = vector.multi_reduction <maximumf>, %45, %cst_29 [1] : vector<34x34xf32> to vector<34xf32>
    %47 = vector.shape_cast %46 : vector<34xf32> to vector<34x1xf32>
    %48 = vector.broadcast %47 : vector<34x1xf32> to vector<34x34xf32>
    %49 = arith.subf %45, %48 : vector<34x34xf32>
    %50 = math.exp %49 : vector<34x34xf32>
    %cst_30 = arith.constant dense<0.000000e+00> : vector<34xf32>
    %51 = vector.multi_reduction <add>, %50, %cst_30 [1] : vector<34x34xf32> to vector<34xf32>
    %52 = vector.shape_cast %51 : vector<34xf32> to vector<34x1xf32>
    %53 = tpu.reciprocal %52 {approx = true} : vector<34x1xf32> -> vector<34x1xf32>
    %54 = vector.broadcast %53 : vector<34x1xf32> to vector<34x34xf32>
    %55 = arith.mulf %50, %54 : vector<34x34xf32>
    %56 = vector.extract_strided_slice %25 {offsets = [0, 8], sizes = [34, 8], strides = [1, 1]} : vector<34x32xf32> to vector<34x8xf32>
    %cst_31 = arith.constant dense<0.000000e+00> : vector<34x8xf32>
    %57 = tpu.matmul %55, %56, %cst_31 {dimension_numbers = #tpu.dot_dimension_numbers<[1], [0], [0], [1], [0, 0, 1, 1], [], []>} : vector<34x34xf32>, vector<34x8xf32>, vector<34x8xf32> -> vector<34x8xf32>
    %58 = vector.extract_strided_slice %23 {offsets = [0, 16], sizes = [34, 8], strides = [1, 1]} : vector<34x32xf32> to vector<34x8xf32>
    %59 = vector.extract_strided_slice %24 {offsets = [0, 16], sizes = [34, 8], strides = [1, 1]} : vector<34x32xf32> to vector<34x8xf32>
    %cst_32 = arith.constant dense<0.000000e+00> : vector<34x34xf32>
    %60 = tpu.matmul %58, %59, %cst_32 {dimension_numbers = #tpu.dot_dimension_numbers<[1], [1], [0], [0], [0, 0, 1, 0], [], []>} : vector<34x8xf32>, vector<34x8xf32>, vector<34x34xf32> -> vector<34x34xf32>
    %61 = arith.addf %60, %6 : vector<34x34xf32>
    %cst_33 = arith.constant dense<0xFF800000> : vector<34xf32>
    %62 = vector.multi_reduction <maximumf>, %61, %cst_33 [1] : vector<34x34xf32> to vector<34xf32>
    %63 = vector.shape_cast %62 : vector<34xf32> to vector<34x1xf32>
    %64 = vector.broadcast %63 : vector<34x1xf32> to vector<34x34xf32>
    %65 = arith.subf %61, %64 : vector<34x34xf32>
    %66 = math.exp %65 : vector<34x34xf32>
    %cst_34 = arith.constant dense<0.000000e+00> : vector<34xf32>
    %67 = vector.multi_reduction <add>, %66, %cst_34 [1] : vector<34x34xf32> to vector<34xf32>
    %68 = vector.shape_cast %67 : vector<34xf32> to vector<34x1xf32>
    %69 = tpu.reciprocal %68 {approx = true} : vector<34x1xf32> -> vector<34x1xf32>
    %70 = vector.broadcast %69 : vector<34x1xf32> to vector<34x34xf32>
    %71 = arith.mulf %66, %70 : vector<34x34xf32>
    %72 = vector.extract_strided_slice %25 {offsets = [0, 16], sizes = [34, 8], strides = [1, 1]} : vector<34x32xf32> to vector<34x8xf32>
    %cst_35 = arith.constant dense<0.000000e+00> : vector<34x8xf32>
    %73 = tpu.matmul %71, %72, %cst_35 {dimension_numbers = #tpu.dot_dimension_numbers<[1], [0], [0], [1], [0, 0, 1, 1], [], []>} : vector<34x34xf32>, vector<34x8xf32>, vector<34x8xf32> -> vector<34x8xf32>
    %74 = vector.extract_strided_slice %23 {offsets = [0, 24], sizes = [34, 8], strides = [1, 1]} : vector<34x32xf32> to vector<34x8xf32>
    %75 = vector.extract_strided_slice %24 {offsets = [0, 24], sizes = [34, 8], strides = [1, 1]} : vector<34x32xf32> to vector<34x8xf32>
    %cst_36 = arith.constant dense<0.000000e+00> : vector<34x34xf32>
    %76 = tpu.matmul %74, %75, %cst_36 {dimension_numbers = #tpu.dot_dimension_numbers<[1], [1], [0], [0], [0, 0, 1, 0], [], []>} : vector<34x8xf32>, vector<34x8xf32>, vector<34x34xf32> -> vector<34x34xf32>
    %77 = arith.addf %76, %6 : vector<34x34xf32>
    %cst_37 = arith.constant dense<0xFF800000> : vector<34xf32>
    %78 = vector.multi_reduction <maximumf>, %77, %cst_37 [1] : vector<34x34xf32> to vector<34xf32>
    %79 = vector.shape_cast %78 : vector<34xf32> to vector<34x1xf32>
    %80 = vector.broadcast %79 : vector<34x1xf32> to vector<34x34xf32>
    %81 = arith.subf %77, %80 : vector<34x34xf32>
    %82 = math.exp %81 : vector<34x34xf32>
    %cst_38 = arith.constant dense<0.000000e+00> : vector<34xf32>
    %83 = vector.multi_reduction <add>, %82, %cst_38 [1] : vector<34x34xf32> to vector<34xf32>
    %84 = vector.shape_cast %83 : vector<34xf32> to vector<34x1xf32>
    %85 = tpu.reciprocal %84 {approx = true} : vector<34x1xf32> -> vector<34x1xf32>
    %86 = vector.broadcast %85 : vector<34x1xf32> to vector<34x34xf32>
    %87 = arith.mulf %82, %86 : vector<34x34xf32>
    %88 = vector.extract_strided_slice %25 {offsets = [0, 24], sizes = [34, 8], strides = [1, 1]} : vector<34x32xf32> to vector<34x8xf32>
    %cst_39 = arith.constant dense<0.000000e+00> : vector<34x8xf32>
    %89 = tpu.matmul %87, %88, %cst_39 {dimension_numbers = #tpu.dot_dimension_numbers<[1], [0], [0], [1], [0, 0, 1, 1], [], []>} : vector<34x34xf32>, vector<34x8xf32>, vector<34x8xf32> -> vector<34x8xf32>
    %90 = tpu.concatenate %41, %57, %73, %89 in 1 : vector<34x8xf32>, vector<34x8xf32>, vector<34x8xf32>, vector<34x8xf32> -> vector<34x32xf32>
    %91 = vector.extract_strided_slice %8 {offsets = [0, 96], sizes = [32, 32], strides = [1, 1]} : vector<32x128xf32> to vector<32x32xf32>
    %92 = vector.extract_strided_slice %10 {offsets = [0, 96], sizes = [1, 32], strides = [1, 1]} : vector<2x128xf32> to vector<1x32xf32>
    %cst_40 = arith.constant dense<0.000000e+00> : vector<34x32xf32>
    %93 = tpu.matmul %90, %91, %cst_40 {dimension_numbers = #tpu.dot_dimension_numbers<[1], [0], [0], [1], [0, 0, 1, 1], [], []>} : vector<34x32xf32>, vector<32x32xf32>, vector<34x32xf32> -> vector<34x32xf32>
    %94 = vector.broadcast %92 : vector<1x32xf32> to vector<34x32xf32>
    %95 = arith.addf %93, %94 : vector<34x32xf32>
    %96 = arith.addf %5, %95 : vector<34x32xf32>
    %97 = vector.extract_strided_slice %16 {offsets = [0, 0], sizes = [1, 32], strides = [1, 1]} : vector<5x32xf32> to vector<1x32xf32>
    %98 = vector.extract_strided_slice %16 {offsets = [1, 0], sizes = [1, 32], strides = [1, 1]} : vector<5x32xf32> to vector<1x32xf32>
    %cst_41 = arith.constant dense<0.000000e+00> : vector<34xf32>
    %99 = vector.multi_reduction <add>, %96, %cst_41 [1] : vector<34x32xf32> to vector<34xf32>
    %100 = vector.shape_cast %99 : vector<34xf32> to vector<34x1xf32>
    %cst_42 = arith.constant 3.200000e+01 : f32
    %101 = vector.broadcast %cst_42 : f32 to vector<34x1xf32>
    %102 = arith.divf %100, %101 : vector<34x1xf32>
    %103 = vector.broadcast %102 : vector<34x1xf32> to vector<34x32xf32>
    %104 = arith.subf %96, %103 : vector<34x32xf32>
    %105 = arith.mulf %104, %104 : vector<34x32xf32>
    %cst_43 = arith.constant dense<0.000000e+00> : vector<34xf32>
    %106 = vector.multi_reduction <add>, %105, %cst_43 [1] : vector<34x32xf32> to vector<34xf32>
    %107 = vector.shape_cast %106 : vector<34xf32> to vector<34x1xf32>
    %cst_44 = arith.constant 3.200000e+01 : f32
    %108 = vector.broadcast %cst_44 : f32 to vector<34x1xf32>
    %109 = arith.divf %107, %108 : vector<34x1xf32>
    %110 = vector.broadcast %102 : vector<34x1xf32> to vector<34x32xf32>
    %111 = arith.subf %96, %110 : vector<34x32xf32>
    %cst_45 = arith.constant 9.99999974E-6 : f32
    %112 = vector.broadcast %cst_45 : f32 to vector<34x1xf32>
    %113 = arith.addf %109, %112 : vector<34x1xf32>
    %114 = math.rsqrt %113 : vector<34x1xf32>
    %115 = vector.broadcast %114 : vector<34x1xf32> to vector<34x32xf32>
    %116 = arith.mulf %111, %115 : vector<34x32xf32>
    %117 = vector.broadcast %97 : vector<1x32xf32> to vector<34x32xf32>
    %118 = arith.mulf %116, %117 : vector<34x32xf32>
    %119 = vector.broadcast %98 : vector<1x32xf32> to vector<34x32xf32>
    %120 = arith.addf %118, %119 : vector<34x32xf32>
    %cst_46 = arith.constant dense<0.000000e+00> : vector<34x128xf32>
    %121 = tpu.matmul %120, %12, %cst_46 {dimension_numbers = #tpu.dot_dimension_numbers<[1], [0], [0], [1], [0, 0, 1, 1], [], []>} : vector<34x32xf32>, vector<32x128xf32>, vector<34x128xf32> -> vector<34x128xf32>
    %122 = vector.extract_strided_slice %10 {offsets = [1, 0], sizes = [1, 128], strides = [1, 1]} : vector<2x128xf32> to vector<1x128xf32>
    %123 = vector.broadcast %122 : vector<1x128xf32> to vector<34x128xf32>
    %124 = arith.addf %121, %123 : vector<34x128xf32>
    %cst_47 = arith.constant 0.000000e+00 : f32
    %125 = vector.broadcast %cst_47 : f32 to vector<34x128xf32>
    %126 = arith.maximumf %124, %125 : vector<34x128xf32>
    %cst_48 = arith.constant dense<0.000000e+00> : vector<34x32xf32>
    %127 = tpu.matmul %126, %14, %cst_48 {dimension_numbers = #tpu.dot_dimension_numbers<[1], [0], [0], [1], [0, 0, 1, 1], [], []>} : vector<34x128xf32>, vector<128x32xf32>, vector<34x32xf32> -> vector<34x32xf32>
    %128 = vector.extract_strided_slice %16 {offsets = [2, 0], sizes = [1, 32], strides = [1, 1]} : vector<5x32xf32> to vector<1x32xf32>
    %129 = vector.broadcast %128 : vector<1x32xf32> to vector<34x32xf32>
    %130 = arith.addf %127, %129 : vector<34x32xf32>
    %131 = arith.addf %120, %130 : vector<34x32xf32>
    %132 = vector.extract_strided_slice %16 {offsets = [3, 0], sizes = [1, 32], strides = [1, 1]} : vector<5x32xf32> to vector<1x32xf32>
    %133 = vector.extract_strided_slice %16 {offsets = [4, 0], sizes = [1, 32], strides = [1, 1]} : vector<5x32xf32> to vector<1x32xf32>
    %cst_49 = arith.constant dense<0.000000e+00> : vector<34xf32>
    %134 = vector.multi_reduction <add>, %131, %cst_49 [1] : vector<34x32xf32> to vector<34xf32>
    %135 = vector.shape_cast %134 : vector<34xf32> to vector<34x1xf32>
    %cst_50 = arith.constant 3.200000e+01 : f32
    %136 = vector.broadcast %cst_50 : f32 to vector<34x1xf32>
    %137 = arith.divf %135, %136 : vector<34x1xf32>
    %138 = vector.broadcast %137 : vector<34x1xf32> to vector<34x32xf32>
    %139 = arith.subf %131, %138 : vector<34x32xf32>
    %140 = arith.mulf %139, %139 : vector<34x32xf32>
    %cst_51 = arith.constant dense<0.000000e+00> : vector<34xf32>
    %141 = vector.multi_reduction <add>, %140, %cst_51 [1] : vector<34x32xf32> to vector<34xf32>
    %142 = vector.shape_cast %141 : vector<34xf32> to vector<34x1xf32>
    %cst_52 = arith.constant 3.200000e+01 : f32
    %143 = vector.broadcast %cst_52 : f32 to vector<34x1xf32>
    %144 = arith.divf %142, %143 : vector<34x1xf32>
    %145 = vector.broadcast %137 : vector<34x1xf32> to vector<34x32xf32>
    %146 = arith.subf %131, %145 : vector<34x32xf32>
    %cst_53 = arith.constant 9.99999974E-6 : f32
    %147 = vector.broadcast %cst_53 : f32 to vector<34x1xf32>
    %148 = arith.addf %144, %147 : vector<34x1xf32>
    %149 = math.rsqrt %148 : vector<34x1xf32>
    %150 = vector.broadcast %149 : vector<34x1xf32> to vector<34x32xf32>
    %151 = arith.mulf %146, %150 : vector<34x32xf32>
    %152 = vector.broadcast %132 : vector<1x32xf32> to vector<34x32xf32>
    %153 = arith.mulf %151, %152 : vector<34x32xf32>
    %154 = vector.broadcast %133 : vector<1x32xf32> to vector<34x32xf32>
    %155 = arith.addf %153, %154 : vector<34x32xf32>
    %c1 = arith.constant 1 : index
    %c0_54 = arith.constant 0 : index
    %c0_55 = arith.constant 0 : index
    %156 = vector.load %arg4[%c1, %c0_54, %c0_55] : memref<2x32x128xf32, #tpu.memory_space<vmem>>, vector<1x32x128xf32>
    %157 = vector.shape_cast %156 : vector<1x32x128xf32> to vector<32x128xf32>
    %c1_56 = arith.constant 1 : index
    %c0_57 = arith.constant 0 : index
    %c0_58 = arith.constant 0 : index
    %158 = vector.load %arg5[%c1_56, %c0_57, %c0_58] : memref<2x2x128xf32, #tpu.memory_space<vmem>>, vector<1x2x128xf32>
    %159 = vector.shape_cast %158 : vector<1x2x128xf32> to vector<2x128xf32>
    %c1_59 = arith.constant 1 : index
    %c0_60 = arith.constant 0 : index
    %c0_61 = arith.constant 0 : index
    %160 = vector.load %arg6[%c1_59, %c0_60, %c0_61] : memref<2x32x128xf32, #tpu.memory_space<vmem>>, vector<1x32x128xf32>
    %161 = vector.shape_cast %160 : vector<1x32x128xf32> to vector<32x128xf32>
    %c1_62 = arith.constant 1 : index
    %c0_63 = arith.constant 0 : index
    %c0_64 = arith.constant 0 : index
    %162 = vector.load %arg7[%c1_62, %c0_63, %c0_64] : memref<2x128x32xf32, #tpu.memory_space<vmem>>, vector<1x128x32xf32>
    %163 = vector.shape_cast %162 : vector<1x128x32xf32> to vector<128x32xf32>
    %c1_65 = arith.constant 1 : index
    %c0_66 = arith.constant 0 : index
    %c0_67 = arith.constant 0 : index
    %164 = vector.load %arg8[%c1_65, %c0_66, %c0_67] : memref<2x5x32xf32, #tpu.memory_space<vmem>>, vector<1x5x32xf32>
    %165 = vector.shape_cast %164 : vector<1x5x32xf32> to vector<5x32xf32>
    %cst_68 = arith.constant dense<0.000000e+00> : vector<34x128xf32>
    %166 = tpu.matmul %155, %157, %cst_68 {dimension_numbers = #tpu.dot_dimension_numbers<[1], [0], [0], [1], [0, 0, 1, 1], [], []>} : vector<34x32xf32>, vector<32x128xf32>, vector<34x128xf32> -> vector<34x128xf32>
    %167 = vector.extract_strided_slice %159 {offsets = [0, 0], sizes = [1, 128], strides = [1, 1]} : vector<2x128xf32> to vector<1x128xf32>
    %168 = vector.broadcast %167 : vector<1x128xf32> to vector<34x128xf32>
    %169 = arith.addf %166, %168 : vector<34x128xf32>
    %170 = vector.extract_strided_slice %169 {offsets = [0, 0], sizes = [34, 32], strides = [1, 1]} : vector<34x128xf32> to vector<34x32xf32>
    %cst_69 = arith.constant 0.353553385 : f32
    %171 = vector.broadcast %cst_69 : f32 to vector<34x32xf32>
    %172 = arith.mulf %170, %171 : vector<34x32xf32>
    %173 = vector.extract_strided_slice %169 {offsets = [0, 32], sizes = [34, 32], strides = [1, 1]} : vector<34x128xf32> to vector<34x32xf32>
    %174 = vector.extract_strided_slice %169 {offsets = [0, 64], sizes = [34, 32], strides = [1, 1]} : vector<34x128xf32> to vector<34x32xf32>
    %175 = vector.extract_strided_slice %172 {offsets = [0, 0], sizes = [34, 8], strides = [1, 1]} : vector<34x32xf32> to vector<34x8xf32>
    %176 = vector.extract_strided_slice %173 {offsets = [0, 0], sizes = [34, 8], strides = [1, 1]} : vector<34x32xf32> to vector<34x8xf32>
    %cst_70 = arith.constant dense<0.000000e+00> : vector<34x34xf32>
    %177 = tpu.matmul %175, %176, %cst_70 {dimension_numbers = #tpu.dot_dimension_numbers<[1], [1], [0], [0], [0, 0, 1, 0], [], []>} : vector<34x8xf32>, vector<34x8xf32>, vector<34x34xf32> -> vector<34x34xf32>
    %178 = arith.addf %177, %6 : vector<34x34xf32>
    %cst_71 = arith.constant dense<0xFF800000> : vector<34xf32>
    %179 = vector.multi_reduction <maximumf>, %178, %cst_71 [1] : vector<34x34xf32> to vector<34xf32>
    %180 = vector.shape_cast %179 : vector<34xf32> to vector<34x1xf32>
    %181 = vector.broadcast %180 : vector<34x1xf32> to vector<34x34xf32>
    %182 = arith.subf %178, %181 : vector<34x34xf32>
    %183 = math.exp %182 : vector<34x34xf32>
    %cst_72 = arith.constant dense<0.000000e+00> : vector<34xf32>
    %184 = vector.multi_reduction <add>, %183, %cst_72 [1] : vector<34x34xf32> to vector<34xf32>
    %185 = vector.shape_cast %184 : vector<34xf32> to vector<34x1xf32>
    %186 = tpu.reciprocal %185 {approx = true} : vector<34x1xf32> -> vector<34x1xf32>
    %187 = vector.broadcast %186 : vector<34x1xf32> to vector<34x34xf32>
    %188 = arith.mulf %183, %187 : vector<34x34xf32>
    %189 = vector.extract_strided_slice %174 {offsets = [0, 0], sizes = [34, 8], strides = [1, 1]} : vector<34x32xf32> to vector<34x8xf32>
    %cst_73 = arith.constant dense<0.000000e+00> : vector<34x8xf32>
    %190 = tpu.matmul %188, %189, %cst_73 {dimension_numbers = #tpu.dot_dimension_numbers<[1], [0], [0], [1], [0, 0, 1, 1], [], []>} : vector<34x34xf32>, vector<34x8xf32>, vector<34x8xf32> -> vector<34x8xf32>
    %191 = vector.extract_strided_slice %172 {offsets = [0, 8], sizes = [34, 8], strides = [1, 1]} : vector<34x32xf32> to vector<34x8xf32>
    %192 = vector.extract_strided_slice %173 {offsets = [0, 8], sizes = [34, 8], strides = [1, 1]} : vector<34x32xf32> to vector<34x8xf32>
    %cst_74 = arith.constant dense<0.000000e+00> : vector<34x34xf32>
    %193 = tpu.matmul %191, %192, %cst_74 {dimension_numbers = #tpu.dot_dimension_numbers<[1], [1], [0], [0], [0, 0, 1, 0], [], []>} : vector<34x8xf32>, vector<34x8xf32>, vector<34x34xf32> -> vector<34x34xf32>
    %194 = arith.addf %193, %6 : vector<34x34xf32>
    %cst_75 = arith.constant dense<0xFF800000> : vector<34xf32>
    %195 = vector.multi_reduction <maximumf>, %194, %cst_75 [1] : vector<34x34xf32> to vector<34xf32>
    %196 = vector.shape_cast %195 : vector<34xf32> to vector<34x1xf32>
    %197 = vector.broadcast %196 : vector<34x1xf32> to vector<34x34xf32>
    %198 = arith.subf %194, %197 : vector<34x34xf32>
    %199 = math.exp %198 : vector<34x34xf32>
    %cst_76 = arith.constant dense<0.000000e+00> : vector<34xf32>
    %200 = vector.multi_reduction <add>, %199, %cst_76 [1] : vector<34x34xf32> to vector<34xf32>
    %201 = vector.shape_cast %200 : vector<34xf32> to vector<34x1xf32>
    %202 = tpu.reciprocal %201 {approx = true} : vector<34x1xf32> -> vector<34x1xf32>
    %203 = vector.broadcast %202 : vector<34x1xf32> to vector<34x34xf32>
    %204 = arith.mulf %199, %203 : vector<34x34xf32>
    %205 = vector.extract_strided_slice %174 {offsets = [0, 8], sizes = [34, 8], strides = [1, 1]} : vector<34x32xf32> to vector<34x8xf32>
    %cst_77 = arith.constant dense<0.000000e+00> : vector<34x8xf32>
    %206 = tpu.matmul %204, %205, %cst_77 {dimension_numbers = #tpu.dot_dimension_numbers<[1], [0], [0], [1], [0, 0, 1, 1], [], []>} : vector<34x34xf32>, vector<34x8xf32>, vector<34x8xf32> -> vector<34x8xf32>
    %207 = vector.extract_strided_slice %172 {offsets = [0, 16], sizes = [34, 8], strides = [1, 1]} : vector<34x32xf32> to vector<34x8xf32>
    %208 = vector.extract_strided_slice %173 {offsets = [0, 16], sizes = [34, 8], strides = [1, 1]} : vector<34x32xf32> to vector<34x8xf32>
    %cst_78 = arith.constant dense<0.000000e+00> : vector<34x34xf32>
    %209 = tpu.matmul %207, %208, %cst_78 {dimension_numbers = #tpu.dot_dimension_numbers<[1], [1], [0], [0], [0, 0, 1, 0], [], []>} : vector<34x8xf32>, vector<34x8xf32>, vector<34x34xf32> -> vector<34x34xf32>
    %210 = arith.addf %209, %6 : vector<34x34xf32>
    %cst_79 = arith.constant dense<0xFF800000> : vector<34xf32>
    %211 = vector.multi_reduction <maximumf>, %210, %cst_79 [1] : vector<34x34xf32> to vector<34xf32>
    %212 = vector.shape_cast %211 : vector<34xf32> to vector<34x1xf32>
    %213 = vector.broadcast %212 : vector<34x1xf32> to vector<34x34xf32>
    %214 = arith.subf %210, %213 : vector<34x34xf32>
    %215 = math.exp %214 : vector<34x34xf32>
    %cst_80 = arith.constant dense<0.000000e+00> : vector<34xf32>
    %216 = vector.multi_reduction <add>, %215, %cst_80 [1] : vector<34x34xf32> to vector<34xf32>
    %217 = vector.shape_cast %216 : vector<34xf32> to vector<34x1xf32>
    %218 = tpu.reciprocal %217 {approx = true} : vector<34x1xf32> -> vector<34x1xf32>
    %219 = vector.broadcast %218 : vector<34x1xf32> to vector<34x34xf32>
    %220 = arith.mulf %215, %219 : vector<34x34xf32>
    %221 = vector.extract_strided_slice %174 {offsets = [0, 16], sizes = [34, 8], strides = [1, 1]} : vector<34x32xf32> to vector<34x8xf32>
    %cst_81 = arith.constant dense<0.000000e+00> : vector<34x8xf32>
    %222 = tpu.matmul %220, %221, %cst_81 {dimension_numbers = #tpu.dot_dimension_numbers<[1], [0], [0], [1], [0, 0, 1, 1], [], []>} : vector<34x34xf32>, vector<34x8xf32>, vector<34x8xf32> -> vector<34x8xf32>
    %223 = vector.extract_strided_slice %172 {offsets = [0, 24], sizes = [34, 8], strides = [1, 1]} : vector<34x32xf32> to vector<34x8xf32>
    %224 = vector.extract_strided_slice %173 {offsets = [0, 24], sizes = [34, 8], strides = [1, 1]} : vector<34x32xf32> to vector<34x8xf32>
    %cst_82 = arith.constant dense<0.000000e+00> : vector<34x34xf32>
    %225 = tpu.matmul %223, %224, %cst_82 {dimension_numbers = #tpu.dot_dimension_numbers<[1], [1], [0], [0], [0, 0, 1, 0], [], []>} : vector<34x8xf32>, vector<34x8xf32>, vector<34x34xf32> -> vector<34x34xf32>
    %226 = arith.addf %225, %6 : vector<34x34xf32>
    %cst_83 = arith.constant dense<0xFF800000> : vector<34xf32>
    %227 = vector.multi_reduction <maximumf>, %226, %cst_83 [1] : vector<34x34xf32> to vector<34xf32>
    %228 = vector.shape_cast %227 : vector<34xf32> to vector<34x1xf32>
    %229 = vector.broadcast %228 : vector<34x1xf32> to vector<34x34xf32>
    %230 = arith.subf %226, %229 : vector<34x34xf32>
    %231 = math.exp %230 : vector<34x34xf32>
    %cst_84 = arith.constant dense<0.000000e+00> : vector<34xf32>
    %232 = vector.multi_reduction <add>, %231, %cst_84 [1] : vector<34x34xf32> to vector<34xf32>
    %233 = vector.shape_cast %232 : vector<34xf32> to vector<34x1xf32>
    %234 = tpu.reciprocal %233 {approx = true} : vector<34x1xf32> -> vector<34x1xf32>
    %235 = vector.broadcast %234 : vector<34x1xf32> to vector<34x34xf32>
    %236 = arith.mulf %231, %235 : vector<34x34xf32>
    %237 = vector.extract_strided_slice %174 {offsets = [0, 24], sizes = [34, 8], strides = [1, 1]} : vector<34x32xf32> to vector<34x8xf32>
    %cst_85 = arith.constant dense<0.000000e+00> : vector<34x8xf32>
    %238 = tpu.matmul %236, %237, %cst_85 {dimension_numbers = #tpu.dot_dimension_numbers<[1], [0], [0], [1], [0, 0, 1, 1], [], []>} : vector<34x34xf32>, vector<34x8xf32>, vector<34x8xf32> -> vector<34x8xf32>
    %239 = tpu.concatenate %190, %206, %222, %238 in 1 : vector<34x8xf32>, vector<34x8xf32>, vector<34x8xf32>, vector<34x8xf32> -> vector<34x32xf32>
    %240 = vector.extract_strided_slice %157 {offsets = [0, 96], sizes = [32, 32], strides = [1, 1]} : vector<32x128xf32> to vector<32x32xf32>
    %241 = vector.extract_strided_slice %159 {offsets = [0, 96], sizes = [1, 32], strides = [1, 1]} : vector<2x128xf32> to vector<1x32xf32>
    %cst_86 = arith.constant dense<0.000000e+00> : vector<34x32xf32>
    %242 = tpu.matmul %239, %240, %cst_86 {dimension_numbers = #tpu.dot_dimension_numbers<[1], [0], [0], [1], [0, 0, 1, 1], [], []>} : vector<34x32xf32>, vector<32x32xf32>, vector<34x32xf32> -> vector<34x32xf32>
    %243 = vector.broadcast %241 : vector<1x32xf32> to vector<34x32xf32>
    %244 = arith.addf %242, %243 : vector<34x32xf32>
    %245 = arith.addf %155, %244 : vector<34x32xf32>
    %246 = vector.extract_strided_slice %165 {offsets = [0, 0], sizes = [1, 32], strides = [1, 1]} : vector<5x32xf32> to vector<1x32xf32>
    %247 = vector.extract_strided_slice %165 {offsets = [1, 0], sizes = [1, 32], strides = [1, 1]} : vector<5x32xf32> to vector<1x32xf32>
    %cst_87 = arith.constant dense<0.000000e+00> : vector<34xf32>
    %248 = vector.multi_reduction <add>, %245, %cst_87 [1] : vector<34x32xf32> to vector<34xf32>
    %249 = vector.shape_cast %248 : vector<34xf32> to vector<34x1xf32>
    %cst_88 = arith.constant 3.200000e+01 : f32
    %250 = vector.broadcast %cst_88 : f32 to vector<34x1xf32>
    %251 = arith.divf %249, %250 : vector<34x1xf32>
    %252 = vector.broadcast %251 : vector<34x1xf32> to vector<34x32xf32>
    %253 = arith.subf %245, %252 : vector<34x32xf32>
    %254 = arith.mulf %253, %253 : vector<34x32xf32>
    %cst_89 = arith.constant dense<0.000000e+00> : vector<34xf32>
    %255 = vector.multi_reduction <add>, %254, %cst_89 [1] : vector<34x32xf32> to vector<34xf32>
    %256 = vector.shape_cast %255 : vector<34xf32> to vector<34x1xf32>
    %cst_90 = arith.constant 3.200000e+01 : f32
    %257 = vector.broadcast %cst_90 : f32 to vector<34x1xf32>
    %258 = arith.divf %256, %257 : vector<34x1xf32>
    %259 = vector.broadcast %251 : vector<34x1xf32> to vector<34x32xf32>
    %260 = arith.subf %245, %259 : vector<34x32xf32>
    %cst_91 = arith.constant 9.99999974E-6 : f32
    %261 = vector.broadcast %cst_91 : f32 to vector<34x1xf32>
    %262 = arith.addf %258, %261 : vector<34x1xf32>
    %263 = math.rsqrt %262 : vector<34x1xf32>
    %264 = vector.broadcast %263 : vector<34x1xf32> to vector<34x32xf32>
    %265 = arith.mulf %260, %264 : vector<34x32xf32>
    %266 = vector.broadcast %246 : vector<1x32xf32> to vector<34x32xf32>
    %267 = arith.mulf %265, %266 : vector<34x32xf32>
    %268 = vector.broadcast %247 : vector<1x32xf32> to vector<34x32xf32>
    %269 = arith.addf %267, %268 : vector<34x32xf32>
    %cst_92 = arith.constant dense<0.000000e+00> : vector<34x128xf32>
    %270 = tpu.matmul %269, %161, %cst_92 {dimension_numbers = #tpu.dot_dimension_numbers<[1], [0], [0], [1], [0, 0, 1, 1], [], []>} : vector<34x32xf32>, vector<32x128xf32>, vector<34x128xf32> -> vector<34x128xf32>
    %271 = vector.extract_strided_slice %159 {offsets = [1, 0], sizes = [1, 128], strides = [1, 1]} : vector<2x128xf32> to vector<1x128xf32>
    %272 = vector.broadcast %271 : vector<1x128xf32> to vector<34x128xf32>
    %273 = arith.addf %270, %272 : vector<34x128xf32>
    %cst_93 = arith.constant 0.000000e+00 : f32
    %274 = vector.broadcast %cst_93 : f32 to vector<34x128xf32>
    %275 = arith.maximumf %273, %274 : vector<34x128xf32>
    %cst_94 = arith.constant dense<0.000000e+00> : vector<34x32xf32>
    %276 = tpu.matmul %275, %163, %cst_94 {dimension_numbers = #tpu.dot_dimension_numbers<[1], [0], [0], [1], [0, 0, 1, 1], [], []>} : vector<34x128xf32>, vector<128x32xf32>, vector<34x32xf32> -> vector<34x32xf32>
    %277 = vector.extract_strided_slice %165 {offsets = [2, 0], sizes = [1, 32], strides = [1, 1]} : vector<5x32xf32> to vector<1x32xf32>
    %278 = vector.broadcast %277 : vector<1x32xf32> to vector<34x32xf32>
    %279 = arith.addf %276, %278 : vector<34x32xf32>
    %280 = arith.addf %269, %279 : vector<34x32xf32>
    %281 = vector.extract_strided_slice %165 {offsets = [3, 0], sizes = [1, 32], strides = [1, 1]} : vector<5x32xf32> to vector<1x32xf32>
    %282 = vector.extract_strided_slice %165 {offsets = [4, 0], sizes = [1, 32], strides = [1, 1]} : vector<5x32xf32> to vector<1x32xf32>
    %cst_95 = arith.constant dense<0.000000e+00> : vector<34xf32>
    %283 = vector.multi_reduction <add>, %280, %cst_95 [1] : vector<34x32xf32> to vector<34xf32>
    %284 = vector.shape_cast %283 : vector<34xf32> to vector<34x1xf32>
    %cst_96 = arith.constant 3.200000e+01 : f32
    %285 = vector.broadcast %cst_96 : f32 to vector<34x1xf32>
    %286 = arith.divf %284, %285 : vector<34x1xf32>
    %287 = vector.broadcast %286 : vector<34x1xf32> to vector<34x32xf32>
    %288 = arith.subf %280, %287 : vector<34x32xf32>
    %289 = arith.mulf %288, %288 : vector<34x32xf32>
    %cst_97 = arith.constant dense<0.000000e+00> : vector<34xf32>
    %290 = vector.multi_reduction <add>, %289, %cst_97 [1] : vector<34x32xf32> to vector<34xf32>
    %291 = vector.shape_cast %290 : vector<34xf32> to vector<34x1xf32>
    %cst_98 = arith.constant 3.200000e+01 : f32
    %292 = vector.broadcast %cst_98 : f32 to vector<34x1xf32>
    %293 = arith.divf %291, %292 : vector<34x1xf32>
    %294 = vector.broadcast %286 : vector<34x1xf32> to vector<34x32xf32>
    %295 = arith.subf %280, %294 : vector<34x32xf32>
    %cst_99 = arith.constant 9.99999974E-6 : f32
    %296 = vector.broadcast %cst_99 : f32 to vector<34x1xf32>
    %297 = arith.addf %293, %296 : vector<34x1xf32>
    %298 = math.rsqrt %297 : vector<34x1xf32>
    %299 = vector.broadcast %298 : vector<34x1xf32> to vector<34x32xf32>
    %300 = arith.mulf %295, %299 : vector<34x32xf32>
    %301 = vector.broadcast %281 : vector<1x32xf32> to vector<34x32xf32>
    %302 = arith.mulf %300, %301 : vector<34x32xf32>
    %303 = vector.broadcast %282 : vector<1x32xf32> to vector<34x32xf32>
    %304 = arith.addf %302, %303 : vector<34x32xf32>
    %305 = vector.extract_strided_slice %304 {offsets = [0, 0], sizes = [1, 32], strides = [1, 1]} : vector<34x32xf32> to vector<1x32xf32>
    %306 = vector.extract_strided_slice %304 {offsets = [17, 0], sizes = [1, 32], strides = [1, 1]} : vector<34x32xf32> to vector<1x32xf32>
    %307 = tpu.concatenate %305, %306 in 0 : vector<1x32xf32>, vector<1x32xf32> -> vector<2x32xf32>
    %c0_100 = arith.constant 0 : index
    %c0_101 = arith.constant 0 : index
    %308 = vector.load %arg9[%c0_100, %c0_101] : memref<2x32xf32, #tpu.memory_space<vmem>>, vector<2x32xf32>
    %309 = vector.extract_strided_slice %308 {offsets = [0, 0], sizes = [1, 32], strides = [1, 1]} : vector<2x32xf32> to vector<1x32xf32>
    %310 = vector.extract_strided_slice %308 {offsets = [1, 0], sizes = [1, 32], strides = [1, 1]} : vector<2x32xf32> to vector<1x32xf32>
    %cst_102 = arith.constant dense<0.000000e+00> : vector<2xf32>
    %311 = vector.multi_reduction <add>, %307, %cst_102 [1] : vector<2x32xf32> to vector<2xf32>
    %312 = vector.shape_cast %311 : vector<2xf32> to vector<2x1xf32>
    %cst_103 = arith.constant 3.200000e+01 : f32
    %313 = vector.broadcast %cst_103 : f32 to vector<2x1xf32>
    %314 = arith.divf %312, %313 : vector<2x1xf32>
    %315 = vector.broadcast %314 : vector<2x1xf32> to vector<2x32xf32>
    %316 = arith.subf %307, %315 : vector<2x32xf32>
    %317 = arith.mulf %316, %316 : vector<2x32xf32>
    %cst_104 = arith.constant dense<0.000000e+00> : vector<2xf32>
    %318 = vector.multi_reduction <add>, %317, %cst_104 [1] : vector<2x32xf32> to vector<2xf32>
    %319 = vector.shape_cast %318 : vector<2xf32> to vector<2x1xf32>
    %cst_105 = arith.constant 3.200000e+01 : f32
    %320 = vector.broadcast %cst_105 : f32 to vector<2x1xf32>
    %321 = arith.divf %319, %320 : vector<2x1xf32>
    %322 = vector.broadcast %314 : vector<2x1xf32> to vector<2x32xf32>
    %323 = arith.subf %307, %322 : vector<2x32xf32>
    %cst_106 = arith.constant 9.99999974E-6 : f32
    %324 = vector.broadcast %cst_106 : f32 to vector<2x1xf32>
    %325 = arith.addf %321, %324 : vector<2x1xf32>
    %326 = math.rsqrt %325 : vector<2x1xf32>
    %327 = vector.broadcast %326 : vector<2x1xf32> to vector<2x32xf32>
    %328 = arith.mulf %323, %327 : vector<2x32xf32>
    %329 = vector.broadcast %309 : vector<1x32xf32> to vector<2x32xf32>
    %330 = arith.mulf %328, %329 : vector<2x32xf32>
    %331 = vector.broadcast %310 : vector<1x32xf32> to vector<2x32xf32>
    %332 = arith.addf %330, %331 : vector<2x32xf32>
    %c0_107 = arith.constant 0 : index
    %c0_108 = arith.constant 0 : index
    %333 = vector.load %arg10[%c0_107, %c0_108] : memref<2x32xf32, #tpu.memory_space<vmem>>, vector<2x32xf32>
    tpu.vector_store %arg10[%c0_107, %c0_108], %332 {strides = array<i32>} : memref<2x32xf32, #tpu.memory_space<vmem>>, vector<2x32xf32>,
    return
  }
}

</mosaic_0001>

<llo_original>
// kernel: image_bert_forward.1
$region0: #{image_bert_forward.1}
  #allocation0 [shape = 'u32[]', space=smem, size = 0x4, offset = 0x4, fixed_abs, tag = 'smem constant byte address 0x4 - core index']
  #allocation1 [shape = 'u32[144,128]{1,0:T(1,128)}', space=vmem, size = 0x12000, scoped, tag = 'internal scratch']
  %s0 = inlined_call_operand.vmem [shape: f32[34,64], index: 0, kind: input, shape index: {}]
  %s1 = inlined_call_operand.vmem [shape: f32[64,32], index: 1, kind: input, shape index: {}]
  %s2 = inlined_call_operand.vmem [shape: f32[17,32], index: 2, kind: input, shape index: {}]
  %s3 = inlined_call_operand.vmem [shape: f32[34,34], index: 3, kind: input, shape index: {}]
  %s4 = inlined_call_operand.vmem [shape: f32[2,32,128], index: 4, kind: input, shape index: {}]
  %s5 = inlined_call_operand.vmem [shape: f32[2,2,128], index: 5, kind: input, shape index: {}]
  %s6 = inlined_call_operand.vmem [shape: f32[2,32,128], index: 6, kind: input, shape index: {}]
  %s7 = inlined_call_operand.vmem [shape: f32[2,128,32], index: 7, kind: input, shape index: {}]
  %s8 = inlined_call_operand.vmem [shape: f32[2,5,32], index: 8, kind: input, shape index: {}]
  %s9 = inlined_call_operand.vmem [shape: f32[2,32], index: 9, kind: input, shape index: {}]
  %s10 = inlined_call_operand.hbm [shape: f32[2,32], index: 10, kind: output, shape index: {}]
  %s11 = sld [smem:[#allocation0]]
  $region50: #{image_bert_forward.1} parent=0
    _
  %s13 = ssub.s32 1, %s11
  %s14 = scalar_select 0, %s13, %s11
  $region1: #{image_bert_forward.1} parent=0
    #allocation2 [shape = 'u8[1024]{0}', space=vmem, size = 0x400, scoped, tag = 'output window, operand 0, single buffered']
    #allocation3 [shape = 's32[1]{0}', space=sflag, size = 0x4, scoped, tag = 'scoped memory for image_bert_forward.1']
    %15 = vsyncpa [#allocation3], 0
    // Predicated region
    $region2: #{image_bert_forward.1} parent=1 // pred_check
      _
    $region3: #{image_bert_forward.1} parent=1 // pred_check_branch
      %17 = sbr.rel (0) target = $region5
    $region4: #{image_bert_forward.1} parent=1 // pred_region
      _
    $region5: #{image_bert_forward.1} parent=1 // pred_fallthru
      _
    // Predicated region
    $region6: #{image_bert_forward.1} parent=1 // pred_check
      _
    $region7: #{image_bert_forward.1} parent=1 // pred_check_branch
      %19 = sbr.rel (0) target = $region9
    $region8: #{image_bert_forward.1} parent=1 // pred_region
      _
    $region9: #{image_bert_forward.1} parent=1 // pred_fallthru
      _
    // Predicated region
    $region10: #{image_bert_forward.1} parent=1 // pred_check
      _
    $region11: #{image_bert_forward.1} parent=1 // pred_check_branch
      %21 = sbr.rel (0) target = $region13
    $region12: #{image_bert_forward.1} parent=1 // pred_region
      _
    $region13: #{image_bert_forward.1} parent=1 // pred_fallthru
      _
    // Predicated region
    $region14: #{image_bert_forward.1} parent=1 // pred_check
      _
    $region15: #{image_bert_forward.1} parent=1 // pred_check_branch
      %23 = sbr.rel (0) target = $region17
    $region16: #{image_bert_forward.1} parent=1 // pred_region
      _
    $region17: #{image_bert_forward.1} parent=1 // pred_fallthru
      _
    // Predicated region
    $region18: #{image_bert_forward.1} parent=1 // pred_check
      _
    $region19: #{image_bert_forward.1} parent=1 // pred_check_branch
      %25 = sbr.rel (0) target = $region21
    $region20: #{image_bert_forward.1} parent=1 // pred_region
      _
    $region21: #{image_bert_forward.1} parent=1 // pred_fallthru
      _
    // Predicated region
    $region22: #{image_bert_forward.1} parent=1 // pred_check
      _
    $region23: #{image_bert_forward.1} parent=1 // pred_check_branch
      %27 = sbr.rel (0) target = $region25
    $region24: #{image_bert_forward.1} parent=1 // pred_region
      _
    $region25: #{image_bert_forward.1} parent=1 // pred_fallthru
      _
    // Predicated region
    $region26: #{image_bert_forward.1} parent=1 // pred_check
      _
    $region27: #{image_bert_forward.1} parent=1 // pred_check_branch
      %29 = sbr.rel (0) target = $region29
    $region28: #{image_bert_forward.1} parent=1 // pred_region
      _
    $region29: #{image_bert_forward.1} parent=1 // pred_fallthru
      _
    // Predicated region
    $region30: #{image_bert_forward.1} parent=1 // pred_check
      _
    $region31: #{image_bert_forward.1} parent=1 // pred_check_branch
      %31 = sbr.rel (0) target = $region33
    $region32: #{image_bert_forward.1} parent=1 // pred_region
      _
    $region33: #{image_bert_forward.1} parent=1 // pred_fallthru
      _
    // Predicated region
    $region34: #{image_bert_forward.1} parent=1 // pred_check
      _
    $region35: #{image_bert_forward.1} parent=1 // pred_check_branch
      %33 = sbr.rel (0) target = $region37
    $region36: #{image_bert_forward.1} parent=1 // pred_region
      _
    $region37: #{image_bert_forward.1} parent=1 // pred_fallthru
      _
    // Predicated region
    $region38: #{image_bert_forward.1} parent=1 // pred_check
      _
    $region39: #{image_bert_forward.1} parent=1 // pred_check_branch
      %35 = sbr.rel (0) target = $region41
    $region40: #{image_bert_forward.1} parent=1 // pred_region
      _
    $region41: #{image_bert_forward.1} parent=1 // pred_fallthru
      _
    %v36 = vld [vmem:[%s2] sm:$0xff]
    %v37 = vld [vmem:[%s2 + $0x8] sm:$0xff]
    %v38 = vld [vmem:[%s2 + $0x10] sm:$0x1]
    %vm42 = vcmask 1040384
    %v43 = vrot.slane %v36, 7
    %v44 = vrot.slane %v37, 7
    %v45 = vsel %vm42, %v43, %v44
    %v46 = vrot.slane %v38, 7
    %v47 = vsel %vm42, %v44, %v46
    %v51 = vsel %vm42, %v38, %v43
    %v52 = vld [vmem:[%s0] sm:$0xff]
    %v53 = vld [vmem:[%s0 + $0x8] sm:$0xff]
    %v54 = vld [vmem:[%s0 + $0x10] sm:$0xff]
    %v55 = vld [vmem:[%s0 + $0x18] sm:$0xff]
    %v56 = vld [vmem:[%s0 + $0x20] sm:$0x3]
    %v57 = vld [vmem:[%s1] sm:$0xff]
    %v58 = vld [vmem:[%s1 + $0x8] sm:$0xff]
    %v59 = vld [vmem:[%s1 + $0x10] sm:$0xff]
    %v60 = vld [vmem:[%s1 + $0x18] sm:$0xff]
    %v61 = vld [vmem:[%s1 + $0x20] sm:$0xff]
    %v62 = vld [vmem:[%s1 + $0x28] sm:$0xff]
    %v63 = vld [vmem:[%s1 + $0x30] sm:$0xff]
    %v64 = vld [vmem:[%s1 + $0x38] sm:$0xff]
    %vm65 = vcmask 523264
    %v67 = vsel %vm65, %v52, 0
    %v70 = vsel %vm65, %v53, 0
    %v73 = vsel %vm65, %v54, 0
    %v76 = vsel %vm65, %v55, 0
    %v79 = vsel %vm65, %v56, 0
    %81 = vmatprep.subr.mxu0 0.0
    %82 = vmatpush1.msra.mxu0 %v57
    %83 = vmatprep.subr.mxu0 0.0
    %84 = vmatpush1.msra.mxu0 %v58
    %85 = vmatprep.subr.mxu0 0.0
    %86 = vmatpush1.msra.mxu0 %v59
    %87 = vmatprep.subr.mxu0 0.0
    %88 = vmatpush1.msra.mxu0 %v60
    %89 = vmatprep.subr.mxu0 0.0
    %90 = vmatpush1.msra.mxu0 %v61
    %91 = vmatprep.subr.mxu0 0.0
    %92 = vmatpush1.msra.mxu0 %v62
    %93 = vmatprep.subr.mxu0 0.0
    %94 = vmatpush1.msra.mxu0 %v63
    %95 = vmatprep.subr.mxu0 0.0
    %96 = vmatpush1.msra.mxu0 %v64
    %97 = vmatprep.subr.mxu0 0.0
    %98 = vmatpush1.msra.mxu0 0.0
    %99 = vmatprep.subr.mxu0 0.0
    %100 = vmatpush1.msra.mxu0 0.0
    %101 = vmatprep.subr.mxu0 0.0
    %102 = vmatpush1.msra.mxu0 0.0
    %103 = vmatprep.subr.mxu0 0.0
    %104 = vmatpush1.msra.mxu0 0.0
    %105 = vmatprep.subr.mxu0 0.0
    %106 = vmatpush1.msra.mxu0 0.0
    %107 = vmatprep.subr.mxu0 0.0
    %108 = vmatpush1.msra.mxu0 0.0
    %109 = vmatprep.subr.mxu0 0.0
    %110 = vmatpush1.msra.mxu0 0.0
    %111 = vmatprep.subr.mxu0 0.0
    %112 = vmatpush1.msra.mxu0 0.0
    %113 = vmatprep.subr.mxu0 0.0
    %114 = vmatpush1.msra.mxu0 0.0
    %115 = vmatprep.subr.mxu0 0.0
    %116 = vmatpush1.msra.mxu0 0.0
    %117 = vmatprep.subr.mxu0 0.0
    %118 = vmatpush1.msra.mxu0 0.0
    %119 = vmatprep.subr.mxu0 0.0
    %120 = vmatpush1.msra.mxu0 0.0
    %121 = vmatprep.subr.mxu0 0.0
    %122 = vmatpush1.msra.mxu0 0.0
    %123 = vmatprep.subr.mxu0 0.0
    %124 = vmatpush1.msra.mxu0 0.0
    %125 = vmatprep.subr.mxu0 0.0
    %126 = vmatpush1.msra.mxu0 0.0
    %127 = vmatprep.subr.mxu0 0.0
    %128 = vmatpush1.msra.mxu0 0.0
    %129 = vmatprep.subr.mxu0 0.0
    %130 = vmatpush1.msra.mxu0 0.0
    %131 = vmatprep.subr.mxu0 0.0
    %132 = vmatpush1.msra.mxu0 0.0
    %133 = vmatprep.subr.mxu0 0.0
    %134 = vmatpush1.msra.mxu0 0.0
    %135 = vmatprep.subr.mxu0 0.0
    %136 = vmatpush1.msra.mxu0 0.0
    %137 = vmatprep.subr.mxu0 0.0
    %138 = vmatpush1.msra.mxu0 0.0
    %139 = vmatprep.subr.mxu0 0.0
    %140 = vmatpush1.msra.mxu0 0.0
    %141 = vmatprep.subr.mxu0 0.0
    %142 = vmatpush1.msra.mxu0 0.0
    %143 = vmatprep.subr.mxu0 0.0
    %144 = vmatpush1.msra.mxu0 0.0
    %145 = vmatprep.mubr.f32.mxu0 0.0
    %146 = vmatmul.mubr.f32.gmra.mrb[0].mxu0 %v67
    %v147 = vpop.f32.mrb[0].mxu0
    %v148 = vadd.f32 %v36, %v147
    %v149 = vpop.f32.mrb[0].mxu0
    %150 = vmatprep.mubr.f32.mxu0 0.0
    %151 = vmatmul.mubr.f32.gmra.mrb[0].mxu0 %v70
    %v152 = vpop.f32.mrb[0].mxu0
    %v153 = vadd.f32 %v37, %v152
    %v154 = vpop.f32.mrb[0].mxu0
    %155 = vmatprep.mubr.f32.mxu0 0.0
    %156 = vmatmul.mubr.f32.gmra.mrb[0].mxu0 %v73
    %v157 = vpop.f32.mrb[0].mxu0
    %v158 = vadd.f32 %v51, %v157
    %v159 = vpop.f32.mrb[0].mxu0
    %160 = vmatprep.mubr.f32.mxu0 0.0
    %161 = vmatmul.mubr.f32.gmra.mrb[0].mxu0 %v76
    %v162 = vpop.f32.mrb[0].mxu0
    %v163 = vadd.f32 %v45, %v162
    %v164 = vpop.f32.mrb[0].mxu0
    %165 = vmatprep.mubr.f32.mxu0 0.0
    %166 = vmatmul.mubr.f32.gmra.mrb[0].mxu0 %v79
    %v167 = vpop.f32.mrb[0].mxu0
    %v168 = vadd.f32 %v47, %v167
    %v169 = vpop.f32.mrb[0].mxu0
    %170 = vdwg.mxu0
    %v171 = vld [vmem:[%s3] sm:$0xff]
    %v172 = vld [vmem:[%s3 + $0x8] sm:$0xff]
    %v173 = vld [vmem:[%s3 + $0x10] sm:$0xff]
    %v174 = vld [vmem:[%s3 + $0x18] sm:$0xff]
    %v175 = vld [vmem:[%s3 + $0x20] sm:$0x3]
    %v176 = vld [vmem:[%s4] sm:$0xff]
    %v177 = vld [vmem:[%s4 + $0x8] sm:$0xff]
    %v178 = vld [vmem:[%s4 + $0x10] sm:$0xff]
    %v179 = vld [vmem:[%s4 + $0x18] sm:$0xff]
    %v180 = vld [vmem:[%s5] sm:$0x3]
    %v181 = vld [vmem:[%s6] sm:$0xff]
    %v182 = vld [vmem:[%s6 + $0x8] sm:$0xff]
    %v183 = vld [vmem:[%s6 + $0x10] sm:$0xff]
    %v184 = vld [vmem:[%s6 + $0x18] sm:$0xff]
    %v185 = vld [vmem:[%s7] sm:$0xff]
    %v186 = vld [vmem:[%s7 + $0x8] sm:$0xff]
    %v187 = vld [vmem:[%s7 + $0x10] sm:$0xff]
    %v188 = vld [vmem:[%s7 + $0x18] sm:$0xff]
    %v189 = vld [vmem:[%s7 + $0x20] sm:$0xff]
    %v190 = vld [vmem:[%s7 + $0x28] sm:$0xff]
    %v191 = vld [vmem:[%s7 + $0x30] sm:$0xff]
    %v192 = vld [vmem:[%s7 + $0x38] sm:$0xff]
    %v193 = vld [vmem:[%s7 + $0x40] sm:$0xff]
    %v194 = vld [vmem:[%s7 + $0x48] sm:$0xff]
    %v195 = vld [vmem:[%s7 + $0x50] sm:$0xff]
    %v196 = vld [vmem:[%s7 + $0x58] sm:$0xff]
    %v197 = vld [vmem:[%s7 + $0x60] sm:$0xff]
    %v198 = vld [vmem:[%s7 + $0x68] sm:$0xff]
    %v199 = vld [vmem:[%s7 + $0x70] sm:$0xff]
    %v200 = vld [vmem:[%s7 + $0x78] sm:$0xff]
    %v201 = vld [vmem:[%s8] sm:$0x1f]
    %v202 = vlaneseq
    %v203 = vshrl.u32 %v202, 7
    %v204 = vsub.s32 0, %v203
    %v205 = vrot.slane %v180, %v204
    %vm206 = vcmask 261120
    %v208 = vsel %vm206, %v148, 0
    %v211 = vsel %vm206, %v153, 0
    %v214 = vsel %vm206, %v158, 0
    %v217 = vsel %vm206, %v163, 0
    %v220 = vsel %vm206, %v168, 0
    %222 = vmatprep.subr.mxu0 0.0
    %223 = vmatpush1.msra.mxu0 %v176
    %224 = vmatprep.subr.mxu0 0.0
    %225 = vmatpush1.msra.mxu0 %v177
    %226 = vmatprep.subr.mxu0 0.0
    %227 = vmatpush1.msra.mxu0 %v178
    %228 = vmatprep.subr.mxu0 0.0
    %229 = vmatpush1.msra.mxu0 %v179
    %230 = vmatprep.subr.mxu0 0.0
    %231 = vmatpush1.msra.mxu0 0.0
    %232 = vmatprep.subr.mxu0 0.0
    %233 = vmatpush1.msra.mxu0 0.0
    %234 = vmatprep.subr.mxu0 0.0
    %235 = vmatpush1.msra.mxu0 0.0
    %236 = vmatprep.subr.mxu0 0.0
    %237 = vmatpush1.msra.mxu0 0.0
    %238 = vmatprep.subr.mxu0 0.0
    %239 = vmatpush1.msra.mxu0 0.0
    %240 = vmatprep.subr.mxu0 0.0
    %241 = vmatpush1.msra.mxu0 0.0
    %242 = vmatprep.subr.mxu0 0.0
    %243 = vmatpush1.msra.mxu0 0.0
    %244 = vmatprep.subr.mxu0 0.0
    %245 = vmatpush1.msra.mxu0 0.0
    %246 = vmatprep.subr.mxu0 0.0
    %247 = vmatpush1.msra.mxu0 0.0
    %248 = vmatprep.subr.mxu0 0.0
    %249 = vmatpush1.msra.mxu0 0.0
    %250 = vmatprep.subr.mxu0 0.0
    %251 = vmatpush1.msra.mxu0 0.0
    %252 = vmatprep.subr.mxu0 0.0
    %253 = vmatpush1.msra.mxu0 0.0
    %254 = vmatprep.subr.mxu0 0.0
    %255 = vmatpush1.msra.mxu0 0.0
    %256 = vmatprep.subr.mxu0 0.0
    %257 = vmatpush1.msra.mxu0 0.0
    %258 = vmatprep.subr.mxu0 0.0
    %259 = vmatpush1.msra.mxu0 0.0
    %260 = vmatprep.subr.mxu0 0.0
    %261 = vmatpush1.msra.mxu0 0.0
    %262 = vmatprep.subr.mxu0 0.0
    %263 = vmatpush1.msra.mxu0 0.0
    %264 = vmatprep.subr.mxu0 0.0
    %265 = vmatpush1.msra.mxu0 0.0
    %266 = vmatprep.subr.mxu0 0.0
    %267 = vmatpush1.msra.mxu0 0.0
    %268 = vmatprep.subr.mxu0 0.0
    %269 = vmatpush1.msra.mxu0 0.0
    %270 = vmatprep.subr.mxu0 0.0
    %271 = vmatpush1.msra.mxu0 0.0
    %272 = vmatprep.subr.mxu0 0.0
    %273 = vmatpush1.msra.mxu0 0.0
    %274 = vmatprep.subr.mxu0 0.0
    %275 = vmatpush1.msra.mxu0 0.0
    %276 = vmatprep.subr.mxu0 0.0
    %277 = vmatpush1.msra.mxu0 0.0
    %278 = vmatprep.subr.mxu0 0.0
    %279 = vmatpush1.msra.mxu0 0.0
    %280 = vmatprep.subr.mxu0 0.0
    %281 = vmatpush1.msra.mxu0 0.0
    %282 = vmatprep.subr.mxu0 0.0
    %283 = vmatpush1.msra.mxu0 0.0
    %284 = vmatprep.subr.mxu0 0.0
    %285 = vmatpush1.msra.mxu0 0.0
    %286 = vmatprep.mubr.f32.mxu0 0.0
    %287 = vmatmul.mubr.f32.gmra.mrb[0].mxu0 %v208
    %v288 = vpop.f32.mrb[0].mxu0
    %v289 = vadd.f32 %v205, %v288
    %v290 = vpop.f32.mrb[0].mxu0
    %291 = vmatprep.mubr.f32.mxu0 0.0
    %292 = vmatmul.mubr.f32.gmra.mrb[0].mxu0 %v211
    %v293 = vpop.f32.mrb[0].mxu0
    %v294 = vadd.f32 %v205, %v293
    %v295 = vpop.f32.mrb[0].mxu0
    %296 = vmatprep.mubr.f32.mxu0 0.0
    %297 = vmatmul.mubr.f32.gmra.mrb[0].mxu0 %v214
    %v298 = vpop.f32.mrb[0].mxu0
    %v299 = vadd.f32 %v205, %v298
    %v300 = vpop.f32.mrb[0].mxu0
    %301 = vmatprep.mubr.f32.mxu0 0.0
    %302 = vmatmul.mubr.f32.gmra.mrb[0].mxu0 %v217
    %v303 = vpop.f32.mrb[0].mxu0
    %v304 = vadd.f32 %v205, %v303
    %v305 = vpop.f32.mrb[0].mxu0
    %306 = vmatprep.mubr.f32.mxu0 0.0
    %307 = vmatmul.mubr.f32.gmra.mrb[0].mxu0 %v220
    %v308 = vpop.f32.mrb[0].mxu0
    %v309 = vadd.f32 %v205, %v308
    %v310 = vpop.f32.mrb[0].mxu0
    %311 = vdwg.mxu0
    %v312 = vmul.f32 %v289, 0.35355338
    %v313 = vmul.f32 %v294, 0.35355338
    %v314 = vmul.f32 %v299, 0.35355338
    %v315 = vmul.f32 %v304, 0.35355338
    %v316 = vmul.f32 %v309, 0.35355338
    %322 = vrot.lane.b32.xlu0 %v289, 96
    %v323 = vpop.permute.xlu0 %322
    %324 = vrot.lane.b32.xlu0 %v294, 96
    %v325 = vpop.permute.xlu0 %324
    %326 = vrot.lane.b32.xlu0 %v299, 96
    %v327 = vpop.permute.xlu0 %326
    %328 = vrot.lane.b32.xlu0 %v304, 96
    %v329 = vpop.permute.xlu0 %328
    %330 = vrot.lane.b32.xlu0 %v309, 96
    %v331 = vpop.permute.xlu0 %330
    %vm332 = vcmask 64512
    %v334 = vsel %vm332, %v312, 0
    %v337 = vsel %vm332, %v313, 0
    %v340 = vsel %vm332, %v314, 0
    %v343 = vsel %vm332, %v315, 0
    %v346 = vsel %vm332, %v316, 0
    %v348 = vsel %vm332, %v323, 0
    %v350 = vsel %vm332, %v325, 0
    %v352 = vsel %vm332, %v327, 0
    %v354 = vsel %vm332, %v329, 0
    %v356 = vsel %vm332, %v331, 0
    %358 = vmatprep.subr.mxu0 0.0
    %359 = vmatpush1.xpose.msra.mxu0 %v348
    %360 = vmatprep.subr.mxu0 0.0
    %361 = vmatpush1.xpose.msra.mxu0 %v350
    %362 = vmatprep.subr.mxu0 0.0
    %363 = vmatpush1.xpose.msra.mxu0 %v352
    %364 = vmatprep.subr.mxu0 0.0
    %365 = vmatpush1.xpose.msra.mxu0 %v354
    %366 = vmatprep.subr.mxu0 0.0
    %367 = vmatpush1.xpose.msra.mxu0 %v356
    %368 = vmatprep.subr.mxu0 0.0
    %369 = vmatpush1.xpose.msra.mxu0 0.0
    %370 = vmatprep.subr.mxu0 0.0
    %371 = vmatpush1.xpose.msra.mxu0 0.0
    %372 = vmatprep.subr.mxu0 0.0
    %373 = vmatpush1.xpose.msra.mxu0 0.0
    %374 = vmatprep.subr.mxu0 0.0
    %375 = vmatpush1.xpose.msra.mxu0 0.0
    %376 = vmatprep.subr.mxu0 0.0
    %377 = vmatpush1.xpose.msra.mxu0 0.0
    %378 = vmatprep.subr.mxu0 0.0
    %379 = vmatpush1.xpose.msra.mxu0 0.0
    %380 = vmatprep.subr.mxu0 0.0
    %381 = vmatpush1.xpose.msra.mxu0 0.0
    %382 = vmatprep.subr.mxu0 0.0
    %383 = vmatpush1.xpose.msra.mxu0 0.0
    %384 = vmatprep.subr.mxu0 0.0
    %385 = vmatpush1.xpose.msra.mxu0 0.0
    %386 = vmatprep.subr.mxu0 0.0
    %387 = vmatpush1.xpose.msra.mxu0 0.0
    %388 = vmatprep.subr.mxu0 0.0
    %389 = vmatpush1.xpose.msra.mxu0 0.0
    %390 = vmatprep.subr.mxu0 0.0
    %391 = vmatpush1.xpose.msra.mxu0 0.0
    %392 = vmatprep.subr.mxu0 0.0
    %393 = vmatpush1.xpose.msra.mxu0 0.0
    %394 = vmatprep.subr.mxu0 0.0
    %395 = vmatpush1.xpose.msra.mxu0 0.0
    %396 = vmatprep.subr.mxu0 0.0
    %397 = vmatpush1.xpose.msra.mxu0 0.0
    %398 = vmatprep.subr.mxu0 0.0
    %399 = vmatpush1.xpose.msra.mxu0 0.0
    %400 = vmatprep.subr.mxu0 0.0
    %401 = vmatpush1.xpose.msra.mxu0 0.0
    %402 = vmatprep.subr.mxu0 0.0
    %403 = vmatpush1.xpose.msra.mxu0 0.0
    %404 = vmatprep.subr.mxu0 0.0
    %405 = vmatpush1.xpose.msra.mxu0 0.0
    %406 = vmatprep.subr.mxu0 0.0
    %407 = vmatpush1.xpose.msra.mxu0 0.0
    %408 = vmatprep.subr.mxu0 0.0
    %409 = vmatpush1.xpose.msra.mxu0 0.0
    %410 = vmatprep.subr.mxu0 0.0
    %411 = vmatpush1.xpose.msra.mxu0 0.0
    %412 = vmatprep.subr.mxu0 0.0
    %413 = vmatpush1.xpose.msra.mxu0 0.0
    %414 = vmatprep.subr.mxu0 0.0
    %415 = vmatpush1.xpose.msra.mxu0 0.0
    %416 = vmatprep.subr.mxu0 0.0
    %417 = vmatpush1.xpose.msra.mxu0 0.0
    %418 = vmatprep.subr.mxu0 0.0
    %419 = vmatpush1.xpose.msra.mxu0 0.0
    %420 = vmatprep.subr.mxu0 0.0
    %421 = vmatpush1.xpose.msra.mxu0 0.0
    %422 = vmatprep.mubr.f32.mxu0 0.0
    %423 = vmatmul.mubr.f32.gmra.mrb[0].mxu0 %v334
    %v424 = vpop.f32.mrb[0].mxu0
    %v425 = vadd.f32 %v171, %v424
    %v426 = vpop.f32.mrb[0].mxu0
    %427 = vmatprep.mubr.f32.mxu0 0.0
    %428 = vmatmul.mubr.f32.gmra.mrb[0].mxu0 %v337
    %v429 = vpop.f32.mrb[0].mxu0
    %v430 = vadd.f32 %v172, %v429
    %v431 = vpop.f32.mrb[0].mxu0
    %432 = vmatprep.mubr.f32.mxu0 0.0
    %433 = vmatmul.mubr.f32.gmra.mrb[0].mxu0 %v340
    %v434 = vpop.f32.mrb[0].mxu0
    %v435 = vadd.f32 %v173, %v434
    %v436 = vpop.f32.mrb[0].mxu0
    %437 = vmatprep.mubr.f32.mxu0 0.0
    %438 = vmatmul.mubr.f32.gmra.mrb[0].mxu0 %v343
    %v439 = vpop.f32.mrb[0].mxu0
    %v440 = vadd.f32 %v174, %v439
    %v441 = vpop.f32.mrb[0].mxu0
    %442 = vmatprep.mubr.f32.mxu0 0.0
    %443 = vmatmul.mubr.f32.gmra.mrb[0].mxu0 %v346
    %v444 = vpop.f32.mrb[0].mxu0
    %v445 = vadd.f32 %v175, %v444
    %v446 = vpop.f32.mrb[0].mxu0
    %447 = vdwg.mxu0
    %vm448 = vcmask 277504
    %v449 = vsel %vm448, %v425, -inf
    %450 = vmax.xlane.f32.xlu0 %v449
    %v451 = vpop.xlane.xlu0 %450
    %v452 = vsel %vm448, %v430, -inf
    %453 = vmax.xlane.f32.xlu0 %v452
    %v454 = vpop.xlane.xlu0 %453
    %v455 = vsel %vm448, %v435, -inf
    %456 = vmax.xlane.f32.xlu0 %v455
    %v457 = vpop.xlane.xlu0 %456
    %v458 = vsel %vm448, %v440, -inf
    %459 = vmax.xlane.f32.xlu0 %v458
    %v460 = vpop.xlane.xlu0 %459
    %vm461 = vcmask 271360
    %v462 = vsel %vm461, %v445, -inf
    %463 = vmax.xlane.f32.xlu0 %v462
    %v464 = vpop.xlane.xlu0 %463
    %v465 = vsub.f32 %v425, %v451
    %v466 = vsub.f32 %v430, %v454
    %v467 = vsub.f32 %v435, %v457
    %v468 = vsub.f32 %v440, %v460
    %v469 = vsub.f32 %v445, %v464
    %v470 = vmul.f32 %v465, 1.442695
    %v471 = vpow.pop %v470
    %v472 = vmul.f32 %v466, 1.442695
    %v473 = vpow.pop %v472
    %v474 = vmul.f32 %v467, 1.442695
    %v475 = vpow.pop %v474
    %v476 = vmul.f32 %v468, 1.442695
    %v477 = vpow.pop %v476
    %v478 = vmul.f32 %v469, 1.442695
    %v479 = vpow.pop %v478
    %v480 = vsel %vm448, %v471, 0.0
    %481 = vadd.xlane.f32.xlu0 %v480
    %v482 = vpop.xlane.xlu0 %481
    %v483 = vsel %vm448, %v473, 0.0
    %484 = vadd.xlane.f32.xlu0 %v483
    %v485 = vpop.xlane.xlu0 %484
    %v486 = vsel %vm448, %v475, 0.0
    %487 = vadd.xlane.f32.xlu0 %v486
    %v488 = vpop.xlane.xlu0 %487
    %v489 = vsel %vm448, %v477, 0.0
    %490 = vadd.xlane.f32.xlu0 %v489
    %v491 = vpop.xlane.xlu0 %490
    %v492 = vsel %vm461, %v479, 0.0
    %493 = vadd.xlane.f32.xlu0 %v492
    %v494 = vpop.xlane.xlu0 %493
    %v495 = vrcp.pop %v482
    %v496 = vrcp.pop %v485
    %v497 = vrcp.pop %v488
    %v498 = vrcp.pop %v491
    %v499 = vrcp.pop %v494
    %v500 = vmul.f32 %v471, %v495
    %v501 = vmul.f32 %v473, %v496
    %v502 = vmul.f32 %v475, %v497
    %v503 = vmul.f32 %v477, %v498
    %v504 = vmul.f32 %v479, %v499
    %505 = vrot.lane.b32.xlu0 %v289, 64
    %v506 = vpop.permute.xlu0 %505
    %507 = vrot.lane.b32.xlu0 %v294, 64
    %v508 = vpop.permute.xlu0 %507
    %509 = vrot.lane.b32.xlu0 %v299, 64
    %v510 = vpop.permute.xlu0 %509
    %511 = vrot.lane.b32.xlu0 %v304, 64
    %v512 = vpop.permute.xlu0 %511
    %513 = vrot.lane.b32.xlu0 %v309, 64
    %v514 = vpop.permute.xlu0 %513
    %v520 = vsel %vm448, %v500, 0
    %v523 = vsel %vm448, %v501, 0
    %v526 = vsel %vm448, %v502, 0
    %v529 = vsel %vm448, %v503, 0
    %v532 = vsel %vm448, %v504, 0
    %vm534 = vcmask 1041408
    %v535 = vsel %vm534, %v514, 0
    %537 = vmatprep.subr.mxu0 0.0
    %538 = vmatpush1.msra.mxu0 %v506
    %539 = vmatprep.subr.mxu0 0.0
    %540 = vmatpush1.msra.mxu0 %v508
    %541 = vmatprep.subr.mxu0 0.0
    %542 = vmatpush1.msra.mxu0 %v510
    %543 = vmatprep.subr.mxu0 0.0
    %544 = vmatpush1.msra.mxu0 %v512
    %545 = vmatprep.subr.mxu0 0.0
    %546 = vmatpush1.msra.mxu0 %v535
    %547 = vmatprep.subr.mxu0 0.0
    %548 = vmatpush1.msra.mxu0 0.0
    %549 = vmatprep.subr.mxu0 0.0
    %550 = vmatpush1.msra.mxu0 0.0
    %551 = vmatprep.subr.mxu0 0.0
    %552 = vmatpush1.msra.mxu0 0.0
    %553 = vmatprep.subr.mxu0 0.0
    %554 = vmatpush1.msra.mxu0 0.0
    %555 = vmatprep.subr.mxu0 0.0
    %556 = vmatpush1.msra.mxu0 0.0
    %557 = vmatprep.subr.mxu0 0.0
    %558 = vmatpush1.msra.mxu0 0.0
    %559 = vmatprep.subr.mxu0 0.0
    %560 = vmatpush1.msra.mxu0 0.0
    %561 = vmatprep.subr.mxu0 0.0
    %562 = vmatpush1.msra.mxu0 0.0
    %563 = vmatprep.subr.mxu0 0.0
    %564 = vmatpush1.msra.mxu0 0.0
    %565 = vmatprep.subr.mxu0 0.0
    %566 = vmatpush1.msra.mxu0 0.0
    %567 = vmatprep.subr.mxu0 0.0
    %568 = vmatpush1.msra.mxu0 0.0
    %569 = vmatprep.subr.mxu0 0.0
    %570 = vmatpush1.msra.mxu0 0.0
    %571 = vmatprep.subr.mxu0 0.0
    %572 = vmatpush1.msra.mxu0 0.0
    %573 = vmatprep.subr.mxu0 0.0
    %574 = vmatpush1.msra.mxu0 0.0
    %575 = vmatprep.subr.mxu0 0.0
    %576 = vmatpush1.msra.mxu0 0.0
    %577 = vmatprep.subr.mxu0 0.0
    %578 = vmatpush1.msra.mxu0 0.0
    %579 = vmatprep.subr.mxu0 0.0
    %580 = vmatpush1.msra.mxu0 0.0
    %581 = vmatprep.subr.mxu0 0.0
    %582 = vmatpush1.msra.mxu0 0.0
    %583 = vmatprep.subr.mxu0 0.0
    %584 = vmatpush1.msra.mxu0 0.0
    %585 = vmatprep.subr.mxu0 0.0
    %586 = vmatpush1.msra.mxu0 0.0
    %587 = vmatprep.subr.mxu0 0.0
    %588 = vmatpush1.msra.mxu0 0.0
    %589 = vmatprep.subr.mxu0 0.0
    %590 = vmatpush1.msra.mxu0 0.0
    %591 = vmatprep.subr.mxu0 0.0
    %592 = vmatpush1.msra.mxu0 0.0
    %593 = vmatprep.subr.mxu0 0.0
    %594 = vmatpush1.msra.mxu0 0.0
    %595 = vmatprep.subr.mxu0 0.0
    %596 = vmatpush1.msra.mxu0 0.0
    %597 = vmatprep.subr.mxu0 0.0
    %598 = vmatpush1.msra.mxu0 0.0
    %599 = vmatprep.subr.mxu0 0.0
    %600 = vmatpush1.msra.mxu0 0.0
    %601 = vmatprep.mubr.f32.mxu0 0.0
    %602 = vmatmul.mubr.f32.gmra.mrb[0].mxu0 %v520
    %v603 = vpop.f32.mrb[0].mxu0
    %v604 = vadd.f32 0.0, %v603
    %v605 = vpop.f32.mrb[0].mxu0
    %606 = vmatprep.mubr.f32.mxu0 0.0
    %607 = vmatmul.mubr.f32.gmra.mrb[0].mxu0 %v523
    %v608 = vpop.f32.mrb[0].mxu0
    %v609 = vadd.f32 0.0, %v608
    %v610 = vpop.f32.mrb[0].mxu0
    %611 = vmatprep.mubr.f32.mxu0 0.0
    %612 = vmatmul.mubr.f32.gmra.mrb[0].mxu0 %v526
    %v613 = vpop.f32.mrb[0].mxu0
    %v614 = vadd.f32 0.0, %v613
    %v615 = vpop.f32.mrb[0].mxu0
    %616 = vmatprep.mubr.f32.mxu0 0.0
    %617 = vmatmul.mubr.f32.gmra.mrb[0].mxu0 %v529
    %v618 = vpop.f32.mrb[0].mxu0
    %v619 = vadd.f32 0.0, %v618
    %v620 = vpop.f32.mrb[0].mxu0
    %621 = vmatprep.mubr.f32.mxu0 0.0
    %622 = vmatmul.mubr.f32.gmra.mrb[0].mxu0 %v532
    %v623 = vpop.f32.mrb[0].mxu0
    %v624 = vadd.f32 0.0, %v623
    %v625 = vpop.f32.mrb[0].mxu0
    %626 = vdwg.mxu0
    %627 = vrot.lane.b32.xlu0 %v312, 120
    %v628 = vpop.permute.xlu0 %627
    %629 = vrot.lane.b32.xlu0 %v313, 120
    %v630 = vpop.permute.xlu0 %629
    %631 = vrot.lane.b32.xlu0 %v314, 120
    %v632 = vpop.permute.xlu0 %631
    %633 = vrot.lane.b32.xlu0 %v315, 120
    %v634 = vpop.permute.xlu0 %633
    %635 = vrot.lane.b32.xlu0 %v316, 120
    %v636 = vpop.permute.xlu0 %635
    %637 = vrot.lane.b32.xlu0 %v289, 88
    %v638 = vpop.permute.xlu0 %637
    %639 = vrot.lane.b32.xlu0 %v294, 88
    %v640 = vpop.permute.xlu0 %639
    %641 = vrot.lane.b32.xlu0 %v299, 88
    %v642 = vpop.permute.xlu0 %641
    %643 = vrot.lane.b32.xlu0 %v304, 88
    %v644 = vpop.permute.xlu0 %643
    %645 = vrot.lane.b32.xlu0 %v309, 88
    %v646 = vpop.permute.xlu0 %645
    %v647 = vsel %vm332, %v628, 0
    %v649 = vsel %vm332, %v630, 0
    %v651 = vsel %vm332, %v632, 0
    %v653 = vsel %vm332, %v634, 0
    %v655 = vsel %vm332, %v636, 0
    %v657 = vsel %vm332, %v638, 0
    %v659 = vsel %vm332, %v640, 0
    %v661 = vsel %vm332, %v642, 0
    %v663 = vsel %vm332, %v644, 0
    %v665 = vsel %vm332, %v646, 0
    %667 = vmatprep.subr.mxu0 0.0
    %668 = vmatpush1.xpose.msra.mxu0 %v657
    %669 = vmatprep.subr.mxu0 0.0
    %670 = vmatpush1.xpose.msra.mxu0 %v659
    %671 = vmatprep.subr.mxu0 0.0
    %672 = vmatpush1.xpose.msra.mxu0 %v661
    %673 = vmatprep.subr.mxu0 0.0
    %674 = vmatpush1.xpose.msra.mxu0 %v663
    %675 = vmatprep.subr.mxu0 0.0
    %676 = vmatpush1.xpose.msra.mxu0 %v665
    %677 = vmatprep.subr.mxu0 0.0
    %678 = vmatpush1.xpose.msra.mxu0 0.0
    %679 = vmatprep.subr.mxu0 0.0
    %680 = vmatpush1.xpose.msra.mxu0 0.0
    %681 = vmatprep.subr.mxu0 0.0
    %682 = vmatpush1.xpose.msra.mxu0 0.0
    %683 = vmatprep.subr.mxu0 0.0
    %684 = vmatpush1.xpose.msra.mxu0 0.0
    %685 = vmatprep.subr.mxu0 0.0
    %686 = vmatpush1.xpose.msra.mxu0 0.0
    %687 = vmatprep.subr.mxu0 0.0
    %688 = vmatpush1.xpose.msra.mxu0 0.0
    %689 = vmatprep.subr.mxu0 0.0
    %690 = vmatpush1.xpose.msra.mxu0 0.0
    %691 = vmatprep.subr.mxu0 0.0
    %692 = vmatpush1.xpose.msra.mxu0 0.0
    %693 = vmatprep.subr.mxu0 0.0
    %694 = vmatpush1.xpose.msra.mxu0 0.0
    %695 = vmatprep.subr.mxu0 0.0
    %696 = vmatpush1.xpose.msra.mxu0 0.0
    %697 = vmatprep.subr.mxu0 0.0
    %698 = vmatpush1.xpose.msra.mxu0 0.0
    %699 = vmatprep.subr.mxu0 0.0
    %700 = vmatpush1.xpose.msra.mxu0 0.0
    %701 = vmatprep.subr.mxu0 0.0
    %702 = vmatpush1.xpose.msra.mxu0 0.0
    %703 = vmatprep.subr.mxu0 0.0
    %704 = vmatpush1.xpose.msra.mxu0 0.0
    %705 = vmatprep.subr.mxu0 0.0
    %706 = vmatpush1.xpose.msra.mxu0 0.0
    %707 = vmatprep.subr.mxu0 0.0
    %708 = vmatpush1.xpose.msra.mxu0 0.0
    %709 = vmatprep.subr.mxu0 0.0
    %710 = vmatpush1.xpose.msra.mxu0 0.0
    %711 = vmatprep.subr.mxu0 0.0
    %712 = vmatpush1.xpose.msra.mxu0 0.0
    %713 = vmatprep.subr.mxu0 0.0
    %714 = vmatpush1.xpose.msra.mxu0 0.0
    %715 = vmatprep.subr.mxu0 0.0
    %716 = vmatpush1.xpose.msra.mxu0 0.0
    %717 = vmatprep.subr.mxu0 0.0
    %718 = vmatpush1.xpose.msra.mxu0 0.0
    %719 = vmatprep.subr.mxu0 0.0
    %720 = vmatpush1.xpose.msra.mxu0 0.0
    %721 = vmatprep.subr.mxu0 0.0
    %722 = vmatpush1.xpose.msra.mxu0 0.0
    %723 = vmatprep.subr.mxu0 0.0
    %724 = vmatpush1.xpose.msra.mxu0 0.0
    %725 = vmatprep.subr.mxu0 0.0
    %726 = vmatpush1.xpose.msra.mxu0 0.0
    %727 = vmatprep.subr.mxu0 0.0
    %728 = vmatpush1.xpose.msra.mxu0 0.0
    %729 = vmatprep.subr.mxu0 0.0
    %730 = vmatpush1.xpose.msra.mxu0 0.0
    %731 = vmatprep.mubr.f32.mxu0 0.0
    %732 = vmatmul.mubr.f32.gmra.mrb[0].mxu0 %v647
    %v733 = vpop.f32.mrb[0].mxu0
    %v734 = vadd.f32 %v171, %v733
    %v735 = vpop.f32.mrb[0].mxu0
    %736 = vmatprep.mubr.f32.mxu0 0.0
    %737 = vmatmul.mubr.f32.gmra.mrb[0].mxu0 %v649
    %v738 = vpop.f32.mrb[0].mxu0
    %v739 = vadd.f32 %v172, %v738
    %v740 = vpop.f32.mrb[0].mxu0
    %741 = vmatprep.mubr.f32.mxu0 0.0
    %742 = vmatmul.mubr.f32.gmra.mrb[0].mxu0 %v651
    %v743 = vpop.f32.mrb[0].mxu0
    %v744 = vadd.f32 %v173, %v743
    %v745 = vpop.f32.mrb[0].mxu0
    %746 = vmatprep.mubr.f32.mxu0 0.0
    %747 = vmatmul.mubr.f32.gmra.mrb[0].mxu0 %v653
    %v748 = vpop.f32.mrb[0].mxu0
    %v749 = vadd.f32 %v174, %v748
    %v750 = vpop.f32.mrb[0].mxu0
    %751 = vmatprep.mubr.f32.mxu0 0.0
    %752 = vmatmul.mubr.f32.gmra.mrb[0].mxu0 %v655
    %v753 = vpop.f32.mrb[0].mxu0
    %v754 = vadd.f32 %v175, %v753
    %v755 = vpop.f32.mrb[0].mxu0
    %756 = vdwg.mxu0
    %v757 = vsel %vm448, %v734, -inf
    %758 = vmax.xlane.f32.xlu0 %v757
    %v759 = vpop.xlane.xlu0 %758
    %v760 = vsel %vm448, %v739, -inf
    %761 = vmax.xlane.f32.xlu0 %v760
    %v762 = vpop.xlane.xlu0 %761
    %v763 = vsel %vm448, %v744, -inf
    %764 = vmax.xlane.f32.xlu0 %v763
    %v765 = vpop.xlane.xlu0 %764
    %v766 = vsel %vm448, %v749, -inf
    %767 = vmax.xlane.f32.xlu0 %v766
    %v768 = vpop.xlane.xlu0 %767
    %v769 = vsel %vm461, %v754, -inf
    %770 = vmax.xlane.f32.xlu0 %v769
    %v771 = vpop.xlane.xlu0 %770
    %v772 = vsub.f32 %v734, %v759
    %v773 = vsub.f32 %v739, %v762
    %v774 = vsub.f32 %v744, %v765
    %v775 = vsub.f32 %v749, %v768
    %v776 = vsub.f32 %v754, %v771
    %v777 = vmul.f32 %v772, 1.442695
    %v778 = vpow.pop %v777
    %v779 = vmul.f32 %v773, 1.442695
    %v780 = vpow.pop %v779
    %v781 = vmul.f32 %v774, 1.442695
    %v782 = vpow.pop %v781
    %v783 = vmul.f32 %v775, 1.442695
    %v784 = vpow.pop %v783
    %v785 = vmul.f32 %v776, 1.442695
    %v786 = vpow.pop %v785
    %v787 = vsel %vm448, %v778, 0.0
    %788 = vadd.xlane.f32.xlu0 %v787
    %v789 = vpop.xlane.xlu0 %788
    %v790 = vsel %vm448, %v780, 0.0
    %791 = vadd.xlane.f32.xlu0 %v790
    %v792 = vpop.xlane.xlu0 %791
    %v793 = vsel %vm448, %v782, 0.0
    %794 = vadd.xlane.f32.xlu0 %v793
    %v795 = vpop.xlane.xlu0 %794
    %v796 = vsel %vm448, %v784, 0.0
    %797 = vadd.xlane.f32.xlu0 %v796
    %v798 = vpop.xlane.xlu0 %797
    %v799 = vsel %vm461, %v786, 0.0
    %800 = vadd.xlane.f32.xlu0 %v799
    %v801 = vpop.xlane.xlu0 %800
    %v802 = vrcp.pop %v789
    %v803 = vrcp.pop %v792
    %v804 = vrcp.pop %v795
    %v805 = vrcp.pop %v798
    %v806 = vrcp.pop %v801
    %v807 = vmul.f32 %v778, %v802
    %v808 = vmul.f32 %v780, %v803
    %v809 = vmul.f32 %v782, %v804
    %v810 = vmul.f32 %v784, %v805
    %v811 = vmul.f32 %v786, %v806
    %812 = vrot.lane.b32.xlu0 %v289, 56
    %v813 = vpop.permute.xlu0 %812
    %814 = vrot.lane.b32.xlu0 %v294, 56
    %v815 = vpop.permute.xlu0 %814
    %816 = vrot.lane.b32.xlu0 %v299, 56
    %v817 = vpop.permute.xlu0 %816
    %818 = vrot.lane.b32.xlu0 %v304, 56
    %v819 = vpop.permute.xlu0 %818
    %820 = vrot.lane.b32.xlu0 %v309, 56
    %v821 = vpop.permute.xlu0 %820
    %v827 = vsel %vm448, %v807, 0
    %v830 = vsel %vm448, %v808, 0
    %v833 = vsel %vm448, %v809, 0
    %v836 = vsel %vm448, %v810, 0
    %v839 = vsel %vm448, %v811, 0
    %v841 = vsel %vm534, %v821, 0
    %843 = vmatprep.subr.mxu0 0.0
    %844 = vmatpush1.msra.mxu0 %v813
    %845 = vmatprep.subr.mxu0 0.0
    %846 = vmatpush1.msra.mxu0 %v815
    %847 = vmatprep.subr.mxu0 0.0
    %848 = vmatpush1.msra.mxu0 %v817
    %849 = vmatprep.subr.mxu0 0.0
    %850 = vmatpush1.msra.mxu0 %v819
    %851 = vmatprep.subr.mxu0 0.0
    %852 = vmatpush1.msra.mxu0 %v841
    %853 = vmatprep.subr.mxu0 0.0
    %854 = vmatpush1.msra.mxu0 0.0
    %855 = vmatprep.subr.mxu0 0.0
    %856 = vmatpush1.msra.mxu0 0.0
    %857 = vmatprep.subr.mxu0 0.0
    %858 = vmatpush1.msra.mxu0 0.0
    %859 = vmatprep.subr.mxu0 0.0
    %860 = vmatpush1.msra.mxu0 0.0
    %861 = vmatprep.subr.mxu0 0.0
    %862 = vmatpush1.msra.mxu0 0.0
    %863 = vmatprep.subr.mxu0 0.0
    %864 = vmatpush1.msra.mxu0 0.0
    %865 = vmatprep.subr.mxu0 0.0
    %866 = vmatpush1.msra.mxu0 0.0
    %867 = vmatprep.subr.mxu0 0.0
    %868 = vmatpush1.msra.mxu0 0.0
    %869 = vmatprep.subr.mxu0 0.0
    %870 = vmatpush1.msra.mxu0 0.0
    %871 = vmatprep.subr.mxu0 0.0
    %872 = vmatpush1.msra.mxu0 0.0
    %873 = vmatprep.subr.mxu0 0.0
    %874 = vmatpush1.msra.mxu0 0.0
    %875 = vmatprep.subr.mxu0 0.0
    %876 = vmatpush1.msra.mxu0 0.0
    %877 = vmatprep.subr.mxu0 0.0
    %878 = vmatpush1.msra.mxu0 0.0
    %879 = vmatprep.subr.mxu0 0.0
    %880 = vmatpush1.msra.mxu0 0.0
    %881 = vmatprep.subr.mxu0 0.0
    %882 = vmatpush1.msra.mxu0 0.0
    %883 = vmatprep.subr.mxu0 0.0
    %884 = vmatpush1.msra.mxu0 0.0
    %885 = vmatprep.subr.mxu0 0.0
    %886 = vmatpush1.msra.mxu0 0.0
    %887 = vmatprep.subr.mxu0 0.0
    %888 = vmatpush1.msra.mxu0 0.0
    %889 = vmatprep.subr.mxu0 0.0
    %890 = vmatpush1.msra.mxu0 0.0
    %891 = vmatprep.subr.mxu0 0.0
    %892 = vmatpush1.msra.mxu0 0.0
    %893 = vmatprep.subr.mxu0 0.0
    %894 = vmatpush1.msra.mxu0 0.0
    %895 = vmatprep.subr.mxu0 0.0
    %896 = vmatpush1.msra.mxu0 0.0
    %897 = vmatprep.subr.mxu0 0.0
    %898 = vmatpush1.msra.mxu0 0.0
    %899 = vmatprep.subr.mxu0 0.0
    %900 = vmatpush1.msra.mxu0 0.0
    %901 = vmatprep.subr.mxu0 0.0
    %902 = vmatpush1.msra.mxu0 0.0
    %903 = vmatprep.subr.mxu0 0.0
    %904 = vmatpush1.msra.mxu0 0.0
    %905 = vmatprep.subr.mxu0 0.0
    %906 = vmatpush1.msra.mxu0 0.0
    %907 = vmatprep.mubr.f32.mxu0 0.0
    %908 = vmatmul.mubr.f32.gmra.mrb[0].mxu0 %v827
    %v909 = vpop.f32.mrb[0].mxu0
    %v910 = vadd.f32 0.0, %v909
    %v911 = vpop.f32.mrb[0].mxu0
    %912 = vmatprep.mubr.f32.mxu0 0.0
    %913 = vmatmul.mubr.f32.gmra.mrb[0].mxu0 %v830
    %v914 = vpop.f32.mrb[0].mxu0
    %v915 = vadd.f32 0.0, %v914
    %v916 = vpop.f32.mrb[0].mxu0
    %917 = vmatprep.mubr.f32.mxu0 0.0
    %918 = vmatmul.mubr.f32.gmra.mrb[0].mxu0 %v833
    %v919 = vpop.f32.mrb[0].mxu0
    %v920 = vadd.f32 0.0, %v919
    %v921 = vpop.f32.mrb[0].mxu0
    %922 = vmatprep.mubr.f32.mxu0 0.0
    %923 = vmatmul.mubr.f32.gmra.mrb[0].mxu0 %v836
    %v924 = vpop.f32.mrb[0].mxu0
    %v925 = vadd.f32 0.0, %v924
    %v926 = vpop.f32.mrb[0].mxu0
    %927 = vmatprep.mubr.f32.mxu0 0.0
    %928 = vmatmul.mubr.f32.gmra.mrb[0].mxu0 %v839
    %v929 = vpop.f32.mrb[0].mxu0
    %v930 = vadd.f32 0.0, %v929
    %v931 = vpop.f32.mrb[0].mxu0
    %932 = vdwg.mxu0
    %933 = vrot.lane.b32.xlu0 %v312, 112
    %v934 = vpop.permute.xlu0 %933
    %935 = vrot.lane.b32.xlu0 %v313, 112
    %v936 = vpop.permute.xlu0 %935
    %937 = vrot.lane.b32.xlu0 %v314, 112
    %v938 = vpop.permute.xlu0 %937
    %939 = vrot.lane.b32.xlu0 %v315, 112
    %v940 = vpop.permute.xlu0 %939
    %941 = vrot.lane.b32.xlu0 %v316, 112
    %v942 = vpop.permute.xlu0 %941
    %943 = vrot.lane.b32.xlu0 %v289, 80
    %v944 = vpop.permute.xlu0 %943
    %945 = vrot.lane.b32.xlu0 %v294, 80
    %v946 = vpop.permute.xlu0 %945
    %947 = vrot.lane.b32.xlu0 %v299, 80
    %v948 = vpop.permute.xlu0 %947
    %949 = vrot.lane.b32.xlu0 %v304, 80
    %v950 = vpop.permute.xlu0 %949
    %951 = vrot.lane.b32.xlu0 %v309, 80
    %v952 = vpop.permute.xlu0 %951
    %v953 = vsel %vm332, %v934, 0
    %v955 = vsel %vm332, %v936, 0
    %v957 = vsel %vm332, %v938, 0
    %v959 = vsel %vm332, %v940, 0
    %v961 = vsel %vm332, %v942, 0
    %v963 = vsel %vm332, %v944, 0
    %v965 = vsel %vm332, %v946, 0
    %v967 = vsel %vm332, %v948, 0
    %v969 = vsel %vm332, %v950, 0
    %v971 = vsel %vm332, %v952, 0
    %973 = vmatprep.subr.mxu0 0.0
    %974 = vmatpush1.xpose.msra.mxu0 %v963
    %975 = vmatprep.subr.mxu0 0.0
    %976 = vmatpush1.xpose.msra.mxu0 %v965
    %977 = vmatprep.subr.mxu0 0.0
    %978 = vmatpush1.xpose.msra.mxu0 %v967
    %979 = vmatprep.subr.mxu0 0.0
    %980 = vmatpush1.xpose.msra.mxu0 %v969
    %981 = vmatprep.subr.mxu0 0.0
    %982 = vmatpush1.xpose.msra.mxu0 %v971
    %983 = vmatprep.subr.mxu0 0.0
    %984 = vmatpush1.xpose.msra.mxu0 0.0
    %985 = vmatprep.subr.mxu0 0.0
    %986 = vmatpush1.xpose.msra.mxu0 0.0
    %987 = vmatprep.subr.mxu0 0.0
    %988 = vmatpush1.xpose.msra.mxu0 0.0
    %989 = vmatprep.subr.mxu0 0.0
    %990 = vmatpush1.xpose.msra.mxu0 0.0
    %991 = vmatprep.subr.mxu0 0.0
    %992 = vmatpush1.xpose.msra.mxu0 0.0
    %993 = vmatprep.subr.mxu0 0.0
    %994 = vmatpush1.xpose.msra.mxu0 0.0
    %995 = vmatprep.subr.mxu0 0.0
    %996 = vmatpush1.xpose.msra.mxu0 0.0
    %997 = vmatprep.subr.mxu0 0.0
    %998 = vmatpush1.xpose.msra.mxu0 0.0
    %999 = vmatprep.subr.mxu0 0.0
    %1000 = vmatpush1.xpose.msra.mxu0 0.0
    %1001 = vmatprep.subr.mxu0 0.0
    %1002 = vmatpush1.xpose.msra.mxu0 0.0
    %1003 = vmatprep.subr.mxu0 0.0
    %1004 = vmatpush1.xpose.msra.mxu0 0.0
    %1005 = vmatprep.subr.mxu0 0.0
    %1006 = vmatpush1.xpose.msra.mxu0 0.0
    %1007 = vmatprep.subr.mxu0 0.0
    %1008 = vmatpush1.xpose.msra.mxu0 0.0
    %1009 = vmatprep.subr.mxu0 0.0
    %1010 = vmatpush1.xpose.msra.mxu0 0.0
    %1011 = vmatprep.subr.mxu0 0.0
    %1012 = vmatpush1.xpose.msra.mxu0 0.0
    %1013 = vmatprep.subr.mxu0 0.0
    %1014 = vmatpush1.xpose.msra.mxu0 0.0
    %1015 = vmatprep.subr.mxu0 0.0
    %1016 = vmatpush1.xpose.msra.mxu0 0.0
    %1017 = vmatprep.subr.mxu0 0.0
    %1018 = vmatpush1.xpose.msra.mxu0 0.0
    %1019 = vmatprep.subr.mxu0 0.0
    %1020 = vmatpush1.xpose.msra.mxu0 0.0
    %1021 = vmatprep.subr.mxu0 0.0
    %1022 = vmatpush1.xpose.msra.mxu0 0.0
    %1023 = vmatprep.subr.mxu0 0.0
    %1024 = vmatpush1.xpose.msra.mxu0 0.0
    %1025 = vmatprep.subr.mxu0 0.0
    %1026 = vmatpush1.xpose.msra.mxu0 0.0
    %1027 = vmatprep.subr.mxu0 0.0
    %1028 = vmatpush1.xpose.msra.mxu0 0.0
    %1029 = vmatprep.subr.mxu0 0.0
    %1030 = vmatpush1.xpose.msra.mxu0 0.0
    %1031 = vmatprep.subr.mxu0 0.0
    %1032 = vmatpush1.xpose.msra.mxu0 0.0
    %1033 = vmatprep.subr.mxu0 0.0
    %1034 = vmatpush1.xpose.msra.mxu0 0.0
    %1035 = vmatprep.subr.mxu0 0.0
    %1036 = vmatpush1.xpose.msra.mxu0 0.0
    %1037 = vmatprep.mubr.f32.mxu0 0.0
    %1038 = vmatmul.mubr.f32.gmra.mrb[0].mxu0 %v953
    %v1039 = vpop.f32.mrb[0].mxu0
    %v1040 = vadd.f32 %v171, %v1039
    %v1041 = vpop.f32.mrb[0].mxu0
    %1042 = vmatprep.mubr.f32.mxu0 0.0
    %1043 = vmatmul.mubr.f32.gmra.mrb[0].mxu0 %v955
    %v1044 = vpop.f32.mrb[0].mxu0
    %v1045 = vadd.f32 %v172, %v1044
    %v1046 = vpop.f32.mrb[0].mxu0
    %1047 = vmatprep.mubr.f32.mxu0 0.0
    %1048 = vmatmul.mubr.f32.gmra.mrb[0].mxu0 %v957
    %v1049 = vpop.f32.mrb[0].mxu0
    %v1050 = vadd.f32 %v173, %v1049
    %v1051 = vpop.f32.mrb[0].mxu0
    %1052 = vmatprep.mubr.f32.mxu0 0.0
    %1053 = vmatmul.mubr.f32.gmra.mrb[0].mxu0 %v959
    %v1054 = vpop.f32.mrb[0].mxu0
    %v1055 = vadd.f32 %v174, %v1054
    %v1056 = vpop.f32.mrb[0].mxu0
    %1057 = vmatprep.mubr.f32.mxu0 0.0
    %1058 = vmatmul.mubr.f32.gmra.mrb[0].mxu0 %v961
    %v1059 = vpop.f32.mrb[0].mxu0
    %v1060 = vadd.f32 %v175, %v1059
    %v1061 = vpop.f32.mrb[0].mxu0
    %1062 = vdwg.mxu0
    %v1063 = vsel %vm448, %v1040, -inf
    %1064 = vmax.xlane.f32.xlu0 %v1063
    %v1065 = vpop.xlane.xlu0 %1064
    %v1066 = vsel %vm448, %v1045, -inf
    %1067 = vmax.xlane.f32.xlu0 %v1066
    %v1068 = vpop.xlane.xlu0 %1067
    %v1069 = vsel %vm448, %v1050, -inf
    %1070 = vmax.xlane.f32.xlu0 %v1069
    %v1071 = vpop.xlane.xlu0 %1070
    %v1072 = vsel %vm448, %v1055, -inf
    %1073 = vmax.xlane.f32.xlu0 %v1072
    %v1074 = vpop.xlane.xlu0 %1073
    %v1075 = vsel %vm461, %v1060, -inf
    %1076 = vmax.xlane.f32.xlu0 %v1075
    %v1077 = vpop.xlane.xlu0 %1076
    %v1078 = vsub.f32 %v1040, %v1065
    %v1079 = vsub.f32 %v1045, %v1068
    %v1080 = vsub.f32 %v1050, %v1071
    %v1081 = vsub.f32 %v1055, %v1074
    %v1082 = vsub.f32 %v1060, %v1077
    %v1083 = vmul.f32 %v1078, 1.442695
    %v1084 = vpow.pop %v1083
    %v1085 = vmul.f32 %v1079, 1.442695
    %v1086 = vpow.pop %v1085
    %v1087 = vmul.f32 %v1080, 1.442695
    %v1088 = vpow.pop %v1087
    %v1089 = vmul.f32 %v1081, 1.442695
    %v1090 = vpow.pop %v1089
    %v1091 = vmul.f32 %v1082, 1.442695
    %v1092 = vpow.pop %v1091
    %v1093 = vsel %vm448, %v1084, 0.0
    %1094 = vadd.xlane.f32.xlu0 %v1093
    %v1095 = vpop.xlane.xlu0 %1094
    %v1096 = vsel %vm448, %v1086, 0.0
    %1097 = vadd.xlane.f32.xlu0 %v1096
    %v1098 = vpop.xlane.xlu0 %1097
    %v1099 = vsel %vm448, %v1088, 0.0
    %1100 = vadd.xlane.f32.xlu0 %v1099
    %v1101 = vpop.xlane.xlu0 %1100
    %v1102 = vsel %vm448, %v1090, 0.0
    %1103 = vadd.xlane.f32.xlu0 %v1102
    %v1104 = vpop.xlane.xlu0 %1103
    %v1105 = vsel %vm461, %v1092, 0.0
    %1106 = vadd.xlane.f32.xlu0 %v1105
    %v1107 = vpop.xlane.xlu0 %1106
    %v1108 = vrcp.pop %v1095
    %v1109 = vrcp.pop %v1098
    %v1110 = vrcp.pop %v1101
    %v1111 = vrcp.pop %v1104
    %v1112 = vrcp.pop %v1107
    %v1113 = vmul.f32 %v1084, %v1108
    %v1114 = vmul.f32 %v1086, %v1109
    %v1115 = vmul.f32 %v1088, %v1110
    %v1116 = vmul.f32 %v1090, %v1111
    %v1117 = vmul.f32 %v1092, %v1112
    %1118 = vrot.lane.b32.xlu0 %v289, 48
    %v1119 = vpop.permute.xlu0 %1118
    %1120 = vrot.lane.b32.xlu0 %v294, 48
    %v1121 = vpop.permute.xlu0 %1120
    %1122 = vrot.lane.b32.xlu0 %v299, 48
    %v1123 = vpop.permute.xlu0 %1122
    %1124 = vrot.lane.b32.xlu0 %v304, 48
    %v1125 = vpop.permute.xlu0 %1124
    %1126 = vrot.lane.b32.xlu0 %v309, 48
    %v1127 = vpop.permute.xlu0 %1126
    %v1133 = vsel %vm448, %v1113, 0
    %v1136 = vsel %vm448, %v1114, 0
    %v1139 = vsel %vm448, %v1115, 0
    %v1142 = vsel %vm448, %v1116, 0
    %v1145 = vsel %vm448, %v1117, 0
    %v1147 = vsel %vm534, %v1127, 0
    %1149 = vmatprep.subr.mxu0 0.0
    %1150 = vmatpush1.msra.mxu0 %v1119
    %1151 = vmatprep.subr.mxu0 0.0
    %1152 = vmatpush1.msra.mxu0 %v1121
    %1153 = vmatprep.subr.mxu0 0.0
    %1154 = vmatpush1.msra.mxu0 %v1123
    %1155 = vmatprep.subr.mxu0 0.0
    %1156 = vmatpush1.msra.mxu0 %v1125
    %1157 = vmatprep.subr.mxu0 0.0
    %1158 = vmatpush1.msra.mxu0 %v1147
    %1159 = vmatprep.subr.mxu0 0.0
    %1160 = vmatpush1.msra.mxu0 0.0
    %1161 = vmatprep.subr.mxu0 0.0
    %1162 = vmatpush1.msra.mxu0 0.0
    %1163 = vmatprep.subr.mxu0 0.0
    %1164 = vmatpush1.msra.mxu0 0.0
    %1165 = vmatprep.subr.mxu0 0.0
    %1166 = vmatpush1.msra.mxu0 0.0
    %1167 = vmatprep.subr.mxu0 0.0
    %1168 = vmatpush1.msra.mxu0 0.0
    %1169 = vmatprep.subr.mxu0 0.0
    %1170 = vmatpush1.msra.mxu0 0.0
    %1171 = vmatprep.subr.mxu0 0.0
    %1172 = vmatpush1.msra.mxu0 0.0
    %1173 = vmatprep.subr.mxu0 0.0
    %1174 = vmatpush1.msra.mxu0 0.0
    %1175 = vmatprep.subr.mxu0 0.0
    %1176 = vmatpush1.msra.mxu0 0.0
    %1177 = vmatprep.subr.mxu0 0.0
    %1178 = vmatpush1.msra.mxu0 0.0
    %1179 = vmatprep.subr.mxu0 0.0
    %1180 = vmatpush1.msra.mxu0 0.0
    %1181 = vmatprep.subr.mxu0 0.0
    %1182 = vmatpush1.msra.mxu0 0.0
    %1183 = vmatprep.subr.mxu0 0.0
    %1184 = vmatpush1.msra.mxu0 0.0
    %1185 = vmatprep.subr.mxu0 0.0
    %1186 = vmatpush1.msra.mxu0 0.0
    %1187 = vmatprep.subr.mxu0 0.0
    %1188 = vmatpush1.msra.mxu0 0.0
    %1189 = vmatprep.subr.mxu0 0.0
    %1190 = vmatpush1.msra.mxu0 0.0
    %1191 = vmatprep.subr.mxu0 0.0
    %1192 = vmatpush1.msra.mxu0 0.0
    %1193 = vmatprep.subr.mxu0 0.0
    %1194 = vmatpush1.msra.mxu0 0.0
    %1195 = vmatprep.subr.mxu0 0.0
    %1196 = vmatpush1.msra.mxu0 0.0
    %1197 = vmatprep.subr.mxu0 0.0
    %1198 = vmatpush1.msra.mxu0 0.0
    %1199 = vmatprep.subr.mxu0 0.0
    %1200 = vmatpush1.msra.mxu0 0.0
    %1201 = vmatprep.subr.mxu0 0.0
    %1202 = vmatpush1.msra.mxu0 0.0
    %1203 = vmatprep.subr.mxu0 0.0
    %1204 = vmatpush1.msra.mxu0 0.0
    %1205 = vmatprep.subr.mxu0 0.0
    %1206 = vmatpush1.msra.mxu0 0.0
    %1207 = vmatprep.subr.mxu0 0.0
    %1208 = vmatpush1.msra.mxu0 0.0
    %1209 = vmatprep.subr.mxu0 0.0
    %1210 = vmatpush1.msra.mxu0 0.0
    %1211 = vmatprep.subr.mxu0 0.0
    %1212 = vmatpush1.msra.mxu0 0.0
    %1213 = vmatprep.mubr.f32.mxu0 0.0
    %1214 = vmatmul.mubr.f32.gmra.mrb[0].mxu0 %v1133
    %v1215 = vpop.f32.mrb[0].mxu0
    %v1216 = vadd.f32 0.0, %v1215
    %v1217 = vpop.f32.mrb[0].mxu0
    %1218 = vmatprep.mubr.f32.mxu0 0.0
    %1219 = vmatmul.mubr.f32.gmra.mrb[0].mxu0 %v1136
    %v1220 = vpop.f32.mrb[0].mxu0
    %v1221 = vadd.f32 0.0, %v1220
    %v1222 = vpop.f32.mrb[0].mxu0
    %1223 = vmatprep.mubr.f32.mxu0 0.0
    %1224 = vmatmul.mubr.f32.gmra.mrb[0].mxu0 %v1139
    %v1225 = vpop.f32.mrb[0].mxu0
    %v1226 = vadd.f32 0.0, %v1225
    %v1227 = vpop.f32.mrb[0].mxu0
    %1228 = vmatprep.mubr.f32.mxu0 0.0
    %1229 = vmatmul.mubr.f32.gmra.mrb[0].mxu0 %v1142
    %v1230 = vpop.f32.mrb[0].mxu0
    %v1231 = vadd.f32 0.0, %v1230
    %v1232 = vpop.f32.mrb[0].mxu0
    %1233 = vmatprep.mubr.f32.mxu0 0.0
    %1234 = vmatmul.mubr.f32.gmra.mrb[0].mxu0 %v1145
    %v1235 = vpop.f32.mrb[0].mxu0
    %v1236 = vadd.f32 0.0, %v1235
    %v1237 = vpop.f32.mrb[0].mxu0
    %1238 = vdwg.mxu0
    %1239 = vrot.lane.b32.xlu0 %v312, 104
    %v1240 = vpop.permute.xlu0 %1239
    %1241 = vrot.lane.b32.xlu0 %v313, 104
    %v1242 = vpop.permute.xlu0 %1241
    %1243 = vrot.lane.b32.xlu0 %v314, 104
    %v1244 = vpop.permute.xlu0 %1243
    %1245 = vrot.lane.b32.xlu0 %v315, 104
    %v1246 = vpop.permute.xlu0 %1245
    %1247 = vrot.lane.b32.xlu0 %v316, 104
    %v1248 = vpop.permute.xlu0 %1247
    %1249 = vrot.lane.b32.xlu0 %v289, 72
    %v1250 = vpop.permute.xlu0 %1249
    %1251 = vrot.lane.b32.xlu0 %v294, 72
    %v1252 = vpop.permute.xlu0 %1251
    %1253 = vrot.lane.b32.xlu0 %v299, 72
    %v1254 = vpop.permute.xlu0 %1253
    %1255 = vrot.lane.b32.xlu0 %v304, 72
    %v1256 = vpop.permute.xlu0 %1255
    %1257 = vrot.lane.b32.xlu0 %v309, 72
    %v1258 = vpop.permute.xlu0 %1257
    %v1259 = vsel %vm332, %v1240, 0
    %v1261 = vsel %vm332, %v1242, 0
    %v1263 = vsel %vm332, %v1244, 0
    %v1265 = vsel %vm332, %v1246, 0
    %v1267 = vsel %vm332, %v1248, 0
    %v1269 = vsel %vm332, %v1250, 0
    %v1271 = vsel %vm332, %v1252, 0
    %v1273 = vsel %vm332, %v1254, 0
    %v1275 = vsel %vm332, %v1256, 0
    %v1277 = vsel %vm332, %v1258, 0
    %1279 = vmatprep.subr.mxu0 0.0
    %1280 = vmatpush1.xpose.msra.mxu0 %v1269
    %1281 = vmatprep.subr.mxu0 0.0
    %1282 = vmatpush1.xpose.msra.mxu0 %v1271
    %1283 = vmatprep.subr.mxu0 0.0
    %1284 = vmatpush1.xpose.msra.mxu0 %v1273
    %1285 = vmatprep.subr.mxu0 0.0
    %1286 = vmatpush1.xpose.msra.mxu0 %v1275
    %1287 = vmatprep.subr.mxu0 0.0
    %1288 = vmatpush1.xpose.msra.mxu0 %v1277
    %1289 = vmatprep.subr.mxu0 0.0
    %1290 = vmatpush1.xpose.msra.mxu0 0.0
    %1291 = vmatprep.subr.mxu0 0.0
    %1292 = vmatpush1.xpose.msra.mxu0 0.0
    %1293 = vmatprep.subr.mxu0 0.0
    %1294 = vmatpush1.xpose.msra.mxu0 0.0
    %1295 = vmatprep.subr.mxu0 0.0
    %1296 = vmatpush1.xpose.msra.mxu0 0.0
    %1297 = vmatprep.subr.mxu0 0.0
    %1298 = vmatpush1.xpose.msra.mxu0 0.0
    %1299 = vmatprep.subr.mxu0 0.0
    %1300 = vmatpush1.xpose.msra.mxu0 0.0
    %1301 = vmatprep.subr.mxu0 0.0
    %1302 = vmatpush1.xpose.msra.mxu0 0.0
    %1303 = vmatprep.subr.mxu0 0.0
    %1304 = vmatpush1.xpose.msra.mxu0 0.0
    %1305 = vmatprep.subr.mxu0 0.0
    %1306 = vmatpush1.xpose.msra.mxu0 0.0
    %1307 = vmatprep.subr.mxu0 0.0
    %1308 = vmatpush1.xpose.msra.mxu0 0.0
    %1309 = vmatprep.subr.mxu0 0.0
    %1310 = vmatpush1.xpose.msra.mxu0 0.0
    %1311 = vmatprep.subr.mxu0 0.0
    %1312 = vmatpush1.xpose.msra.mxu0 0.0
    %1313 = vmatprep.subr.mxu0 0.0
    %1314 = vmatpush1.xpose.msra.mxu0 0.0
    %1315 = vmatprep.subr.mxu0 0.0
    %1316 = vmatpush1.xpose.msra.mxu0 0.0
    %1317 = vmatprep.subr.mxu0 0.0
    %1318 = vmatpush1.xpose.msra.mxu0 0.0
    %1319 = vmatprep.subr.mxu0 0.0
    %1320 = vmatpush1.xpose.msra.mxu0 0.0
    %1321 = vmatprep.subr.mxu0 0.0
    %1322 = vmatpush1.xpose.msra.mxu0 0.0
    %1323 = vmatprep.subr.mxu0 0.0
    %1324 = vmatpush1.xpose.msra.mxu0 0.0
    %1325 = vmatprep.subr.mxu0 0.0
    %1326 = vmatpush1.xpose.msra.mxu0 0.0
    %1327 = vmatprep.subr.mxu0 0.0
    %1328 = vmatpush1.xpose.msra.mxu0 0.0
    %1329 = vmatprep.subr.mxu0 0.0
    %1330 = vmatpush1.xpose.msra.mxu0 0.0
    %1331 = vmatprep.subr.mxu0 0.0
    %1332 = vmatpush1.xpose.msra.mxu0 0.0
    %1333 = vmatprep.subr.mxu0 0.0
    %1334 = vmatpush1.xpose.msra.mxu0 0.0
    %1335 = vmatprep.subr.mxu0 0.0
    %1336 = vmatpush1.xpose.msra.mxu0 0.0
    %1337 = vmatprep.subr.mxu0 0.0
    %1338 = vmatpush1.xpose.msra.mxu0 0.0
    %1339 = vmatprep.subr.mxu0 0.0
    %1340 = vmatpush1.xpose.msra.mxu0 0.0
    %1341 = vmatprep.subr.mxu0 0.0
    %1342 = vmatpush1.xpose.msra.mxu0 0.0
    %1343 = vmatprep.mubr.f32.mxu0 0.0
    %1344 = vmatmul.mubr.f32.gmra.mrb[0].mxu0 %v1259
    %v1345 = vpop.f32.mrb[0].mxu0
    %v1346 = vadd.f32 %v171, %v1345
    %v1347 = vpop.f32.mrb[0].mxu0
    %1348 = vmatprep.mubr.f32.mxu0 0.0
    %1349 = vmatmul.mubr.f32.gmra.mrb[0].mxu0 %v1261
    %v1350 = vpop.f32.mrb[0].mxu0
    %v1351 = vadd.f32 %v172, %v1350
    %v1352 = vpop.f32.mrb[0].mxu0
    %1353 = vmatprep.mubr.f32.mxu0 0.0
    %1354 = vmatmul.mubr.f32.gmra.mrb[0].mxu0 %v1263
    %v1355 = vpop.f32.mrb[0].mxu0
    %v1356 = vadd.f32 %v173, %v1355
    %v1357 = vpop.f32.mrb[0].mxu0
    %1358 = vmatprep.mubr.f32.mxu0 0.0
    %1359 = vmatmul.mubr.f32.gmra.mrb[0].mxu0 %v1265
    %v1360 = vpop.f32.mrb[0].mxu0
    %v1361 = vadd.f32 %v174, %v1360
    %v1362 = vpop.f32.mrb[0].mxu0
    %1363 = vmatprep.mubr.f32.mxu0 0.0
    %1364 = vmatmul.mubr.f32.gmra.mrb[0].mxu0 %v1267
    %v1365 = vpop.f32.mrb[0].mxu0
    %v1366 = vadd.f32 %v175, %v1365
    %v1367 = vpop.f32.mrb[0].mxu0
    %1368 = vdwg.mxu0
    %v1369 = vsel %vm448, %v1346, -inf
    %1370 = vmax.xlane.f32.xlu0 %v1369
    %v1371 = vpop.xlane.xlu0 %1370
    %v1372 = vsel %vm448, %v1351, -inf
    %1373 = vmax.xlane.f32.xlu0 %v1372
    %v1374 = vpop.xlane.xlu0 %1373
    %v1375 = vsel %vm448, %v1356, -inf
    %1376 = vmax.xlane.f32.xlu0 %v1375
    %v1377 = vpop.xlane.xlu0 %1376
    %v1378 = vsel %vm448, %v1361, -inf
    %1379 = vmax.xlane.f32.xlu0 %v1378
    %v1380 = vpop.xlane.xlu0 %1379
    %v1381 = vsel %vm461, %v1366, -inf
    %1382 = vmax.xlane.f32.xlu0 %v1381
    %v1383 = vpop.xlane.xlu0 %1382
    %v1384 = vsub.f32 %v1346, %v1371
    %v1385 = vsub.f32 %v1351, %v1374
    %v1386 = vsub.f32 %v1356, %v1377
    %v1387 = vsub.f32 %v1361, %v1380
    %v1388 = vsub.f32 %v1366, %v1383
    %v1389 = vmul.f32 %v1384, 1.442695
    %v1390 = vpow.pop %v1389
    %v1391 = vmul.f32 %v1385, 1.442695
    %v1392 = vpow.pop %v1391
    %v1393 = vmul.f32 %v1386, 1.442695
    %v1394 = vpow.pop %v1393
    %v1395 = vmul.f32 %v1387, 1.442695
    %v1396 = vpow.pop %v1395
    %v1397 = vmul.f32 %v1388, 1.442695
    %v1398 = vpow.pop %v1397
    %v1399 = vsel %vm448, %v1390, 0.0
    %1400 = vadd.xlane.f32.xlu0 %v1399
    %v1401 = vpop.xlane.xlu0 %1400
    %v1402 = vsel %vm448, %v1392, 0.0
    %1403 = vadd.xlane.f32.xlu0 %v1402
    %v1404 = vpop.xlane.xlu0 %1403
    %v1405 = vsel %vm448, %v1394, 0.0
    %1406 = vadd.xlane.f32.xlu0 %v1405
    %v1407 = vpop.xlane.xlu0 %1406
    %v1408 = vsel %vm448, %v1396, 0.0
    %1409 = vadd.xlane.f32.xlu0 %v1408
    %v1410 = vpop.xlane.xlu0 %1409
    %v1411 = vsel %vm461, %v1398, 0.0
    %1412 = vadd.xlane.f32.xlu0 %v1411
    %v1413 = vpop.xlane.xlu0 %1412
    %v1414 = vrcp.pop %v1401
    %v1415 = vrcp.pop %v1404
    %v1416 = vrcp.pop %v1407
    %v1417 = vrcp.pop %v1410
    %v1418 = vrcp.pop %v1413
    %v1419 = vmul.f32 %v1390, %v1414
    %v1420 = vmul.f32 %v1392, %v1415
    %v1421 = vmul.f32 %v1394, %v1416
    %v1422 = vmul.f32 %v1396, %v1417
    %v1423 = vmul.f32 %v1398, %v1418
    %1424 = vrot.lane.b32.xlu0 %v289, 40
    %v1425 = vpop.permute.xlu0 %1424
    %1426 = vrot.lane.b32.xlu0 %v294, 40
    %v1427 = vpop.permute.xlu0 %1426
    %1428 = vrot.lane.b32.xlu0 %v299, 40
    %v1429 = vpop.permute.xlu0 %1428
    %1430 = vrot.lane.b32.xlu0 %v304, 40
    %v1431 = vpop.permute.xlu0 %1430
    %1432 = vrot.lane.b32.xlu0 %v309, 40
    %v1433 = vpop.permute.xlu0 %1432
    %v1439 = vsel %vm448, %v1419, 0
    %v1442 = vsel %vm448, %v1420, 0
    %v1445 = vsel %vm448, %v1421, 0
    %v1448 = vsel %vm448, %v1422, 0
    %v1451 = vsel %vm448, %v1423, 0
    %v1453 = vsel %vm534, %v1433, 0
    %1455 = vmatprep.subr.mxu0 0.0
    %1456 = vmatpush1.msra.mxu0 %v1425
    %1457 = vmatprep.subr.mxu0 0.0
    %1458 = vmatpush1.msra.mxu0 %v1427
    %1459 = vmatprep.subr.mxu0 0.0
    %1460 = vmatpush1.msra.mxu0 %v1429
    %1461 = vmatprep.subr.mxu0 0.0
    %1462 = vmatpush1.msra.mxu0 %v1431
    %1463 = vmatprep.subr.mxu0 0.0
    %1464 = vmatpush1.msra.mxu0 %v1453
    %1465 = vmatprep.subr.mxu0 0.0
    %1466 = vmatpush1.msra.mxu0 0.0
    %1467 = vmatprep.subr.mxu0 0.0
    %1468 = vmatpush1.msra.mxu0 0.0
    %1469 = vmatprep.subr.mxu0 0.0
    %1470 = vmatpush1.msra.mxu0 0.0
    %1471 = vmatprep.subr.mxu0 0.0
    %1472 = vmatpush1.msra.mxu0 0.0
    %1473 = vmatprep.subr.mxu0 0.0
    %1474 = vmatpush1.msra.mxu0 0.0
    %1475 = vmatprep.subr.mxu0 0.0
    %1476 = vmatpush1.msra.mxu0 0.0
    %1477 = vmatprep.subr.mxu0 0.0
    %1478 = vmatpush1.msra.mxu0 0.0
    %1479 = vmatprep.subr.mxu0 0.0
    %1480 = vmatpush1.msra.mxu0 0.0
    %1481 = vmatprep.subr.mxu0 0.0
    %1482 = vmatpush1.msra.mxu0 0.0
    %1483 = vmatprep.subr.mxu0 0.0
    %1484 = vmatpush1.msra.mxu0 0.0
    %1485 = vmatprep.subr.mxu0 0.0
    %1486 = vmatpush1.msra.mxu0 0.0
    %1487 = vmatprep.subr.mxu0 0.0
    %1488 = vmatpush1.msra.mxu0 0.0
    %1489 = vmatprep.subr.mxu0 0.0
    %1490 = vmatpush1.msra.mxu0 0.0
    %1491 = vmatprep.subr.mxu0 0.0
    %1492 = vmatpush1.msra.mxu0 0.0
    %1493 = vmatprep.subr.mxu0 0.0
    %1494 = vmatpush1.msra.mxu0 0.0
    %1495 = vmatprep.subr.mxu0 0.0
    %1496 = vmatpush1.msra.mxu0 0.0
    %1497 = vmatprep.subr.mxu0 0.0
    %1498 = vmatpush1.msra.mxu0 0.0
    %1499 = vmatprep.subr.mxu0 0.0
    %1500 = vmatpush1.msra.mxu0 0.0
    %1501 = vmatprep.subr.mxu0 0.0
    %1502 = vmatpush1.msra.mxu0 0.0
    %1503 = vmatprep.subr.mxu0 0.0
    %1504 = vmatpush1.msra.mxu0 0.0
    %1505 = vmatprep.subr.mxu0 0.0
    %1506 = vmatpush1.msra.mxu0 0.0
    %1507 = vmatprep.subr.mxu0 0.0
    %1508 = vmatpush1.msra.mxu0 0.0
    %1509 = vmatprep.subr.mxu0 0.0
    %1510 = vmatpush1.msra.mxu0 0.0
    %1511 = vmatprep.subr.mxu0 0.0
    %1512 = vmatpush1.msra.mxu0 0.0
    %1513 = vmatprep.subr.mxu0 0.0
    %1514 = vmatpush1.msra.mxu0 0.0
    %1515 = vmatprep.subr.mxu0 0.0
    %1516 = vmatpush1.msra.mxu0 0.0
    %1517 = vmatprep.subr.mxu0 0.0
    %1518 = vmatpush1.msra.mxu0 0.0
    %1519 = vmatprep.mubr.f32.mxu0 0.0
    %1520 = vmatmul.mubr.f32.gmra.mrb[0].mxu0 %v1439
    %v1521 = vpop.f32.mrb[0].mxu0
    %v1522 = vadd.f32 0.0, %v1521
    %v1523 = vpop.f32.mrb[0].mxu0
    %1524 = vmatprep.mubr.f32.mxu0 0.0
    %1525 = vmatmul.mubr.f32.gmra.mrb[0].mxu0 %v1442
    %v1526 = vpop.f32.mrb[0].mxu0
    %v1527 = vadd.f32 0.0, %v1526
    %v1528 = vpop.f32.mrb[0].mxu0
    %1529 = vmatprep.mubr.f32.mxu0 0.0
    %1530 = vmatmul.mubr.f32.gmra.mrb[0].mxu0 %v1445
    %v1531 = vpop.f32.mrb[0].mxu0
    %v1532 = vadd.f32 0.0, %v1531
    %v1533 = vpop.f32.mrb[0].mxu0
    %1534 = vmatprep.mubr.f32.mxu0 0.0
    %1535 = vmatmul.mubr.f32.gmra.mrb[0].mxu0 %v1448
    %v1536 = vpop.f32.mrb[0].mxu0
    %v1537 = vadd.f32 0.0, %v1536
    %v1538 = vpop.f32.mrb[0].mxu0
    %1539 = vmatprep.mubr.f32.mxu0 0.0
    %1540 = vmatmul.mubr.f32.gmra.mrb[0].mxu0 %v1451
    %v1541 = vpop.f32.mrb[0].mxu0
    %v1542 = vadd.f32 0.0, %v1541
    %v1543 = vpop.f32.mrb[0].mxu0
    %1544 = vdwg.mxu0
    %1550 = vrot.lane.b32.xlu0 %v910, 8
    %v1551 = vpop.permute.xlu0 %1550
    %1552 = vrot.lane.b32.xlu0 %v915, 8
    %v1553 = vpop.permute.xlu0 %1552
    %1554 = vrot.lane.b32.xlu0 %v920, 8
    %v1555 = vpop.permute.xlu0 %1554
    %1556 = vrot.lane.b32.xlu0 %v925, 8
    %v1557 = vpop.permute.xlu0 %1556
    %1558 = vrot.lane.b32.xlu0 %v930, 8
    %v1559 = vpop.permute.xlu0 %1558
    %1570 = vrot.lane.b32.xlu0 %v1216, 16
    %v1571 = vpop.permute.xlu0 %1570
    %1572 = vrot.lane.b32.xlu0 %v1221, 16
    %v1573 = vpop.permute.xlu0 %1572
    %1574 = vrot.lane.b32.xlu0 %v1226, 16
    %v1575 = vpop.permute.xlu0 %1574
    %1576 = vrot.lane.b32.xlu0 %v1231, 16
    %v1577 = vpop.permute.xlu0 %1576
    %1578 = vrot.lane.b32.xlu0 %v1236, 16
    %v1579 = vpop.permute.xlu0 %1578
    %1590 = vrot.lane.b32.xlu0 %v1522, 24
    %v1591 = vpop.permute.xlu0 %1590
    %1592 = vrot.lane.b32.xlu0 %v1527, 24
    %v1593 = vpop.permute.xlu0 %1592
    %1594 = vrot.lane.b32.xlu0 %v1532, 24
    %v1595 = vpop.permute.xlu0 %1594
    %1596 = vrot.lane.b32.xlu0 %v1537, 24
    %v1597 = vpop.permute.xlu0 %1596
    %1598 = vrot.lane.b32.xlu0 %v1542, 24
    %v1599 = vpop.permute.xlu0 %1598
    %v1605 = vsel %vm332, %v604, %v1551
    %v1606 = vsel %vm332, %v609, %v1553
    %v1607 = vsel %vm332, %v614, %v1555
    %v1608 = vsel %vm332, %v619, %v1557
    %v1609 = vsel %vm332, %v624, %v1559
    %vm1610 = vcmask 130048
    %v1611 = vsel %vm1610, %v1605, %v1571
    %v1612 = vsel %vm1610, %v1606, %v1573
    %v1613 = vsel %vm1610, %v1607, %v1575
    %v1614 = vsel %vm1610, %v1608, %v1577
    %v1615 = vsel %vm1610, %v1609, %v1579
    %vm1616 = vcmask 195584
    %v1617 = vsel %vm1616, %v1611, %v1591
    %v1618 = vsel %vm1616, %v1612, %v1593
    %v1619 = vsel %vm1616, %v1613, %v1595
    %v1620 = vsel %vm1616, %v1614, %v1597
    %v1621 = vsel %vm1616, %v1615, %v1599
    %1626 = vrot.lane.b32.xlu0 %v176, 32
    %v1627 = vpop.permute.xlu0 %1626
    %1628 = vrot.lane.b32.xlu0 %v177, 32
    %v1629 = vpop.permute.xlu0 %1628
    %1630 = vrot.lane.b32.xlu0 %v178, 32
    %v1631 = vpop.permute.xlu0 %1630
    %1632 = vrot.lane.b32.xlu0 %v179, 32
    %v1633 = vpop.permute.xlu0 %1632
    %1639 = vrot.lane.b32.xlu0 %v205, 32
    %v1640 = vpop.permute.xlu0 %1639
    %v1643 = vsel %vm206, %v1617, 0
    %v1646 = vsel %vm206, %v1618, 0
    %v1649 = vsel %vm206, %v1619, 0
    %v1652 = vsel %vm206, %v1620, 0
    %v1655 = vsel %vm206, %v1621, 0
    %1657 = vmatprep.subr.mxu0 0.0
    %1658 = vmatpush1.msra.mxu0 %v1627
    %1659 = vmatprep.subr.mxu0 0.0
    %1660 = vmatpush1.msra.mxu0 %v1629
    %1661 = vmatprep.subr.mxu0 0.0
    %1662 = vmatpush1.msra.mxu0 %v1631
    %1663 = vmatprep.subr.mxu0 0.0
    %1664 = vmatpush1.msra.mxu0 %v1633
    %1665 = vmatprep.subr.mxu0 0.0
    %1666 = vmatpush1.msra.mxu0 0.0
    %1667 = vmatprep.subr.mxu0 0.0
    %1668 = vmatpush1.msra.mxu0 0.0
    %1669 = vmatprep.subr.mxu0 0.0
    %1670 = vmatpush1.msra.mxu0 0.0
    %1671 = vmatprep.subr.mxu0 0.0
    %1672 = vmatpush1.msra.mxu0 0.0
    %1673 = vmatprep.subr.mxu0 0.0
    %1674 = vmatpush1.msra.mxu0 0.0
    %1675 = vmatprep.subr.mxu0 0.0
    %1676 = vmatpush1.msra.mxu0 0.0
    %1677 = vmatprep.subr.mxu0 0.0
    %1678 = vmatpush1.msra.mxu0 0.0
    %1679 = vmatprep.subr.mxu0 0.0
    %1680 = vmatpush1.msra.mxu0 0.0
    %1681 = vmatprep.subr.mxu0 0.0
    %1682 = vmatpush1.msra.mxu0 0.0
    %1683 = vmatprep.subr.mxu0 0.0
    %1684 = vmatpush1.msra.mxu0 0.0
    %1685 = vmatprep.subr.mxu0 0.0
    %1686 = vmatpush1.msra.mxu0 0.0
    %1687 = vmatprep.subr.mxu0 0.0
    %1688 = vmatpush1.msra.mxu0 0.0
    %1689 = vmatprep.subr.mxu0 0.0
    %1690 = vmatpush1.msra.mxu0 0.0
    %1691 = vmatprep.subr.mxu0 0.0
    %1692 = vmatpush1.msra.mxu0 0.0
    %1693 = vmatprep.subr.mxu0 0.0
    %1694 = vmatpush1.msra.mxu0 0.0
    %1695 = vmatprep.subr.mxu0 0.0
    %1696 = vmatpush1.msra.mxu0 0.0
    %1697 = vmatprep.subr.mxu0 0.0
    %1698 = vmatpush1.msra.mxu0 0.0
    %1699 = vmatprep.subr.mxu0 0.0
    %1700 = vmatpush1.msra.mxu0 0.0
    %1701 = vmatprep.subr.mxu0 0.0
    %1702 = vmatpush1.msra.mxu0 0.0
    %1703 = vmatprep.subr.mxu0 0.0
    %1704 = vmatpush1.msra.mxu0 0.0
    %1705 = vmatprep.subr.mxu0 0.0
    %1706 = vmatpush1.msra.mxu0 0.0
    %1707 = vmatprep.subr.mxu0 0.0
    %1708 = vmatpush1.msra.mxu0 0.0
    %1709 = vmatprep.subr.mxu0 0.0
    %1710 = vmatpush1.msra.mxu0 0.0
    %1711 = vmatprep.subr.mxu0 0.0
    %1712 = vmatpush1.msra.mxu0 0.0
    %1713 = vmatprep.subr.mxu0 0.0
    %1714 = vmatpush1.msra.mxu0 0.0
    %1715 = vmatprep.subr.mxu0 0.0
    %1716 = vmatpush1.msra.mxu0 0.0
    %1717 = vmatprep.subr.mxu0 0.0
    %1718 = vmatpush1.msra.mxu0 0.0
    %1719 = vmatprep.subr.mxu0 0.0
    %1720 = vmatpush1.msra.mxu0 0.0
    %1721 = vmatprep.mubr.f32.mxu0 0.0
    %1722 = vmatmul.mubr.f32.gmra.mrb[0].mxu0 %v1643
    %v1723 = vpop.f32.mrb[0].mxu0
    %v1724 = vadd.f32 %v1640, %v1723
    %v1725 = vpop.f32.mrb[0].mxu0
    %1726 = vmatprep.mubr.f32.mxu0 0.0
    %1727 = vmatmul.mubr.f32.gmra.mrb[0].mxu0 %v1646
    %v1728 = vpop.f32.mrb[0].mxu0
    %v1729 = vadd.f32 %v1640, %v1728
    %v1730 = vpop.f32.mrb[0].mxu0
    %1731 = vmatprep.mubr.f32.mxu0 0.0
    %1732 = vmatmul.mubr.f32.gmra.mrb[0].mxu0 %v1649
    %v1733 = vpop.f32.mrb[0].mxu0
    %v1734 = vadd.f32 %v1640, %v1733
    %v1735 = vpop.f32.mrb[0].mxu0
    %1736 = vmatprep.mubr.f32.mxu0 0.0
    %1737 = vmatmul.mubr.f32.gmra.mrb[0].mxu0 %v1652
    %v1738 = vpop.f32.mrb[0].mxu0
    %v1739 = vadd.f32 %v1640, %v1738
    %v1740 = vpop.f32.mrb[0].mxu0
    %1741 = vmatprep.mubr.f32.mxu0 0.0
    %1742 = vmatmul.mubr.f32.gmra.mrb[0].mxu0 %v1655
    %v1743 = vpop.f32.mrb[0].mxu0
    %v1744 = vadd.f32 %v1640, %v1743
    %v1745 = vpop.f32.mrb[0].mxu0
    %1746 = vdwg.mxu0
    %v1747 = vadd.f32 %v148, %v1724
    %v1748 = vadd.f32 %v153, %v1729
    %v1749 = vadd.f32 %v158, %v1734
    %v1750 = vadd.f32 %v163, %v1739
    %v1751 = vadd.f32 %v168, %v1744
    %v1752 = vsel %vm206, %v1747, 0.0
    %1753 = vadd.xlane.f32.xlu0 %v1752
    %v1754 = vpop.xlane.xlu0 %1753
    %v1755 = vsel %vm206, %v1748, 0.0
    %1756 = vadd.xlane.f32.xlu0 %v1755
    %v1757 = vpop.xlane.xlu0 %1756
    %v1758 = vsel %vm206, %v1749, 0.0
    %1759 = vadd.xlane.f32.xlu0 %v1758
    %v1760 = vpop.xlane.xlu0 %1759
    %v1761 = vsel %vm206, %v1750, 0.0
    %1762 = vadd.xlane.f32.xlu0 %v1761
    %v1763 = vpop.xlane.xlu0 %1762
    %vm1764 = vcmask 254976
    %v1765 = vsel %vm1764, %v1751, 0.0
    %1766 = vadd.xlane.f32.xlu0 %v1765
    %v1767 = vpop.xlane.xlu0 %1766
    %v1768 = vrcp.pop 32.0
    %v1769 = vmul.f32 %v1754, %v1768
    %v1770 = vmul.f32 %v1757, %v1768
    %v1771 = vmul.f32 %v1760, %v1768
    %v1772 = vmul.f32 %v1763, %v1768
    %v1773 = vmul.f32 %v1767, %v1768
    %v1774 = vsub.f32 %v1747, %v1769
    %v1775 = vsub.f32 %v1748, %v1770
    %v1776 = vsub.f32 %v1749, %v1771
    %v1777 = vsub.f32 %v1750, %v1772
    %v1778 = vsub.f32 %v1751, %v1773
    %v1779 = vmul.f32 %v1774, %v1774
    %v1780 = vmul.f32 %v1775, %v1775
    %v1781 = vmul.f32 %v1776, %v1776
    %v1782 = vmul.f32 %v1777, %v1777
    %v1783 = vmul.f32 %v1778, %v1778
    %v1784 = vsel %vm206, %v1779, 0.0
    %1785 = vadd.xlane.f32.xlu0 %v1784
    %v1786 = vpop.xlane.xlu0 %1785
    %v1787 = vsel %vm206, %v1780, 0.0
    %1788 = vadd.xlane.f32.xlu0 %v1787
    %v1789 = vpop.xlane.xlu0 %1788
    %v1790 = vsel %vm206, %v1781, 0.0
    %1791 = vadd.xlane.f32.xlu0 %v1790
    %v1792 = vpop.xlane.xlu0 %1791
    %v1793 = vsel %vm206, %v1782, 0.0
    %1794 = vadd.xlane.f32.xlu0 %v1793
    %v1795 = vpop.xlane.xlu0 %1794
    %v1796 = vsel %vm1764, %v1783, 0.0
    %1797 = vadd.xlane.f32.xlu0 %v1796
    %v1798 = vpop.xlane.xlu0 %1797
    %v1799 = vmul.f32 %v1786, %v1768
    %v1800 = vmul.f32 %v1789, %v1768
    %v1801 = vmul.f32 %v1792, %v1768
    %v1802 = vmul.f32 %v1795, %v1768
    %v1803 = vmul.f32 %v1798, %v1768
    %v1804 = vadd.f32 %v1799, 1e-05
    %v1805 = vadd.f32 %v1800, 1e-05
    %v1806 = vadd.f32 %v1801, 1e-05
    %v1807 = vadd.f32 %v1802, 1e-05
    %v1808 = vadd.f32 %v1803, 1e-05
    %v1809 = vrsqrt.pop %v1804
    %v1810 = vrsqrt.pop %v1805
    %v1811 = vrsqrt.pop %v1806
    %v1812 = vrsqrt.pop %v1807
    %v1813 = vrsqrt.pop %v1808
    %v1814 = vmul.f32 %v1774, %v1809
    %v1815 = vmul.f32 %v1775, %v1810
    %v1816 = vmul.f32 %v1776, %v1811
    %v1817 = vmul.f32 %v1777, %v1812
    %v1818 = vmul.f32 %v1778, %v1813
    %v1819 = vlaneseq
    %v1820 = vshrl.u32 %v1819, 7
    %v1821 = vsub.s32 0, %v1820
    %v1822 = vrot.slane %v201, %v1821
    %v1823 = vmul.f32 %v1814, %v1822
    %v1824 = vmul.f32 %v1815, %v1822
    %v1825 = vmul.f32 %v1816, %v1822
    %v1826 = vmul.f32 %v1817, %v1822
    %v1827 = vmul.f32 %v1818, %v1822
    %v1828 = vlaneseq
    %v1829 = vshrl.u32 %v1828, 7
    %v1830 = vsub.s32 1, %v1829
    %v1831 = vrot.slane %v201, %v1830
    %v1832 = vadd.f32 %v1823, %v1831
    %v1833 = vadd.f32 %v1824, %v1831
    %v1834 = vadd.f32 %v1825, %v1831
    %v1835 = vadd.f32 %v1826, %v1831
    %v1836 = vadd.f32 %v1827, %v1831
    %v1837 = vlaneseq
    %v1838 = vshrl.u32 %v1837, 7
    %v1839 = vsub.s32 1, %v1838
    %v1840 = vrot.slane %v180, %v1839
    %v1842 = vsel %vm206, %v1832, 0
    %v1845 = vsel %vm206, %v1833, 0
    %v1848 = vsel %vm206, %v1834, 0
    %v1851 = vsel %vm206, %v1835, 0
    %v1854 = vsel %vm206, %v1836, 0
    %1856 = vmatprep.subr.mxu0 0.0
    %1857 = vmatpush1.msra.mxu0 %v181
    %1858 = vmatprep.subr.mxu0 0.0
    %1859 = vmatpush1.msra.mxu0 %v182
    %1860 = vmatprep.subr.mxu0 0.0
    %1861 = vmatpush1.msra.mxu0 %v183
    %1862 = vmatprep.subr.mxu0 0.0
    %1863 = vmatpush1.msra.mxu0 %v184
    %1864 = vmatprep.subr.mxu0 0.0
    %1865 = vmatpush1.msra.mxu0 0.0
    %1866 = vmatprep.subr.mxu0 0.0
    %1867 = vmatpush1.msra.mxu0 0.0
    %1868 = vmatprep.subr.mxu0 0.0
    %1869 = vmatpush1.msra.mxu0 0.0
    %1870 = vmatprep.subr.mxu0 0.0
    %1871 = vmatpush1.msra.mxu0 0.0
    %1872 = vmatprep.subr.mxu0 0.0
    %1873 = vmatpush1.msra.mxu0 0.0
    %1874 = vmatprep.subr.mxu0 0.0
    %1875 = vmatpush1.msra.mxu0 0.0
    %1876 = vmatprep.subr.mxu0 0.0
    %1877 = vmatpush1.msra.mxu0 0.0
    %1878 = vmatprep.subr.mxu0 0.0
    %1879 = vmatpush1.msra.mxu0 0.0
    %1880 = vmatprep.subr.mxu0 0.0
    %1881 = vmatpush1.msra.mxu0 0.0
    %1882 = vmatprep.subr.mxu0 0.0
    %1883 = vmatpush1.msra.mxu0 0.0
    %1884 = vmatprep.subr.mxu0 0.0
    %1885 = vmatpush1.msra.mxu0 0.0
    %1886 = vmatprep.subr.mxu0 0.0
    %1887 = vmatpush1.msra.mxu0 0.0
    %1888 = vmatprep.subr.mxu0 0.0
    %1889 = vmatpush1.msra.mxu0 0.0
    %1890 = vmatprep.subr.mxu0 0.0
    %1891 = vmatpush1.msra.mxu0 0.0
    %1892 = vmatprep.subr.mxu0 0.0
    %1893 = vmatpush1.msra.mxu0 0.0
    %1894 = vmatprep.subr.mxu0 0.0
    %1895 = vmatpush1.msra.mxu0 0.0
    %1896 = vmatprep.subr.mxu0 0.0
    %1897 = vmatpush1.msra.mxu0 0.0
    %1898 = vmatprep.subr.mxu0 0.0
    %1899 = vmatpush1.msra.mxu0 0.0
    %1900 = vmatprep.subr.mxu0 0.0
    %1901 = vmatpush1.msra.mxu0 0.0
    %1902 = vmatprep.subr.mxu0 0.0
    %1903 = vmatpush1.msra.mxu0 0.0
    %1904 = vmatprep.subr.mxu0 0.0
    %1905 = vmatpush1.msra.mxu0 0.0
    %1906 = vmatprep.subr.mxu0 0.0
    %1907 = vmatpush1.msra.mxu0 0.0
    %1908 = vmatprep.subr.mxu0 0.0
    %1909 = vmatpush1.msra.mxu0 0.0
    %1910 = vmatprep.subr.mxu0 0.0
    %1911 = vmatpush1.msra.mxu0 0.0
    %1912 = vmatprep.subr.mxu0 0.0
    %1913 = vmatpush1.msra.mxu0 0.0
    %1914 = vmatprep.subr.mxu0 0.0
    %1915 = vmatpush1.msra.mxu0 0.0
    %1916 = vmatprep.subr.mxu0 0.0
    %1917 = vmatpush1.msra.mxu0 0.0
    %1918 = vmatprep.subr.mxu0 0.0
    %1919 = vmatpush1.msra.mxu0 0.0
    %1920 = vmatprep.mubr.f32.mxu0 0.0
    %1921 = vmatmul.mubr.f32.gmra.mrb[0].mxu0 %v1842
    %v1922 = vpop.f32.mrb[0].mxu0
    %v1923 = vadd.f32 %v1840, %v1922
    %v1924 = vpop.f32.mrb[0].mxu0
    %1925 = vmatprep.mubr.f32.mxu0 0.0
    %1926 = vmatmul.mubr.f32.gmra.mrb[0].mxu0 %v1845
    %v1927 = vpop.f32.mrb[0].mxu0
    %v1928 = vadd.f32 %v1840, %v1927
    %v1929 = vpop.f32.mrb[0].mxu0
    %1930 = vmatprep.mubr.f32.mxu0 0.0
    %1931 = vmatmul.mubr.f32.gmra.mrb[0].mxu0 %v1848
    %v1932 = vpop.f32.mrb[0].mxu0
    %v1933 = vadd.f32 %v1840, %v1932
    %v1934 = vpop.f32.mrb[0].mxu0
    %1935 = vmatprep.mubr.f32.mxu0 0.0
    %1936 = vmatmul.mubr.f32.gmra.mrb[0].mxu0 %v1851
    %v1937 = vpop.f32.mrb[0].mxu0
    %v1938 = vadd.f32 %v1840, %v1937
    %v1939 = vpop.f32.mrb[0].mxu0
    %1940 = vmatprep.mubr.f32.mxu0 0.0
    %1941 = vmatmul.mubr.f32.gmra.mrb[0].mxu0 %v1854
    %v1942 = vpop.f32.mrb[0].mxu0
    %v1943 = vadd.f32 %v1840, %v1942
    %v1944 = vpop.f32.mrb[0].mxu0
    %1945 = vdwg.mxu0
    %v1946 = vmax.f32 %v1923, 0.0
    %v1947 = vmax.f32 %v1928, 0.0
    %v1948 = vmax.f32 %v1933, 0.0
    %v1949 = vmax.f32 %v1938, 0.0
    %v1950 = vmax.f32 %v1943, 0.0
    %v1951 = vlaneseq
    %v1952 = vshrl.u32 %v1951, 7
    %v1953 = vsub.s32 2, %v1952
    %v1954 = vrot.slane %v201, %v1953
    %1955 = vmatprep.subr.mxu0 0.0
    %1956 = vmatpush1.msra.mxu0 %v185
    %1957 = vmatprep.subr.mxu0 0.0
    %1958 = vmatpush1.msra.mxu0 %v186
    %1959 = vmatprep.subr.mxu0 0.0
    %1960 = vmatpush1.msra.mxu0 %v187
    %1961 = vmatprep.subr.mxu0 0.0
    %1962 = vmatpush1.msra.mxu0 %v188
    %1963 = vmatprep.subr.mxu0 0.0
    %1964 = vmatpush1.msra.mxu0 %v189
    %1965 = vmatprep.subr.mxu0 0.0
    %1966 = vmatpush1.msra.mxu0 %v190
    %1967 = vmatprep.subr.mxu0 0.0
    %1968 = vmatpush1.msra.mxu0 %v191
    %1969 = vmatprep.subr.mxu0 0.0
    %1970 = vmatpush1.msra.mxu0 %v192
    %1971 = vmatprep.subr.mxu0 0.0
    %1972 = vmatpush1.msra.mxu0 %v193
    %1973 = vmatprep.subr.mxu0 0.0
    %1974 = vmatpush1.msra.mxu0 %v194
    %1975 = vmatprep.subr.mxu0 0.0
    %1976 = vmatpush1.msra.mxu0 %v195
    %1977 = vmatprep.subr.mxu0 0.0
    %1978 = vmatpush1.msra.mxu0 %v196
    %1979 = vmatprep.subr.mxu0 0.0
    %1980 = vmatpush1.msra.mxu0 %v197
    %1981 = vmatprep.subr.mxu0 0.0
    %1982 = vmatpush1.msra.mxu0 %v198
    %1983 = vmatprep.subr.mxu0 0.0
    %1984 = vmatpush1.msra.mxu0 %v199
    %1985 = vmatprep.subr.mxu0 0.0
    %1986 = vmatpush1.msra.mxu0 %v200
    %1987 = vmatprep.subr.mxu0 0.0
    %1988 = vmatpush1.msra.mxu0 0.0
    %1989 = vmatprep.subr.mxu0 0.0
    %1990 = vmatpush1.msra.mxu0 0.0
    %1991 = vmatprep.subr.mxu0 0.0
    %1992 = vmatpush1.msra.mxu0 0.0
    %1993 = vmatprep.subr.mxu0 0.0
    %1994 = vmatpush1.msra.mxu0 0.0
    %1995 = vmatprep.subr.mxu0 0.0
    %1996 = vmatpush1.msra.mxu0 0.0
    %1997 = vmatprep.subr.mxu0 0.0
    %1998 = vmatpush1.msra.mxu0 0.0
    %1999 = vmatprep.subr.mxu0 0.0
    %2000 = vmatpush1.msra.mxu0 0.0
    %2001 = vmatprep.subr.mxu0 0.0
    %2002 = vmatpush1.msra.mxu0 0.0
    %2003 = vmatprep.subr.mxu0 0.0
    %2004 = vmatpush1.msra.mxu0 0.0
    %2005 = vmatprep.subr.mxu0 0.0
    %2006 = vmatpush1.msra.mxu0 0.0
    %2007 = vmatprep.subr.mxu0 0.0
    %2008 = vmatpush1.msra.mxu0 0.0
    %2009 = vmatprep.subr.mxu0 0.0
    %2010 = vmatpush1.msra.mxu0 0.0
    %2011 = vmatprep.subr.mxu0 0.0
    %2012 = vmatpush1.msra.mxu0 0.0
    %2013 = vmatprep.subr.mxu0 0.0
    %2014 = vmatpush1.msra.mxu0 0.0
    %2015 = vmatprep.subr.mxu0 0.0
    %2016 = vmatpush1.msra.mxu0 0.0
    %2017 = vmatprep.subr.mxu0 0.0
    %2018 = vmatpush1.msra.mxu0 0.0
    %2019 = vmatprep.mubr.f32.mxu0 0.0
    %2020 = vmatmul.mubr.f32.gmra.mrb[0].mxu0 %v1946
    %v2021 = vpop.f32.mrb[0].mxu0
    %v2022 = vadd.f32 %v1954, %v2021
    %v2023 = vpop.f32.mrb[0].mxu0
    %2024 = vmatprep.mubr.f32.mxu0 0.0
    %2025 = vmatmul.mubr.f32.gmra.mrb[0].mxu0 %v1947
    %v2026 = vpop.f32.mrb[0].mxu0
    %v2027 = vadd.f32 %v1954, %v2026
    %v2028 = vpop.f32.mrb[0].mxu0
    %2029 = vmatprep.mubr.f32.mxu0 0.0
    %2030 = vmatmul.mubr.f32.gmra.mrb[0].mxu0 %v1948
    %v2031 = vpop.f32.mrb[0].mxu0
    %v2032 = vadd.f32 %v1954, %v2031
    %v2033 = vpop.f32.mrb[0].mxu0
    %2034 = vmatprep.mubr.f32.mxu0 0.0
    %2035 = vmatmul.mubr.f32.gmra.mrb[0].mxu0 %v1949
    %v2036 = vpop.f32.mrb[0].mxu0
    %v2037 = vadd.f32 %v1954, %v2036
    %v2038 = vpop.f32.mrb[0].mxu0
    %2039 = vmatprep.mubr.f32.mxu0 0.0
    %2040 = vmatmul.mubr.f32.gmra.mrb[0].mxu0 %v1950
    %v2041 = vpop.f32.mrb[0].mxu0
    %v2042 = vadd.f32 %v1954, %v2041
    %v2043 = vpop.f32.mrb[0].mxu0
    %2044 = vdwg.mxu0
    %v2045 = vadd.f32 %v1832, %v2022
    %v2046 = vadd.f32 %v1833, %v2027
    %v2047 = vadd.f32 %v1834, %v2032
    %v2048 = vadd.f32 %v1835, %v2037
    %v2049 = vadd.f32 %v1836, %v2042
    %v2050 = vsel %vm206, %v2045, 0.0
    %2051 = vadd.xlane.f32.xlu0 %v2050
    %v2052 = vpop.xlane.xlu0 %2051
    %v2053 = vsel %vm206, %v2046, 0.0
    %2054 = vadd.xlane.f32.xlu0 %v2053
    %v2055 = vpop.xlane.xlu0 %2054
    %v2056 = vsel %vm206, %v2047, 0.0
    %2057 = vadd.xlane.f32.xlu0 %v2056
    %v2058 = vpop.xlane.xlu0 %2057
    %v2059 = vsel %vm206, %v2048, 0.0
    %2060 = vadd.xlane.f32.xlu0 %v2059
    %v2061 = vpop.xlane.xlu0 %2060
    %v2062 = vsel %vm1764, %v2049, 0.0
    %2063 = vadd.xlane.f32.xlu0 %v2062
    %v2064 = vpop.xlane.xlu0 %2063
    %v2065 = vmul.f32 %v2052, %v1768
    %v2066 = vmul.f32 %v2055, %v1768
    %v2067 = vmul.f32 %v2058, %v1768
    %v2068 = vmul.f32 %v2061, %v1768
    %v2069 = vmul.f32 %v2064, %v1768
    %v2070 = vsub.f32 %v2045, %v2065
    %v2071 = vsub.f32 %v2046, %v2066
    %v2072 = vsub.f32 %v2047, %v2067
    %v2073 = vsub.f32 %v2048, %v2068
    %v2074 = vsub.f32 %v2049, %v2069
    %v2075 = vmul.f32 %v2070, %v2070
    %v2076 = vmul.f32 %v2071, %v2071
    %v2077 = vmul.f32 %v2072, %v2072
    %v2078 = vmul.f32 %v2073, %v2073
    %v2079 = vmul.f32 %v2074, %v2074
    %v2080 = vsel %vm206, %v2075, 0.0
    %2081 = vadd.xlane.f32.xlu0 %v2080
    %v2082 = vpop.xlane.xlu0 %2081
    %v2083 = vsel %vm206, %v2076, 0.0
    %2084 = vadd.xlane.f32.xlu0 %v2083
    %v2085 = vpop.xlane.xlu0 %2084
    %v2086 = vsel %vm206, %v2077, 0.0
    %2087 = vadd.xlane.f32.xlu0 %v2086
    %v2088 = vpop.xlane.xlu0 %2087
    %v2089 = vsel %vm206, %v2078, 0.0
    %2090 = vadd.xlane.f32.xlu0 %v2089
    %v2091 = vpop.xlane.xlu0 %2090
    %v2092 = vsel %vm1764, %v2079, 0.0
    %2093 = vadd.xlane.f32.xlu0 %v2092
    %v2094 = vpop.xlane.xlu0 %2093
    %v2095 = vmul.f32 %v2082, %v1768
    %v2096 = vmul.f32 %v2085, %v1768
    %v2097 = vmul.f32 %v2088, %v1768
    %v2098 = vmul.f32 %v2091, %v1768
    %v2099 = vmul.f32 %v2094, %v1768
    %v2100 = vadd.f32 %v2095, 1e-05
    %v2101 = vadd.f32 %v2096, 1e-05
    %v2102 = vadd.f32 %v2097, 1e-05
    %v2103 = vadd.f32 %v2098, 1e-05
    %v2104 = vadd.f32 %v2099, 1e-05
    %v2105 = vrsqrt.pop %v2100
    %v2106 = vrsqrt.pop %v2101
    %v2107 = vrsqrt.pop %v2102
    %v2108 = vrsqrt.pop %v2103
    %v2109 = vrsqrt.pop %v2104
    %v2110 = vmul.f32 %v2070, %v2105
    %v2111 = vmul.f32 %v2071, %v2106
    %v2112 = vmul.f32 %v2072, %v2107
    %v2113 = vmul.f32 %v2073, %v2108
    %v2114 = vmul.f32 %v2074, %v2109
    %v2115 = vlaneseq
    %v2116 = vshrl.u32 %v2115, 7
    %v2117 = vsub.s32 3, %v2116
    %v2118 = vrot.slane %v201, %v2117
    %v2119 = vmul.f32 %v2110, %v2118
    %v2120 = vmul.f32 %v2111, %v2118
    %v2121 = vmul.f32 %v2112, %v2118
    %v2122 = vmul.f32 %v2113, %v2118
    %v2123 = vmul.f32 %v2114, %v2118
    %v2124 = vlaneseq
    %v2125 = vshrl.u32 %v2124, 7
    %v2126 = vsub.s32 4, %v2125
    %v2127 = vrot.slane %v201, %v2126
    %v2128 = vadd.f32 %v2119, %v2127
    %v2129 = vadd.f32 %v2120, %v2127
    %v2130 = vadd.f32 %v2121, %v2127
    %v2131 = vadd.f32 %v2122, %v2127
    %v2132 = vadd.f32 %v2123, %v2127
    %s2133 = scalar_lea.vmem %s4, 32
    %v2134 = vld [vmem:[%s2133] sm:$0xff]
    %v2135 = vld [vmem:[%s2133 + $0x8] sm:$0xff]
    %v2136 = vld [vmem:[%s2133 + $0x10] sm:$0xff]
    %v2137 = vld [vmem:[%s2133 + $0x18] sm:$0xff]
    %s2138 = scalar_lea.vmem %s5, 2
    %v2139 = vld [vmem:[%s2138] sm:$0x3]
    %s2140 = scalar_lea.vmem %s6, 32
    %v2141 = vld [vmem:[%s2140] sm:$0xff]
    %v2142 = vld [vmem:[%s2140 + $0x8] sm:$0xff]
    %v2143 = vld [vmem:[%s2140 + $0x10] sm:$0xff]
    %v2144 = vld [vmem:[%s2140 + $0x18] sm:$0xff]
    %s2145 = scalar_lea.vmem %s7, 128
    %v2146 = vld [vmem:[%s2145] sm:$0xff]
    %v2147 = vld [vmem:[%s2145 + $0x8] sm:$0xff]
    %v2148 = vld [vmem:[%s2145 + $0x10] sm:$0xff]
    %v2149 = vld [vmem:[%s2145 + $0x18] sm:$0xff]
    %v2150 = vld [vmem:[%s2145 + $0x20] sm:$0xff]
    %v2151 = vld [vmem:[%s2145 + $0x28] sm:$0xff]
    %v2152 = vld [vmem:[%s2145 + $0x30] sm:$0xff]
    %v2153 = vld [vmem:[%s2145 + $0x38] sm:$0xff]
    %v2154 = vld [vmem:[%s2145 + $0x40] sm:$0xff]
    %v2155 = vld [vmem:[%s2145 + $0x48] sm:$0xff]
    %v2156 = vld [vmem:[%s2145 + $0x50] sm:$0xff]
    %v2157 = vld [vmem:[%s2145 + $0x58] sm:$0xff]
    %v2158 = vld [vmem:[%s2145 + $0x60] sm:$0xff]
    %v2159 = vld [vmem:[%s2145 + $0x68] sm:$0xff]
    %v2160 = vld [vmem:[%s2145 + $0x70] sm:$0xff]
    %v2161 = vld [vmem:[%s2145 + $0x78] sm:$0xff]
    %s2162 = scalar_lea.vmem %s8, 8
    %v2163 = vld [vmem:[%s2162] sm:$0x1f]
    %v2164 = vlaneseq
    %v2165 = vshrl.u32 %v2164, 7
    %v2166 = vsub.s32 0, %v2165
    %v2167 = vrot.slane %v2139, %v2166
    %v2169 = vsel %vm206, %v2128, 0
    %v2172 = vsel %vm206, %v2129, 0
    %v2175 = vsel %vm206, %v2130, 0
    %v2178 = vsel %vm206, %v2131, 0
    %v2181 = vsel %vm206, %v2132, 0
    %2183 = vmatprep.subr.mxu0 0.0
    %2184 = vmatpush1.msra.mxu0 %v2134
    %2185 = vmatprep.subr.mxu0 0.0
    %2186 = vmatpush1.msra.mxu0 %v2135
    %2187 = vmatprep.subr.mxu0 0.0
    %2188 = vmatpush1.msra.mxu0 %v2136
    %2189 = vmatprep.subr.mxu0 0.0
    %2190 = vmatpush1.msra.mxu0 %v2137
    %2191 = vmatprep.subr.mxu0 0.0
    %2192 = vmatpush1.msra.mxu0 0.0
    %2193 = vmatprep.subr.mxu0 0.0
    %2194 = vmatpush1.msra.mxu0 0.0
    %2195 = vmatprep.subr.mxu0 0.0
    %2196 = vmatpush1.msra.mxu0 0.0
    %2197 = vmatprep.subr.mxu0 0.0
    %2198 = vmatpush1.msra.mxu0 0.0
    %2199 = vmatprep.subr.mxu0 0.0
    %2200 = vmatpush1.msra.mxu0 0.0
    %2201 = vmatprep.subr.mxu0 0.0
    %2202 = vmatpush1.msra.mxu0 0.0
    %2203 = vmatprep.subr.mxu0 0.0
    %2204 = vmatpush1.msra.mxu0 0.0
    %2205 = vmatprep.subr.mxu0 0.0
    %2206 = vmatpush1.msra.mxu0 0.0
    %2207 = vmatprep.subr.mxu0 0.0
    %2208 = vmatpush1.msra.mxu0 0.0
    %2209 = vmatprep.subr.mxu0 0.0
    %2210 = vmatpush1.msra.mxu0 0.0
    %2211 = vmatprep.subr.mxu0 0.0
    %2212 = vmatpush1.msra.mxu0 0.0
    %2213 = vmatprep.subr.mxu0 0.0
    %2214 = vmatpush1.msra.mxu0 0.0
    %2215 = vmatprep.subr.mxu0 0.0
    %2216 = vmatpush1.msra.mxu0 0.0
    %2217 = vmatprep.subr.mxu0 0.0
    %2218 = vmatpush1.msra.mxu0 0.0
    %2219 = vmatprep.subr.mxu0 0.0
    %2220 = vmatpush1.msra.mxu0 0.0
    %2221 = vmatprep.subr.mxu0 0.0
    %2222 = vmatpush1.msra.mxu0 0.0
    %2223 = vmatprep.subr.mxu0 0.0
    %2224 = vmatpush1.msra.mxu0 0.0
    %2225 = vmatprep.subr.mxu0 0.0
    %2226 = vmatpush1.msra.mxu0 0.0
    %2227 = vmatprep.subr.mxu0 0.0
    %2228 = vmatpush1.msra.mxu0 0.0
    %2229 = vmatprep.subr.mxu0 0.0
    %2230 = vmatpush1.msra.mxu0 0.0
    %2231 = vmatprep.subr.mxu0 0.0
    %2232 = vmatpush1.msra.mxu0 0.0
    %2233 = vmatprep.subr.mxu0 0.0
    %2234 = vmatpush1.msra.mxu0 0.0
    %2235 = vmatprep.subr.mxu0 0.0
    %2236 = vmatpush1.msra.mxu0 0.0
    %2237 = vmatprep.subr.mxu0 0.0
    %2238 = vmatpush1.msra.mxu0 0.0
    %2239 = vmatprep.subr.mxu0 0.0
    %2240 = vmatpush1.msra.mxu0 0.0
    %2241 = vmatprep.subr.mxu0 0.0
    %2242 = vmatpush1.msra.mxu0 0.0
    %2243 = vmatprep.subr.mxu0 0.0
    %2244 = vmatpush1.msra.mxu0 0.0
    %2245 = vmatprep.subr.mxu0 0.0
    %2246 = vmatpush1.msra.mxu0 0.0
    %2247 = vmatprep.mubr.f32.mxu0 0.0
    %2248 = vmatmul.mubr.f32.gmra.mrb[0].mxu0 %v2169
    %v2249 = vpop.f32.mrb[0].mxu0
    %v2250 = vadd.f32 %v2167, %v2249
    %v2251 = vpop.f32.mrb[0].mxu0
    %2252 = vmatprep.mubr.f32.mxu0 0.0
    %2253 = vmatmul.mubr.f32.gmra.mrb[0].mxu0 %v2172
    %v2254 = vpop.f32.mrb[0].mxu0
    %v2255 = vadd.f32 %v2167, %v2254
    %v2256 = vpop.f32.mrb[0].mxu0
    %2257 = vmatprep.mubr.f32.mxu0 0.0
    %2258 = vmatmul.mubr.f32.gmra.mrb[0].mxu0 %v2175
    %v2259 = vpop.f32.mrb[0].mxu0
    %v2260 = vadd.f32 %v2167, %v2259
    %v2261 = vpop.f32.mrb[0].mxu0
    %2262 = vmatprep.mubr.f32.mxu0 0.0
    %2263 = vmatmul.mubr.f32.gmra.mrb[0].mxu0 %v2178
    %v2264 = vpop.f32.mrb[0].mxu0
    %v2265 = vadd.f32 %v2167, %v2264
    %v2266 = vpop.f32.mrb[0].mxu0
    %2267 = vmatprep.mubr.f32.mxu0 0.0
    %2268 = vmatmul.mubr.f32.gmra.mrb[0].mxu0 %v2181
    %v2269 = vpop.f32.mrb[0].mxu0
    %v2270 = vadd.f32 %v2167, %v2269
    %v2271 = vpop.f32.mrb[0].mxu0
    %2272 = vdwg.mxu0
    %v2273 = vmul.f32 %v2250, 0.35355338
    %v2274 = vmul.f32 %v2255, 0.35355338
    %v2275 = vmul.f32 %v2260, 0.35355338
    %v2276 = vmul.f32 %v2265, 0.35355338
    %v2277 = vmul.f32 %v2270, 0.35355338
    %2283 = vrot.lane.b32.xlu0 %v2250, 96
    %v2284 = vpop.permute.xlu0 %2283
    %2285 = vrot.lane.b32.xlu0 %v2255, 96
    %v2286 = vpop.permute.xlu0 %2285
    %2287 = vrot.lane.b32.xlu0 %v2260, 96
    %v2288 = vpop.permute.xlu0 %2287
    %2289 = vrot.lane.b32.xlu0 %v2265, 96
    %v2290 = vpop.permute.xlu0 %2289
    %2291 = vrot.lane.b32.xlu0 %v2270, 96
    %v2292 = vpop.permute.xlu0 %2291
    %v2294 = vsel %vm332, %v2273, 0
    %v2297 = vsel %vm332, %v2274, 0
    %v2300 = vsel %vm332, %v2275, 0
    %v2303 = vsel %vm332, %v2276, 0
    %v2306 = vsel %vm332, %v2277, 0
    %v2308 = vsel %vm332, %v2284, 0
    %v2310 = vsel %vm332, %v2286, 0
    %v2312 = vsel %vm332, %v2288, 0
    %v2314 = vsel %vm332, %v2290, 0
    %v2316 = vsel %vm332, %v2292, 0
    %2318 = vmatprep.subr.mxu0 0.0
    %2319 = vmatpush1.xpose.msra.mxu0 %v2308
    %2320 = vmatprep.subr.mxu0 0.0
    %2321 = vmatpush1.xpose.msra.mxu0 %v2310
    %2322 = vmatprep.subr.mxu0 0.0
    %2323 = vmatpush1.xpose.msra.mxu0 %v2312
    %2324 = vmatprep.subr.mxu0 0.0
    %2325 = vmatpush1.xpose.msra.mxu0 %v2314
    %2326 = vmatprep.subr.mxu0 0.0
    %2327 = vmatpush1.xpose.msra.mxu0 %v2316
    %2328 = vmatprep.subr.mxu0 0.0
    %2329 = vmatpush1.xpose.msra.mxu0 0.0
    %2330 = vmatprep.subr.mxu0 0.0
    %2331 = vmatpush1.xpose.msra.mxu0 0.0
    %2332 = vmatprep.subr.mxu0 0.0
    %2333 = vmatpush1.xpose.msra.mxu0 0.0
    %2334 = vmatprep.subr.mxu0 0.0
    %2335 = vmatpush1.xpose.msra.mxu0 0.0
    %2336 = vmatprep.subr.mxu0 0.0
    %2337 = vmatpush1.xpose.msra.mxu0 0.0
    %2338 = vmatprep.subr.mxu0 0.0
    %2339 = vmatpush1.xpose.msra.mxu0 0.0
    %2340 = vmatprep.subr.mxu0 0.0
    %2341 = vmatpush1.xpose.msra.mxu0 0.0
    %2342 = vmatprep.subr.mxu0 0.0
    %2343 = vmatpush1.xpose.msra.mxu0 0.0
    %2344 = vmatprep.subr.mxu0 0.0
    %2345 = vmatpush1.xpose.msra.mxu0 0.0
    %2346 = vmatprep.subr.mxu0 0.0
    %2347 = vmatpush1.xpose.msra.mxu0 0.0
    %2348 = vmatprep.subr.mxu0 0.0
    %2349 = vmatpush1.xpose.msra.mxu0 0.0
    %2350 = vmatprep.subr.mxu0 0.0
    %2351 = vmatpush1.xpose.msra.mxu0 0.0
    %2352 = vmatprep.subr.mxu0 0.0
    %2353 = vmatpush1.xpose.msra.mxu0 0.0
    %2354 = vmatprep.subr.mxu0 0.0
    %2355 = vmatpush1.xpose.msra.mxu0 0.0
    %2356 = vmatprep.subr.mxu0 0.0
    %2357 = vmatpush1.xpose.msra.mxu0 0.0
    %2358 = vmatprep.subr.mxu0 0.0
    %2359 = vmatpush1.xpose.msra.mxu0 0.0
    %2360 = vmatprep.subr.mxu0 0.0
    %2361 = vmatpush1.xpose.msra.mxu0 0.0
    %2362 = vmatprep.subr.mxu0 0.0
    %2363 = vmatpush1.xpose.msra.mxu0 0.0
    %2364 = vmatprep.subr.mxu0 0.0
    %2365 = vmatpush1.xpose.msra.mxu0 0.0
    %2366 = vmatprep.subr.mxu0 0.0
    %2367 = vmatpush1.xpose.msra.mxu0 0.0
    %2368 = vmatprep.subr.mxu0 0.0
    %2369 = vmatpush1.xpose.msra.mxu0 0.0
    %2370 = vmatprep.subr.mxu0 0.0
    %2371 = vmatpush1.xpose.msra.mxu0 0.0
    %2372 = vmatprep.subr.mxu0 0.0
    %2373 = vmatpush1.xpose.msra.mxu0 0.0
    %2374 = vmatprep.subr.mxu0 0.0
    %2375 = vmatpush1.xpose.msra.mxu0 0.0
    %2376 = vmatprep.subr.mxu0 0.0
    %2377 = vmatpush1.xpose.msra.mxu0 0.0
    %2378 = vmatprep.subr.mxu0 0.0
    %2379 = vmatpush1.xpose.msra.mxu0 0.0
    %2380 = vmatprep.subr.mxu0 0.0
    %2381 = vmatpush1.xpose.msra.mxu0 0.0
    %2382 = vmatprep.mubr.f32.mxu0 0.0
    %2383 = vmatmul.mubr.f32.gmra.mrb[0].mxu0 %v2294
    %v2384 = vpop.f32.mrb[0].mxu0
    %v2385 = vadd.f32 %v171, %v2384
    %v2386 = vpop.f32.mrb[0].mxu0
    %2387 = vmatprep.mubr.f32.mxu0 0.0
    %2388 = vmatmul.mubr.f32.gmra.mrb[0].mxu0 %v2297
    %v2389 = vpop.f32.mrb[0].mxu0
    %v2390 = vadd.f32 %v172, %v2389
    %v2391 = vpop.f32.mrb[0].mxu0
    %2392 = vmatprep.mubr.f32.mxu0 0.0
    %2393 = vmatmul.mubr.f32.gmra.mrb[0].mxu0 %v2300
    %v2394 = vpop.f32.mrb[0].mxu0
    %v2395 = vadd.f32 %v173, %v2394
    %v2396 = vpop.f32.mrb[0].mxu0
    %2397 = vmatprep.mubr.f32.mxu0 0.0
    %2398 = vmatmul.mubr.f32.gmra.mrb[0].mxu0 %v2303
    %v2399 = vpop.f32.mrb[0].mxu0
    %v2400 = vadd.f32 %v174, %v2399
    %v2401 = vpop.f32.mrb[0].mxu0
    %2402 = vmatprep.mubr.f32.mxu0 0.0
    %2403 = vmatmul.mubr.f32.gmra.mrb[0].mxu0 %v2306
    %v2404 = vpop.f32.mrb[0].mxu0
    %v2405 = vadd.f32 %v175, %v2404
    %v2406 = vpop.f32.mrb[0].mxu0
    %2407 = vdwg.mxu0
    %v2408 = vsel %vm448, %v2385, -inf
    %2409 = vmax.xlane.f32.xlu0 %v2408
    %v2410 = vpop.xlane.xlu0 %2409
    %v2411 = vsel %vm448, %v2390, -inf
    %2412 = vmax.xlane.f32.xlu0 %v2411
    %v2413 = vpop.xlane.xlu0 %2412
    %v2414 = vsel %vm448, %v2395, -inf
    %2415 = vmax.xlane.f32.xlu0 %v2414
    %v2416 = vpop.xlane.xlu0 %2415
    %v2417 = vsel %vm448, %v2400, -inf
    %2418 = vmax.xlane.f32.xlu0 %v2417
    %v2419 = vpop.xlane.xlu0 %2418
    %v2420 = vsel %vm461, %v2405, -inf
    %2421 = vmax.xlane.f32.xlu0 %v2420
    %v2422 = vpop.xlane.xlu0 %2421
    %v2423 = vsub.f32 %v2385, %v2410
    %v2424 = vsub.f32 %v2390, %v2413
    %v2425 = vsub.f32 %v2395, %v2416
    %v2426 = vsub.f32 %v2400, %v2419
    %v2427 = vsub.f32 %v2405, %v2422
    %v2428 = vmul.f32 %v2423, 1.442695
    %v2429 = vpow.pop %v2428
    %v2430 = vmul.f32 %v2424, 1.442695
    %v2431 = vpow.pop %v2430
    %v2432 = vmul.f32 %v2425, 1.442695
    %v2433 = vpow.pop %v2432
    %v2434 = vmul.f32 %v2426, 1.442695
    %v2435 = vpow.pop %v2434
    %v2436 = vmul.f32 %v2427, 1.442695
    %v2437 = vpow.pop %v2436
    %v2438 = vsel %vm448, %v2429, 0.0
    %2439 = vadd.xlane.f32.xlu0 %v2438
    %v2440 = vpop.xlane.xlu0 %2439
    %v2441 = vsel %vm448, %v2431, 0.0
    %2442 = vadd.xlane.f32.xlu0 %v2441
    %v2443 = vpop.xlane.xlu0 %2442
    %v2444 = vsel %vm448, %v2433, 0.0
    %2445 = vadd.xlane.f32.xlu0 %v2444
    %v2446 = vpop.xlane.xlu0 %2445
    %v2447 = vsel %vm448, %v2435, 0.0
    %2448 = vadd.xlane.f32.xlu0 %v2447
    %v2449 = vpop.xlane.xlu0 %2448
    %v2450 = vsel %vm461, %v2437, 0.0
    %2451 = vadd.xlane.f32.xlu0 %v2450
    %v2452 = vpop.xlane.xlu0 %2451
    %v2453 = vrcp.pop %v2440
    %v2454 = vrcp.pop %v2443
    %v2455 = vrcp.pop %v2446
    %v2456 = vrcp.pop %v2449
    %v2457 = vrcp.pop %v2452
    %v2458 = vmul.f32 %v2429, %v2453
    %v2459 = vmul.f32 %v2431, %v2454
    %v2460 = vmul.f32 %v2433, %v2455
    %v2461 = vmul.f32 %v2435, %v2456
    %v2462 = vmul.f32 %v2437, %v2457
    %2463 = vrot.lane.b32.xlu0 %v2250, 64
    %v2464 = vpop.permute.xlu0 %2463
    %2465 = vrot.lane.b32.xlu0 %v2255, 64
    %v2466 = vpop.permute.xlu0 %2465
    %2467 = vrot.lane.b32.xlu0 %v2260, 64
    %v2468 = vpop.permute.xlu0 %2467
    %2469 = vrot.lane.b32.xlu0 %v2265, 64
    %v2470 = vpop.permute.xlu0 %2469
    %2471 = vrot.lane.b32.xlu0 %v2270, 64
    %v2472 = vpop.permute.xlu0 %2471
    %v2478 = vsel %vm448, %v2458, 0
    %v2481 = vsel %vm448, %v2459, 0
    %v2484 = vsel %vm448, %v2460, 0
    %v2487 = vsel %vm448, %v2461, 0
    %v2490 = vsel %vm448, %v2462, 0
    %v2492 = vsel %vm534, %v2472, 0
    %2494 = vmatprep.subr.mxu0 0.0
    %2495 = vmatpush1.msra.mxu0 %v2464
    %2496 = vmatprep.subr.mxu0 0.0
    %2497 = vmatpush1.msra.mxu0 %v2466
    %2498 = vmatprep.subr.mxu0 0.0
    %2499 = vmatpush1.msra.mxu0 %v2468
    %2500 = vmatprep.subr.mxu0 0.0
    %2501 = vmatpush1.msra.mxu0 %v2470
    %2502 = vmatprep.subr.mxu0 0.0
    %2503 = vmatpush1.msra.mxu0 %v2492
    %2504 = vmatprep.subr.mxu0 0.0
    %2505 = vmatpush1.msra.mxu0 0.0
    %2506 = vmatprep.subr.mxu0 0.0
    %2507 = vmatpush1.msra.mxu0 0.0
    %2508 = vmatprep.subr.mxu0 0.0
    %2509 = vmatpush1.msra.mxu0 0.0
    %2510 = vmatprep.subr.mxu0 0.0
    %2511 = vmatpush1.msra.mxu0 0.0
    %2512 = vmatprep.subr.mxu0 0.0
    %2513 = vmatpush1.msra.mxu0 0.0
    %2514 = vmatprep.subr.mxu0 0.0
    %2515 = vmatpush1.msra.mxu0 0.0
    %2516 = vmatprep.subr.mxu0 0.0
    %2517 = vmatpush1.msra.mxu0 0.0
    %2518 = vmatprep.subr.mxu0 0.0
    %2519 = vmatpush1.msra.mxu0 0.0
    %2520 = vmatprep.subr.mxu0 0.0
    %2521 = vmatpush1.msra.mxu0 0.0
    %2522 = vmatprep.subr.mxu0 0.0
    %2523 = vmatpush1.msra.mxu0 0.0
    %2524 = vmatprep.subr.mxu0 0.0
    %2525 = vmatpush1.msra.mxu0 0.0
    %2526 = vmatprep.subr.mxu0 0.0
    %2527 = vmatpush1.msra.mxu0 0.0
    %2528 = vmatprep.subr.mxu0 0.0
    %2529 = vmatpush1.msra.mxu0 0.0
    %2530 = vmatprep.subr.mxu0 0.0
    %2531 = vmatpush1.msra.mxu0 0.0
    %2532 = vmatprep.subr.mxu0 0.0
    %2533 = vmatpush1.msra.mxu0 0.0
    %2534 = vmatprep.subr.mxu0 0.0
    %2535 = vmatpush1.msra.mxu0 0.0
    %2536 = vmatprep.subr.mxu0 0.0
    %2537 = vmatpush1.msra.mxu0 0.0
    %2538 = vmatprep.subr.mxu0 0.0
    %2539 = vmatpush1.msra.mxu0 0.0
    %2540 = vmatprep.subr.mxu0 0.0
    %2541 = vmatpush1.msra.mxu0 0.0
    %2542 = vmatprep.subr.mxu0 0.0
    %2543 = vmatpush1.msra.mxu0 0.0
    %2544 = vmatprep.subr.mxu0 0.0
    %2545 = vmatpush1.msra.mxu0 0.0
    %2546 = vmatprep.subr.mxu0 0.0
    %2547 = vmatpush1.msra.mxu0 0.0
    %2548 = vmatprep.subr.mxu0 0.0
    %2549 = vmatpush1.msra.mxu0 0.0
    %2550 = vmatprep.subr.mxu0 0.0
    %2551 = vmatpush1.msra.mxu0 0.0
    %2552 = vmatprep.subr.mxu0 0.0
    %2553 = vmatpush1.msra.mxu0 0.0
    %2554 = vmatprep.subr.mxu0 0.0
    %2555 = vmatpush1.msra.mxu0 0.0
    %2556 = vmatprep.subr.mxu0 0.0
    %2557 = vmatpush1.msra.mxu0 0.0
    %2558 = vmatprep.mubr.f32.mxu0 0.0
    %2559 = vmatmul.mubr.f32.gmra.mrb[0].mxu0 %v2478
    %v2560 = vpop.f32.mrb[0].mxu0
    %v2561 = vadd.f32 0.0, %v2560
    %v2562 = vpop.f32.mrb[0].mxu0
    %2563 = vmatprep.mubr.f32.mxu0 0.0
    %2564 = vmatmul.mubr.f32.gmra.mrb[0].mxu0 %v2481
    %v2565 = vpop.f32.mrb[0].mxu0
    %v2566 = vadd.f32 0.0, %v2565
    %v2567 = vpop.f32.mrb[0].mxu0
    %2568 = vmatprep.mubr.f32.mxu0 0.0
    %2569 = vmatmul.mubr.f32.gmra.mrb[0].mxu0 %v2484
    %v2570 = vpop.f32.mrb[0].mxu0
    %v2571 = vadd.f32 0.0, %v2570
    %v2572 = vpop.f32.mrb[0].mxu0
    %2573 = vmatprep.mubr.f32.mxu0 0.0
    %2574 = vmatmul.mubr.f32.gmra.mrb[0].mxu0 %v2487
    %v2575 = vpop.f32.mrb[0].mxu0
    %v2576 = vadd.f32 0.0, %v2575
    %v2577 = vpop.f32.mrb[0].mxu0
    %2578 = vmatprep.mubr.f32.mxu0 0.0
    %2579 = vmatmul.mubr.f32.gmra.mrb[0].mxu0 %v2490
    %v2580 = vpop.f32.mrb[0].mxu0
    %v2581 = vadd.f32 0.0, %v2580
    %v2582 = vpop.f32.mrb[0].mxu0
    %2583 = vdwg.mxu0
    %2584 = vrot.lane.b32.xlu0 %v2273, 120
    %v2585 = vpop.permute.xlu0 %2584
    %2586 = vrot.lane.b32.xlu0 %v2274, 120
    %v2587 = vpop.permute.xlu0 %2586
    %2588 = vrot.lane.b32.xlu0 %v2275, 120
    %v2589 = vpop.permute.xlu0 %2588
    %2590 = vrot.lane.b32.xlu0 %v2276, 120
    %v2591 = vpop.permute.xlu0 %2590
    %2592 = vrot.lane.b32.xlu0 %v2277, 120
    %v2593 = vpop.permute.xlu0 %2592
    %2594 = vrot.lane.b32.xlu0 %v2250, 88
    %v2595 = vpop.permute.xlu0 %2594
    %2596 = vrot.lane.b32.xlu0 %v2255, 88
    %v2597 = vpop.permute.xlu0 %2596
    %2598 = vrot.lane.b32.xlu0 %v2260, 88
    %v2599 = vpop.permute.xlu0 %2598
    %2600 = vrot.lane.b32.xlu0 %v2265, 88
    %v2601 = vpop.permute.xlu0 %2600
    %2602 = vrot.lane.b32.xlu0 %v2270, 88
    %v2603 = vpop.permute.xlu0 %2602
    %v2604 = vsel %vm332, %v2585, 0
    %v2606 = vsel %vm332, %v2587, 0
    %v2608 = vsel %vm332, %v2589, 0
    %v2610 = vsel %vm332, %v2591, 0
    %v2612 = vsel %vm332, %v2593, 0
    %v2614 = vsel %vm332, %v2595, 0
    %v2616 = vsel %vm332, %v2597, 0
    %v2618 = vsel %vm332, %v2599, 0
    %v2620 = vsel %vm332, %v2601, 0
    %v2622 = vsel %vm332, %v2603, 0
    %2624 = vmatprep.subr.mxu0 0.0
    %2625 = vmatpush1.xpose.msra.mxu0 %v2614
    %2626 = vmatprep.subr.mxu0 0.0
    %2627 = vmatpush1.xpose.msra.mxu0 %v2616
    %2628 = vmatprep.subr.mxu0 0.0
    %2629 = vmatpush1.xpose.msra.mxu0 %v2618
    %2630 = vmatprep.subr.mxu0 0.0
    %2631 = vmatpush1.xpose.msra.mxu0 %v2620
    %2632 = vmatprep.subr.mxu0 0.0
    %2633 = vmatpush1.xpose.msra.mxu0 %v2622
    %2634 = vmatprep.subr.mxu0 0.0
    %2635 = vmatpush1.xpose.msra.mxu0 0.0
    %2636 = vmatprep.subr.mxu0 0.0
    %2637 = vmatpush1.xpose.msra.mxu0 0.0
    %2638 = vmatprep.subr.mxu0 0.0
    %2639 = vmatpush1.xpose.msra.mxu0 0.0
    %2640 = vmatprep.subr.mxu0 0.0
    %2641 = vmatpush1.xpose.msra.mxu0 0.0
    %2642 = vmatprep.subr.mxu0 0.0
    %2643 = vmatpush1.xpose.msra.mxu0 0.0
    %2644 = vmatprep.subr.mxu0 0.0
    %2645 = vmatpush1.xpose.msra.mxu0 0.0
    %2646 = vmatprep.subr.mxu0 0.0
    %2647 = vmatpush1.xpose.msra.mxu0 0.0
    %2648 = vmatprep.subr.mxu0 0.0
    %2649 = vmatpush1.xpose.msra.mxu0 0.0
    %2650 = vmatprep.subr.mxu0 0.0
    %2651 = vmatpush1.xpose.msra.mxu0 0.0
    %2652 = vmatprep.subr.mxu0 0.0
    %2653 = vmatpush1.xpose.msra.mxu0 0.0
    %2654 = vmatprep.subr.mxu0 0.0
    %2655 = vmatpush1.xpose.msra.mxu0 0.0
    %2656 = vmatprep.subr.mxu0 0.0
    %2657 = vmatpush1.xpose.msra.mxu0 0.0
    %2658 = vmatprep.subr.mxu0 0.0
    %2659 = vmatpush1.xpose.msra.mxu0 0.0
    %2660 = vmatprep.subr.mxu0 0.0
    %2661 = vmatpush1.xpose.msra.mxu0 0.0
    %2662 = vmatprep.subr.mxu0 0.0
    %2663 = vmatpush1.xpose.msra.mxu0 0.0
    %2664 = vmatprep.subr.mxu0 0.0
    %2665 = vmatpush1.xpose.msra.mxu0 0.0
    %2666 = vmatprep.subr.mxu0 0.0
    %2667 = vmatpush1.xpose.msra.mxu0 0.0
    %2668 = vmatprep.subr.mxu0 0.0
    %2669 = vmatpush1.xpose.msra.mxu0 0.0
    %2670 = vmatprep.subr.mxu0 0.0
    %2671 = vmatpush1.xpose.msra.mxu0 0.0
    %2672 = vmatprep.subr.mxu0 0.0
    %2673 = vmatpush1.xpose.msra.mxu0 0.0
    %2674 = vmatprep.subr.mxu0 0.0
    %2675 = vmatpush1.xpose.msra.mxu0 0.0
    %2676 = vmatprep.subr.mxu0 0.0
    %2677 = vmatpush1.xpose.msra.mxu0 0.0
    %2678 = vmatprep.subr.mxu0 0.0
    %2679 = vmatpush1.xpose.msra.mxu0 0.0
    %2680 = vmatprep.subr.mxu0 0.0
    %2681 = vmatpush1.xpose.msra.mxu0 0.0
    %2682 = vmatprep.subr.mxu0 0.0
    %2683 = vmatpush1.xpose.msra.mxu0 0.0
    %2684 = vmatprep.subr.mxu0 0.0
    %2685 = vmatpush1.xpose.msra.mxu0 0.0
    %2686 = vmatprep.subr.mxu0 0.0
    %2687 = vmatpush1.xpose.msra.mxu0 0.0
    %2688 = vmatprep.mubr.f32.mxu0 0.0
    %2689 = vmatmul.mubr.f32.gmra.mrb[0].mxu0 %v2604
    %v2690 = vpop.f32.mrb[0].mxu0
    %v2691 = vadd.f32 %v171, %v2690
    %v2692 = vpop.f32.mrb[0].mxu0
    %2693 = vmatprep.mubr.f32.mxu0 0.0
    %2694 = vmatmul.mubr.f32.gmra.mrb[0].mxu0 %v2606
    %v2695 = vpop.f32.mrb[0].mxu0
    %v2696 = vadd.f32 %v172, %v2695
    %v2697 = vpop.f32.mrb[0].mxu0
    %2698 = vmatprep.mubr.f32.mxu0 0.0
    %2699 = vmatmul.mubr.f32.gmra.mrb[0].mxu0 %v2608
    %v2700 = vpop.f32.mrb[0].mxu0
    %v2701 = vadd.f32 %v173, %v2700
    %v2702 = vpop.f32.mrb[0].mxu0
    %2703 = vmatprep.mubr.f32.mxu0 0.0
    %2704 = vmatmul.mubr.f32.gmra.mrb[0].mxu0 %v2610
    %v2705 = vpop.f32.mrb[0].mxu0
    %v2706 = vadd.f32 %v174, %v2705
    %v2707 = vpop.f32.mrb[0].mxu0
    %2708 = vmatprep.mubr.f32.mxu0 0.0
    %2709 = vmatmul.mubr.f32.gmra.mrb[0].mxu0 %v2612
    %v2710 = vpop.f32.mrb[0].mxu0
    %v2711 = vadd.f32 %v175, %v2710
    %v2712 = vpop.f32.mrb[0].mxu0
    %2713 = vdwg.mxu0
    %v2714 = vsel %vm448, %v2691, -inf
    %2715 = vmax.xlane.f32.xlu0 %v2714
    %v2716 = vpop.xlane.xlu0 %2715
    %v2717 = vsel %vm448, %v2696, -inf
    %2718 = vmax.xlane.f32.xlu0 %v2717
    %v2719 = vpop.xlane.xlu0 %2718
    %v2720 = vsel %vm448, %v2701, -inf
    %2721 = vmax.xlane.f32.xlu0 %v2720
    %v2722 = vpop.xlane.xlu0 %2721
    %v2723 = vsel %vm448, %v2706, -inf
    %2724 = vmax.xlane.f32.xlu0 %v2723
    %v2725 = vpop.xlane.xlu0 %2724
    %v2726 = vsel %vm461, %v2711, -inf
    %2727 = vmax.xlane.f32.xlu0 %v2726
    %v2728 = vpop.xlane.xlu0 %2727
    %v2729 = vsub.f32 %v2691, %v2716
    %v2730 = vsub.f32 %v2696, %v2719
    %v2731 = vsub.f32 %v2701, %v2722
    %v2732 = vsub.f32 %v2706, %v2725
    %v2733 = vsub.f32 %v2711, %v2728
    %v2734 = vmul.f32 %v2729, 1.442695
    %v2735 = vpow.pop %v2734
    %v2736 = vmul.f32 %v2730, 1.442695
    %v2737 = vpow.pop %v2736
    %v2738 = vmul.f32 %v2731, 1.442695
    %v2739 = vpow.pop %v2738
    %v2740 = vmul.f32 %v2732, 1.442695
    %v2741 = vpow.pop %v2740
    %v2742 = vmul.f32 %v2733, 1.442695
    %v2743 = vpow.pop %v2742
    %v2744 = vsel %vm448, %v2735, 0.0
    %2745 = vadd.xlane.f32.xlu0 %v2744
    %v2746 = vpop.xlane.xlu0 %2745
    %v2747 = vsel %vm448, %v2737, 0.0
    %2748 = vadd.xlane.f32.xlu0 %v2747
    %v2749 = vpop.xlane.xlu0 %2748
    %v2750 = vsel %vm448, %v2739, 0.0
    %2751 = vadd.xlane.f32.xlu0 %v2750
    %v2752 = vpop.xlane.xlu0 %2751
    %v2753 = vsel %vm448, %v2741, 0.0
    %2754 = vadd.xlane.f32.xlu0 %v2753
    %v2755 = vpop.xlane.xlu0 %2754
    %v2756 = vsel %vm461, %v2743, 0.0
    %2757 = vadd.xlane.f32.xlu0 %v2756
    %v2758 = vpop.xlane.xlu0 %2757
    %v2759 = vrcp.pop %v2746
    %v2760 = vrcp.pop %v2749
    %v2761 = vrcp.pop %v2752
    %v2762 = vrcp.pop %v2755
    %v2763 = vrcp.pop %v2758
    %v2764 = vmul.f32 %v2735, %v2759
    %v2765 = vmul.f32 %v2737, %v2760
    %v2766 = vmul.f32 %v2739, %v2761
    %v2767 = vmul.f32 %v2741, %v2762
    %v2768 = vmul.f32 %v2743, %v2763
    %2769 = vrot.lane.b32.xlu0 %v2250, 56
    %v2770 = vpop.permute.xlu0 %2769
    %2771 = vrot.lane.b32.xlu0 %v2255, 56
    %v2772 = vpop.permute.xlu0 %2771
    %2773 = vrot.lane.b32.xlu0 %v2260, 56
    %v2774 = vpop.permute.xlu0 %2773
    %2775 = vrot.lane.b32.xlu0 %v2265, 56
    %v2776 = vpop.permute.xlu0 %2775
    %2777 = vrot.lane.b32.xlu0 %v2270, 56
    %v2778 = vpop.permute.xlu0 %2777
    %v2784 = vsel %vm448, %v2764, 0
    %v2787 = vsel %vm448, %v2765, 0
    %v2790 = vsel %vm448, %v2766, 0
    %v2793 = vsel %vm448, %v2767, 0
    %v2796 = vsel %vm448, %v2768, 0
    %v2798 = vsel %vm534, %v2778, 0
    %2800 = vmatprep.subr.mxu0 0.0
    %2801 = vmatpush1.msra.mxu0 %v2770
    %2802 = vmatprep.subr.mxu0 0.0
    %2803 = vmatpush1.msra.mxu0 %v2772
    %2804 = vmatprep.subr.mxu0 0.0
    %2805 = vmatpush1.msra.mxu0 %v2774
    %2806 = vmatprep.subr.mxu0 0.0
    %2807 = vmatpush1.msra.mxu0 %v2776
    %2808 = vmatprep.subr.mxu0 0.0
    %2809 = vmatpush1.msra.mxu0 %v2798
    %2810 = vmatprep.subr.mxu0 0.0
    %2811 = vmatpush1.msra.mxu0 0.0
    %2812 = vmatprep.subr.mxu0 0.0
    %2813 = vmatpush1.msra.mxu0 0.0
    %2814 = vmatprep.subr.mxu0 0.0
    %2815 = vmatpush1.msra.mxu0 0.0
    %2816 = vmatprep.subr.mxu0 0.0
    %2817 = vmatpush1.msra.mxu0 0.0
    %2818 = vmatprep.subr.mxu0 0.0
    %2819 = vmatpush1.msra.mxu0 0.0
    %2820 = vmatprep.subr.mxu0 0.0
    %2821 = vmatpush1.msra.mxu0 0.0
    %2822 = vmatprep.subr.mxu0 0.0
    %2823 = vmatpush1.msra.mxu0 0.0
    %2824 = vmatprep.subr.mxu0 0.0
    %2825 = vmatpush1.msra.mxu0 0.0
    %2826 = vmatprep.subr.mxu0 0.0
    %2827 = vmatpush1.msra.mxu0 0.0
    %2828 = vmatprep.subr.mxu0 0.0
    %2829 = vmatpush1.msra.mxu0 0.0
    %2830 = vmatprep.subr.mxu0 0.0
    %2831 = vmatpush1.msra.mxu0 0.0
    %2832 = vmatprep.subr.mxu0 0.0
    %2833 = vmatpush1.msra.mxu0 0.0
    %2834 = vmatprep.subr.mxu0 0.0
    %2835 = vmatpush1.msra.mxu0 0.0
    %2836 = vmatprep.subr.mxu0 0.0
    %2837 = vmatpush1.msra.mxu0 0.0
    %2838 = vmatprep.subr.mxu0 0.0
    %2839 = vmatpush1.msra.mxu0 0.0
    %2840 = vmatprep.subr.mxu0 0.0
    %2841 = vmatpush1.msra.mxu0 0.0
    %2842 = vmatprep.subr.mxu0 0.0
    %2843 = vmatpush1.msra.mxu0 0.0
    %2844 = vmatprep.subr.mxu0 0.0
    %2845 = vmatpush1.msra.mxu0 0.0
    %2846 = vmatprep.subr.mxu0 0.0
    %2847 = vmatpush1.msra.mxu0 0.0
    %2848 = vmatprep.subr.mxu0 0.0
    %2849 = vmatpush1.msra.mxu0 0.0
    %2850 = vmatprep.subr.mxu0 0.0
    %2851 = vmatpush1.msra.mxu0 0.0
    %2852 = vmatprep.subr.mxu0 0.0
    %2853 = vmatpush1.msra.mxu0 0.0
    %2854 = vmatprep.subr.mxu0 0.0
    %2855 = vmatpush1.msra.mxu0 0.0
    %2856 = vmatprep.subr.mxu0 0.0
    %2857 = vmatpush1.msra.mxu0 0.0
    %2858 = vmatprep.subr.mxu0 0.0
    %2859 = vmatpush1.msra.mxu0 0.0
    %2860 = vmatprep.subr.mxu0 0.0
    %2861 = vmatpush1.msra.mxu0 0.0
    %2862 = vmatprep.subr.mxu0 0.0
    %2863 = vmatpush1.msra.mxu0 0.0
    %2864 = vmatprep.mubr.f32.mxu0 0.0
    %2865 = vmatmul.mubr.f32.gmra.mrb[0].mxu0 %v2784
    %v2866 = vpop.f32.mrb[0].mxu0
    %v2867 = vadd.f32 0.0, %v2866
    %v2868 = vpop.f32.mrb[0].mxu0
    %2869 = vmatprep.mubr.f32.mxu0 0.0
    %2870 = vmatmul.mubr.f32.gmra.mrb[0].mxu0 %v2787
    %v2871 = vpop.f32.mrb[0].mxu0
    %v2872 = vadd.f32 0.0, %v2871
    %v2873 = vpop.f32.mrb[0].mxu0
    %2874 = vmatprep.mubr.f32.mxu0 0.0
    %2875 = vmatmul.mubr.f32.gmra.mrb[0].mxu0 %v2790
    %v2876 = vpop.f32.mrb[0].mxu0
    %v2877 = vadd.f32 0.0, %v2876
    %v2878 = vpop.f32.mrb[0].mxu0
    %2879 = vmatprep.mubr.f32.mxu0 0.0
    %2880 = vmatmul.mubr.f32.gmra.mrb[0].mxu0 %v2793
    %v2881 = vpop.f32.mrb[0].mxu0
    %v2882 = vadd.f32 0.0, %v2881
    %v2883 = vpop.f32.mrb[0].mxu0
    %2884 = vmatprep.mubr.f32.mxu0 0.0
    %2885 = vmatmul.mubr.f32.gmra.mrb[0].mxu0 %v2796
    %v2886 = vpop.f32.mrb[0].mxu0
    %v2887 = vadd.f32 0.0, %v2886
    %v2888 = vpop.f32.mrb[0].mxu0
    %2889 = vdwg.mxu0
    %2890 = vrot.lane.b32.xlu0 %v2273, 112
    %v2891 = vpop.permute.xlu0 %2890
    %2892 = vrot.lane.b32.xlu0 %v2274, 112
    %v2893 = vpop.permute.xlu0 %2892
    %2894 = vrot.lane.b32.xlu0 %v2275, 112
    %v2895 = vpop.permute.xlu0 %2894
    %2896 = vrot.lane.b32.xlu0 %v2276, 112
    %v2897 = vpop.permute.xlu0 %2896
    %2898 = vrot.lane.b32.xlu0 %v2277, 112
    %v2899 = vpop.permute.xlu0 %2898
    %2900 = vrot.lane.b32.xlu0 %v2250, 80
    %v2901 = vpop.permute.xlu0 %2900
    %2902 = vrot.lane.b32.xlu0 %v2255, 80
    %v2903 = vpop.permute.xlu0 %2902
    %2904 = vrot.lane.b32.xlu0 %v2260, 80
    %v2905 = vpop.permute.xlu0 %2904
    %2906 = vrot.lane.b32.xlu0 %v2265, 80
    %v2907 = vpop.permute.xlu0 %2906
    %2908 = vrot.lane.b32.xlu0 %v2270, 80
    %v2909 = vpop.permute.xlu0 %2908
    %v2910 = vsel %vm332, %v2891, 0
    %v2912 = vsel %vm332, %v2893, 0
    %v2914 = vsel %vm332, %v2895, 0
    %v2916 = vsel %vm332, %v2897, 0
    %v2918 = vsel %vm332, %v2899, 0
    %v2920 = vsel %vm332, %v2901, 0
    %v2922 = vsel %vm332, %v2903, 0
    %v2924 = vsel %vm332, %v2905, 0
    %v2926 = vsel %vm332, %v2907, 0
    %v2928 = vsel %vm332, %v2909, 0
    %2930 = vmatprep.subr.mxu0 0.0
    %2931 = vmatpush1.xpose.msra.mxu0 %v2920
    %2932 = vmatprep.subr.mxu0 0.0
    %2933 = vmatpush1.xpose.msra.mxu0 %v2922
    %2934 = vmatprep.subr.mxu0 0.0
    %2935 = vmatpush1.xpose.msra.mxu0 %v2924
    %2936 = vmatprep.subr.mxu0 0.0
    %2937 = vmatpush1.xpose.msra.mxu0 %v2926
    %2938 = vmatprep.subr.mxu0 0.0
    %2939 = vmatpush1.xpose.msra.mxu0 %v2928
    %2940 = vmatprep.subr.mxu0 0.0
    %2941 = vmatpush1.xpose.msra.mxu0 0.0
    %2942 = vmatprep.subr.mxu0 0.0
    %2943 = vmatpush1.xpose.msra.mxu0 0.0
    %2944 = vmatprep.subr.mxu0 0.0
    %2945 = vmatpush1.xpose.msra.mxu0 0.0
    %2946 = vmatprep.subr.mxu0 0.0
    %2947 = vmatpush1.xpose.msra.mxu0 0.0
    %2948 = vmatprep.subr.mxu0 0.0
    %2949 = vmatpush1.xpose.msra.mxu0 0.0
    %2950 = vmatprep.subr.mxu0 0.0
    %2951 = vmatpush1.xpose.msra.mxu0 0.0
    %2952 = vmatprep.subr.mxu0 0.0
    %2953 = vmatpush1.xpose.msra.mxu0 0.0
    %2954 = vmatprep.subr.mxu0 0.0
    %2955 = vmatpush1.xpose.msra.mxu0 0.0
    %2956 = vmatprep.subr.mxu0 0.0
    %2957 = vmatpush1.xpose.msra.mxu0 0.0
    %2958 = vmatprep.subr.mxu0 0.0
    %2959 = vmatpush1.xpose.msra.mxu0 0.0
    %2960 = vmatprep.subr.mxu0 0.0
    %2961 = vmatpush1.xpose.msra.mxu0 0.0
    %2962 = vmatprep.subr.mxu0 0.0
    %2963 = vmatpush1.xpose.msra.mxu0 0.0
    %2964 = vmatprep.subr.mxu0 0.0
    %2965 = vmatpush1.xpose.msra.mxu0 0.0
    %2966 = vmatprep.subr.mxu0 0.0
    %2967 = vmatpush1.xpose.msra.mxu0 0.0
    %2968 = vmatprep.subr.mxu0 0.0
    %2969 = vmatpush1.xpose.msra.mxu0 0.0
    %2970 = vmatprep.subr.mxu0 0.0
    %2971 = vmatpush1.xpose.msra.mxu0 0.0
    %2972 = vmatprep.subr.mxu0 0.0
    %2973 = vmatpush1.xpose.msra.mxu0 0.0
    %2974 = vmatprep.subr.mxu0 0.0
    %2975 = vmatpush1.xpose.msra.mxu0 0.0
    %2976 = vmatprep.subr.mxu0 0.0
    %2977 = vmatpush1.xpose.msra.mxu0 0.0
    %2978 = vmatprep.subr.mxu0 0.0
    %2979 = vmatpush1.xpose.msra.mxu0 0.0
    %2980 = vmatprep.subr.mxu0 0.0
    %2981 = vmatpush1.xpose.msra.mxu0 0.0
    %2982 = vmatprep.subr.mxu0 0.0
    %2983 = vmatpush1.xpose.msra.mxu0 0.0
    %2984 = vmatprep.subr.mxu0 0.0
    %2985 = vmatpush1.xpose.msra.mxu0 0.0
    %2986 = vmatprep.subr.mxu0 0.0
    %2987 = vmatpush1.xpose.msra.mxu0 0.0
    %2988 = vmatprep.subr.mxu0 0.0
    %2989 = vmatpush1.xpose.msra.mxu0 0.0
    %2990 = vmatprep.subr.mxu0 0.0
    %2991 = vmatpush1.xpose.msra.mxu0 0.0
    %2992 = vmatprep.subr.mxu0 0.0
    %2993 = vmatpush1.xpose.msra.mxu0 0.0
    %2994 = vmatprep.mubr.f32.mxu0 0.0
    %2995 = vmatmul.mubr.f32.gmra.mrb[0].mxu0 %v2910
    %v2996 = vpop.f32.mrb[0].mxu0
    %v2997 = vadd.f32 %v171, %v2996
    %v2998 = vpop.f32.mrb[0].mxu0
    %2999 = vmatprep.mubr.f32.mxu0 0.0
    %3000 = vmatmul.mubr.f32.gmra.mrb[0].mxu0 %v2912
    %v3001 = vpop.f32.mrb[0].mxu0
    %v3002 = vadd.f32 %v172, %v3001
    %v3003 = vpop.f32.mrb[0].mxu0
    %3004 = vmatprep.mubr.f32.mxu0 0.0
    %3005 = vmatmul.mubr.f32.gmra.mrb[0].mxu0 %v2914
    %v3006 = vpop.f32.mrb[0].mxu0
    %v3007 = vadd.f32 %v173, %v3006
    %v3008 = vpop.f32.mrb[0].mxu0
    %3009 = vmatprep.mubr.f32.mxu0 0.0
    %3010 = vmatmul.mubr.f32.gmra.mrb[0].mxu0 %v2916
    %v3011 = vpop.f32.mrb[0].mxu0
    %v3012 = vadd.f32 %v174, %v3011
    %v3013 = vpop.f32.mrb[0].mxu0
    %3014 = vmatprep.mubr.f32.mxu0 0.0
    %3015 = vmatmul.mubr.f32.gmra.mrb[0].mxu0 %v2918
    %v3016 = vpop.f32.mrb[0].mxu0
    %v3017 = vadd.f32 %v175, %v3016
    %v3018 = vpop.f32.mrb[0].mxu0
    %3019 = vdwg.mxu0
    %v3020 = vsel %vm448, %v2997, -inf
    %3021 = vmax.xlane.f32.xlu0 %v3020
    %v3022 = vpop.xlane.xlu0 %3021
    %v3023 = vsel %vm448, %v3002, -inf
    %3024 = vmax.xlane.f32.xlu0 %v3023
    %v3025 = vpop.xlane.xlu0 %3024
    %v3026 = vsel %vm448, %v3007, -inf
    %3027 = vmax.xlane.f32.xlu0 %v3026
    %v3028 = vpop.xlane.xlu0 %3027
    %v3029 = vsel %vm448, %v3012, -inf
    %3030 = vmax.xlane.f32.xlu0 %v3029
    %v3031 = vpop.xlane.xlu0 %3030
    %v3032 = vsel %vm461, %v3017, -inf
    %3033 = vmax.xlane.f32.xlu0 %v3032
    %v3034 = vpop.xlane.xlu0 %3033
    %v3035 = vsub.f32 %v2997, %v3022
    %v3036 = vsub.f32 %v3002, %v3025
    %v3037 = vsub.f32 %v3007, %v3028
    %v3038 = vsub.f32 %v3012, %v3031
    %v3039 = vsub.f32 %v3017, %v3034
    %v3040 = vmul.f32 %v3035, 1.442695
    %v3041 = vpow.pop %v3040
    %v3042 = vmul.f32 %v3036, 1.442695
    %v3043 = vpow.pop %v3042
    %v3044 = vmul.f32 %v3037, 1.442695
    %v3045 = vpow.pop %v3044
    %v3046 = vmul.f32 %v3038, 1.442695
    %v3047 = vpow.pop %v3046
    %v3048 = vmul.f32 %v3039, 1.442695
    %v3049 = vpow.pop %v3048
    %v3050 = vsel %vm448, %v3041, 0.0
    %3051 = vadd.xlane.f32.xlu0 %v3050
    %v3052 = vpop.xlane.xlu0 %3051
    %v3053 = vsel %vm448, %v3043, 0.0
    %3054 = vadd.xlane.f32.xlu0 %v3053
    %v3055 = vpop.xlane.xlu0 %3054
    %v3056 = vsel %vm448, %v3045, 0.0
    %3057 = vadd.xlane.f32.xlu0 %v3056
    %v3058 = vpop.xlane.xlu0 %3057
    %v3059 = vsel %vm448, %v3047, 0.0
    %3060 = vadd.xlane.f32.xlu0 %v3059
    %v3061 = vpop.xlane.xlu0 %3060
    %v3062 = vsel %vm461, %v3049, 0.0
    %3063 = vadd.xlane.f32.xlu0 %v3062
    %v3064 = vpop.xlane.xlu0 %3063
    %v3065 = vrcp.pop %v3052
    %v3066 = vrcp.pop %v3055
    %v3067 = vrcp.pop %v3058
    %v3068 = vrcp.pop %v3061
    %v3069 = vrcp.pop %v3064
    %v3070 = vmul.f32 %v3041, %v3065
    %v3071 = vmul.f32 %v3043, %v3066
    %v3072 = vmul.f32 %v3045, %v3067
    %v3073 = vmul.f32 %v3047, %v3068
    %v3074 = vmul.f32 %v3049, %v3069
    %3075 = vrot.lane.b32.xlu0 %v2250, 48
    %v3076 = vpop.permute.xlu0 %3075
    %3077 = vrot.lane.b32.xlu0 %v2255, 48
    %v3078 = vpop.permute.xlu0 %3077
    %3079 = vrot.lane.b32.xlu0 %v2260, 48
    %v3080 = vpop.permute.xlu0 %3079
    %3081 = vrot.lane.b32.xlu0 %v2265, 48
    %v3082 = vpop.permute.xlu0 %3081
    %3083 = vrot.lane.b32.xlu0 %v2270, 48
    %v3084 = vpop.permute.xlu0 %3083
    %v3090 = vsel %vm448, %v3070, 0
    %v3093 = vsel %vm448, %v3071, 0
    %v3096 = vsel %vm448, %v3072, 0
    %v3099 = vsel %vm448, %v3073, 0
    %v3102 = vsel %vm448, %v3074, 0
    %v3104 = vsel %vm534, %v3084, 0
    %3106 = vmatprep.subr.mxu0 0.0
    %3107 = vmatpush1.msra.mxu0 %v3076
    %3108 = vmatprep.subr.mxu0 0.0
    %3109 = vmatpush1.msra.mxu0 %v3078
    %3110 = vmatprep.subr.mxu0 0.0
    %3111 = vmatpush1.msra.mxu0 %v3080
    %3112 = vmatprep.subr.mxu0 0.0
    %3113 = vmatpush1.msra.mxu0 %v3082
    %3114 = vmatprep.subr.mxu0 0.0
    %3115 = vmatpush1.msra.mxu0 %v3104
    %3116 = vmatprep.subr.mxu0 0.0
    %3117 = vmatpush1.msra.mxu0 0.0
    %3118 = vmatprep.subr.mxu0 0.0
    %3119 = vmatpush1.msra.mxu0 0.0
    %3120 = vmatprep.subr.mxu0 0.0
    %3121 = vmatpush1.msra.mxu0 0.0
    %3122 = vmatprep.subr.mxu0 0.0
    %3123 = vmatpush1.msra.mxu0 0.0
    %3124 = vmatprep.subr.mxu0 0.0
    %3125 = vmatpush1.msra.mxu0 0.0
    %3126 = vmatprep.subr.mxu0 0.0
    %3127 = vmatpush1.msra.mxu0 0.0
    %3128 = vmatprep.subr.mxu0 0.0
    %3129 = vmatpush1.msra.mxu0 0.0
    %3130 = vmatprep.subr.mxu0 0.0
    %3131 = vmatpush1.msra.mxu0 0.0
    %3132 = vmatprep.subr.mxu0 0.0
    %3133 = vmatpush1.msra.mxu0 0.0
    %3134 = vmatprep.subr.mxu0 0.0
    %3135 = vmatpush1.msra.mxu0 0.0
    %3136 = vmatprep.subr.mxu0 0.0
    %3137 = vmatpush1.msra.mxu0 0.0
    %3138 = vmatprep.subr.mxu0 0.0
    %3139 = vmatpush1.msra.mxu0 0.0
    %3140 = vmatprep.subr.mxu0 0.0
    %3141 = vmatpush1.msra.mxu0 0.0
    %3142 = vmatprep.subr.mxu0 0.0
    %3143 = vmatpush1.msra.mxu0 0.0
    %3144 = vmatprep.subr.mxu0 0.0
    %3145 = vmatpush1.msra.mxu0 0.0
    %3146 = vmatprep.subr.mxu0 0.0
    %3147 = vmatpush1.msra.mxu0 0.0
    %3148 = vmatprep.subr.mxu0 0.0
    %3149 = vmatpush1.msra.mxu0 0.0
    %3150 = vmatprep.subr.mxu0 0.0
    %3151 = vmatpush1.msra.mxu0 0.0
    %3152 = vmatprep.subr.mxu0 0.0
    %3153 = vmatpush1.msra.mxu0 0.0
    %3154 = vmatprep.subr.mxu0 0.0
    %3155 = vmatpush1.msra.mxu0 0.0
    %3156 = vmatprep.subr.mxu0 0.0
    %3157 = vmatpush1.msra.mxu0 0.0
    %3158 = vmatprep.subr.mxu0 0.0
    %3159 = vmatpush1.msra.mxu0 0.0
    %3160 = vmatprep.subr.mxu0 0.0
    %3161 = vmatpush1.msra.mxu0 0.0
    %3162 = vmatprep.subr.mxu0 0.0
    %3163 = vmatpush1.msra.mxu0 0.0
    %3164 = vmatprep.subr.mxu0 0.0
    %3165 = vmatpush1.msra.mxu0 0.0
    %3166 = vmatprep.subr.mxu0 0.0
    %3167 = vmatpush1.msra.mxu0 0.0
    %3168 = vmatprep.subr.mxu0 0.0
    %3169 = vmatpush1.msra.mxu0 0.0
    %3170 = vmatprep.mubr.f32.mxu0 0.0
    %3171 = vmatmul.mubr.f32.gmra.mrb[0].mxu0 %v3090
    %v3172 = vpop.f32.mrb[0].mxu0
    %v3173 = vadd.f32 0.0, %v3172
    %v3174 = vpop.f32.mrb[0].mxu0
    %3175 = vmatprep.mubr.f32.mxu0 0.0
    %3176 = vmatmul.mubr.f32.gmra.mrb[0].mxu0 %v3093
    %v3177 = vpop.f32.mrb[0].mxu0
    %v3178 = vadd.f32 0.0, %v3177
    %v3179 = vpop.f32.mrb[0].mxu0
    %3180 = vmatprep.mubr.f32.mxu0 0.0
    %3181 = vmatmul.mubr.f32.gmra.mrb[0].mxu0 %v3096
    %v3182 = vpop.f32.mrb[0].mxu0
    %v3183 = vadd.f32 0.0, %v3182
    %v3184 = vpop.f32.mrb[0].mxu0
    %3185 = vmatprep.mubr.f32.mxu0 0.0
    %3186 = vmatmul.mubr.f32.gmra.mrb[0].mxu0 %v3099
    %v3187 = vpop.f32.mrb[0].mxu0
    %v3188 = vadd.f32 0.0, %v3187
    %v3189 = vpop.f32.mrb[0].mxu0
    %3190 = vmatprep.mubr.f32.mxu0 0.0
    %3191 = vmatmul.mubr.f32.gmra.mrb[0].mxu0 %v3102
    %v3192 = vpop.f32.mrb[0].mxu0
    %v3193 = vadd.f32 0.0, %v3192
    %v3194 = vpop.f32.mrb[0].mxu0
    %3195 = vdwg.mxu0
    %3196 = vrot.lane.b32.xlu0 %v2273, 104
    %v3197 = vpop.permute.xlu0 %3196
    %3198 = vrot.lane.b32.xlu0 %v2274, 104
    %v3199 = vpop.permute.xlu0 %3198
    %3200 = vrot.lane.b32.xlu0 %v2275, 104
    %v3201 = vpop.permute.xlu0 %3200
    %3202 = vrot.lane.b32.xlu0 %v2276, 104
    %v3203 = vpop.permute.xlu0 %3202
    %3204 = vrot.lane.b32.xlu0 %v2277, 104
    %v3205 = vpop.permute.xlu0 %3204
    %3206 = vrot.lane.b32.xlu0 %v2250, 72
    %v3207 = vpop.permute.xlu0 %3206
    %3208 = vrot.lane.b32.xlu0 %v2255, 72
    %v3209 = vpop.permute.xlu0 %3208
    %3210 = vrot.lane.b32.xlu0 %v2260, 72
    %v3211 = vpop.permute.xlu0 %3210
    %3212 = vrot.lane.b32.xlu0 %v2265, 72
    %v3213 = vpop.permute.xlu0 %3212
    %3214 = vrot.lane.b32.xlu0 %v2270, 72
    %v3215 = vpop.permute.xlu0 %3214
    %v3216 = vsel %vm332, %v3197, 0
    %v3218 = vsel %vm332, %v3199, 0
    %v3220 = vsel %vm332, %v3201, 0
    %v3222 = vsel %vm332, %v3203, 0
    %v3224 = vsel %vm332, %v3205, 0
    %v3226 = vsel %vm332, %v3207, 0
    %v3228 = vsel %vm332, %v3209, 0
    %v3230 = vsel %vm332, %v3211, 0
    %v3232 = vsel %vm332, %v3213, 0
    %v3234 = vsel %vm332, %v3215, 0
    %3236 = vmatprep.subr.mxu0 0.0
    %3237 = vmatpush1.xpose.msra.mxu0 %v3226
    %3238 = vmatprep.subr.mxu0 0.0
    %3239 = vmatpush1.xpose.msra.mxu0 %v3228
    %3240 = vmatprep.subr.mxu0 0.0
    %3241 = vmatpush1.xpose.msra.mxu0 %v3230
    %3242 = vmatprep.subr.mxu0 0.0
    %3243 = vmatpush1.xpose.msra.mxu0 %v3232
    %3244 = vmatprep.subr.mxu0 0.0
    %3245 = vmatpush1.xpose.msra.mxu0 %v3234
    %3246 = vmatprep.subr.mxu0 0.0
    %3247 = vmatpush1.xpose.msra.mxu0 0.0
    %3248 = vmatprep.subr.mxu0 0.0
    %3249 = vmatpush1.xpose.msra.mxu0 0.0
    %3250 = vmatprep.subr.mxu0 0.0
    %3251 = vmatpush1.xpose.msra.mxu0 0.0
    %3252 = vmatprep.subr.mxu0 0.0
    %3253 = vmatpush1.xpose.msra.mxu0 0.0
    %3254 = vmatprep.subr.mxu0 0.0
    %3255 = vmatpush1.xpose.msra.mxu0 0.0
    %3256 = vmatprep.subr.mxu0 0.0
    %3257 = vmatpush1.xpose.msra.mxu0 0.0
    %3258 = vmatprep.subr.mxu0 0.0
    %3259 = vmatpush1.xpose.msra.mxu0 0.0
    %3260 = vmatprep.subr.mxu0 0.0
    %3261 = vmatpush1.xpose.msra.mxu0 0.0
    %3262 = vmatprep.subr.mxu0 0.0
    %3263 = vmatpush1.xpose.msra.mxu0 0.0
    %3264 = vmatprep.subr.mxu0 0.0
    %3265 = vmatpush1.xpose.msra.mxu0 0.0
    %3266 = vmatprep.subr.mxu0 0.0
    %3267 = vmatpush1.xpose.msra.mxu0 0.0
    %3268 = vmatprep.subr.mxu0 0.0
    %3269 = vmatpush1.xpose.msra.mxu0 0.0
    %3270 = vmatprep.subr.mxu0 0.0
    %3271 = vmatpush1.xpose.msra.mxu0 0.0
    %3272 = vmatprep.subr.mxu0 0.0
    %3273 = vmatpush1.xpose.msra.mxu0 0.0
    %3274 = vmatprep.subr.mxu0 0.0
    %3275 = vmatpush1.xpose.msra.mxu0 0.0
    %3276 = vmatprep.subr.mxu0 0.0
    %3277 = vmatpush1.xpose.msra.mxu0 0.0
    %3278 = vmatprep.subr.mxu0 0.0
    %3279 = vmatpush1.xpose.msra.mxu0 0.0
    %3280 = vmatprep.subr.mxu0 0.0
    %3281 = vmatpush1.xpose.msra.mxu0 0.0
    %3282 = vmatprep.subr.mxu0 0.0
    %3283 = vmatpush1.xpose.msra.mxu0 0.0
    %3284 = vmatprep.subr.mxu0 0.0
    %3285 = vmatpush1.xpose.msra.mxu0 0.0
    %3286 = vmatprep.subr.mxu0 0.0
    %3287 = vmatpush1.xpose.msra.mxu0 0.0
    %3288 = vmatprep.subr.mxu0 0.0
    %3289 = vmatpush1.xpose.msra.mxu0 0.0
    %3290 = vmatprep.subr.mxu0 0.0
    %3291 = vmatpush1.xpose.msra.mxu0 0.0
    %3292 = vmatprep.subr.mxu0 0.0
    %3293 = vmatpush1.xpose.msra.mxu0 0.0
    %3294 = vmatprep.subr.mxu0 0.0
    %3295 = vmatpush1.xpose.msra.mxu0 0.0
    %3296 = vmatprep.subr.mxu0 0.0
    %3297 = vmatpush1.xpose.msra.mxu0 0.0
    %3298 = vmatprep.subr.mxu0 0.0
    %3299 = vmatpush1.xpose.msra.mxu0 0.0
    %3300 = vmatprep.mubr.f32.mxu0 0.0
    %3301 = vmatmul.mubr.f32.gmra.mrb[0].mxu0 %v3216
    %v3302 = vpop.f32.mrb[0].mxu0
    %v3303 = vadd.f32 %v171, %v3302
    %v3304 = vpop.f32.mrb[0].mxu0
    %3305 = vmatprep.mubr.f32.mxu0 0.0
    %3306 = vmatmul.mubr.f32.gmra.mrb[0].mxu0 %v3218
    %v3307 = vpop.f32.mrb[0].mxu0
    %v3308 = vadd.f32 %v172, %v3307
    %v3309 = vpop.f32.mrb[0].mxu0
    %3310 = vmatprep.mubr.f32.mxu0 0.0
    %3311 = vmatmul.mubr.f32.gmra.mrb[0].mxu0 %v3220
    %v3312 = vpop.f32.mrb[0].mxu0
    %v3313 = vadd.f32 %v173, %v3312
    %v3314 = vpop.f32.mrb[0].mxu0
    %3315 = vmatprep.mubr.f32.mxu0 0.0
    %3316 = vmatmul.mubr.f32.gmra.mrb[0].mxu0 %v3222
    %v3317 = vpop.f32.mrb[0].mxu0
    %v3318 = vadd.f32 %v174, %v3317
    %v3319 = vpop.f32.mrb[0].mxu0
    %3320 = vmatprep.mubr.f32.mxu0 0.0
    %3321 = vmatmul.mubr.f32.gmra.mrb[0].mxu0 %v3224
    %v3322 = vpop.f32.mrb[0].mxu0
    %v3323 = vadd.f32 %v175, %v3322
    %v3324 = vpop.f32.mrb[0].mxu0
    %3325 = vdwg.mxu0
    %v3326 = vsel %vm448, %v3303, -inf
    %3327 = vmax.xlane.f32.xlu0 %v3326
    %v3328 = vpop.xlane.xlu0 %3327
    %v3329 = vsel %vm448, %v3308, -inf
    %3330 = vmax.xlane.f32.xlu0 %v3329
    %v3331 = vpop.xlane.xlu0 %3330
    %v3332 = vsel %vm448, %v3313, -inf
    %3333 = vmax.xlane.f32.xlu0 %v3332
    %v3334 = vpop.xlane.xlu0 %3333
    %v3335 = vsel %vm448, %v3318, -inf
    %3336 = vmax.xlane.f32.xlu0 %v3335
    %v3337 = vpop.xlane.xlu0 %3336
    %v3338 = vsel %vm461, %v3323, -inf
    %3339 = vmax.xlane.f32.xlu0 %v3338
    %v3340 = vpop.xlane.xlu0 %3339
    %v3341 = vsub.f32 %v3303, %v3328
    %v3342 = vsub.f32 %v3308, %v3331
    %v3343 = vsub.f32 %v3313, %v3334
    %v3344 = vsub.f32 %v3318, %v3337
    %v3345 = vsub.f32 %v3323, %v3340
    %v3346 = vmul.f32 %v3341, 1.442695
    %v3347 = vpow.pop %v3346
    %v3348 = vmul.f32 %v3342, 1.442695
    %v3349 = vpow.pop %v3348
    %v3350 = vmul.f32 %v3343, 1.442695
    %v3351 = vpow.pop %v3350
    %v3352 = vmul.f32 %v3344, 1.442695
    %v3353 = vpow.pop %v3352
    %v3354 = vmul.f32 %v3345, 1.442695
    %v3355 = vpow.pop %v3354
    %v3356 = vsel %vm448, %v3347, 0.0
    %3357 = vadd.xlane.f32.xlu0 %v3356
    %v3358 = vpop.xlane.xlu0 %3357
    %v3359 = vsel %vm448, %v3349, 0.0
    %3360 = vadd.xlane.f32.xlu0 %v3359
    %v3361 = vpop.xlane.xlu0 %3360
    %v3362 = vsel %vm448, %v3351, 0.0
    %3363 = vadd.xlane.f32.xlu0 %v3362
    %v3364 = vpop.xlane.xlu0 %3363
    %v3365 = vsel %vm448, %v3353, 0.0
    %3366 = vadd.xlane.f32.xlu0 %v3365
    %v3367 = vpop.xlane.xlu0 %3366
    %v3368 = vsel %vm461, %v3355, 0.0
    %3369 = vadd.xlane.f32.xlu0 %v3368
    %v3370 = vpop.xlane.xlu0 %3369
    %v3371 = vrcp.pop %v3358
    %v3372 = vrcp.pop %v3361
    %v3373 = vrcp.pop %v3364
    %v3374 = vrcp.pop %v3367
    %v3375 = vrcp.pop %v3370
    %v3376 = vmul.f32 %v3347, %v3371
    %v3377 = vmul.f32 %v3349, %v3372
    %v3378 = vmul.f32 %v3351, %v3373
    %v3379 = vmul.f32 %v3353, %v3374
    %v3380 = vmul.f32 %v3355, %v3375
    %3381 = vrot.lane.b32.xlu0 %v2250, 40
    %v3382 = vpop.permute.xlu0 %3381
    %3383 = vrot.lane.b32.xlu0 %v2255, 40
    %v3384 = vpop.permute.xlu0 %3383
    %3385 = vrot.lane.b32.xlu0 %v2260, 40
    %v3386 = vpop.permute.xlu0 %3385
    %3387 = vrot.lane.b32.xlu0 %v2265, 40
    %v3388 = vpop.permute.xlu0 %3387
    %3389 = vrot.lane.b32.xlu0 %v2270, 40
    %v3390 = vpop.permute.xlu0 %3389
    %v3396 = vsel %vm448, %v3376, 0
    %v3399 = vsel %vm448, %v3377, 0
    %v3402 = vsel %vm448, %v3378, 0
    %v3405 = vsel %vm448, %v3379, 0
    %v3408 = vsel %vm448, %v3380, 0
    %v3410 = vsel %vm534, %v3390, 0
    %3412 = vmatprep.subr.mxu0 0.0
    %3413 = vmatpush1.msra.mxu0 %v3382
    %3414 = vmatprep.subr.mxu0 0.0
    %3415 = vmatpush1.msra.mxu0 %v3384
    %3416 = vmatprep.subr.mxu0 0.0
    %3417 = vmatpush1.msra.mxu0 %v3386
    %3418 = vmatprep.subr.mxu0 0.0
    %3419 = vmatpush1.msra.mxu0 %v3388
    %3420 = vmatprep.subr.mxu0 0.0
    %3421 = vmatpush1.msra.mxu0 %v3410
    %3422 = vmatprep.subr.mxu0 0.0
    %3423 = vmatpush1.msra.mxu0 0.0
    %3424 = vmatprep.subr.mxu0 0.0
    %3425 = vmatpush1.msra.mxu0 0.0
    %3426 = vmatprep.subr.mxu0 0.0
    %3427 = vmatpush1.msra.mxu0 0.0
    %3428 = vmatprep.subr.mxu0 0.0
    %3429 = vmatpush1.msra.mxu0 0.0
    %3430 = vmatprep.subr.mxu0 0.0
    %3431 = vmatpush1.msra.mxu0 0.0
    %3432 = vmatprep.subr.mxu0 0.0
    %3433 = vmatpush1.msra.mxu0 0.0
    %3434 = vmatprep.subr.mxu0 0.0
    %3435 = vmatpush1.msra.mxu0 0.0
    %3436 = vmatprep.subr.mxu0 0.0
    %3437 = vmatpush1.msra.mxu0 0.0
    %3438 = vmatprep.subr.mxu0 0.0
    %3439 = vmatpush1.msra.mxu0 0.0
    %3440 = vmatprep.subr.mxu0 0.0
    %3441 = vmatpush1.msra.mxu0 0.0
    %3442 = vmatprep.subr.mxu0 0.0
    %3443 = vmatpush1.msra.mxu0 0.0
    %3444 = vmatprep.subr.mxu0 0.0
    %3445 = vmatpush1.msra.mxu0 0.0
    %3446 = vmatprep.subr.mxu0 0.0
    %3447 = vmatpush1.msra.mxu0 0.0
    %3448 = vmatprep.subr.mxu0 0.0
    %3449 = vmatpush1.msra.mxu0 0.0
    %3450 = vmatprep.subr.mxu0 0.0
    %3451 = vmatpush1.msra.mxu0 0.0
    %3452 = vmatprep.subr.mxu0 0.0
    %3453 = vmatpush1.msra.mxu0 0.0
    %3454 = vmatprep.subr.mxu0 0.0
    %3455 = vmatpush1.msra.mxu0 0.0
    %3456 = vmatprep.subr.mxu0 0.0
    %3457 = vmatpush1.msra.mxu0 0.0
    %3458 = vmatprep.subr.mxu0 0.0
    %3459 = vmatpush1.msra.mxu0 0.0
    %3460 = vmatprep.subr.mxu0 0.0
    %3461 = vmatpush1.msra.mxu0 0.0
    %3462 = vmatprep.subr.mxu0 0.0
    %3463 = vmatpush1.msra.mxu0 0.0
    %3464 = vmatprep.subr.mxu0 0.0
    %3465 = vmatpush1.msra.mxu0 0.0
    %3466 = vmatprep.subr.mxu0 0.0
    %3467 = vmatpush1.msra.mxu0 0.0
    %3468 = vmatprep.subr.mxu0 0.0
    %3469 = vmatpush1.msra.mxu0 0.0
    %3470 = vmatprep.subr.mxu0 0.0
    %3471 = vmatpush1.msra.mxu0 0.0
    %3472 = vmatprep.subr.mxu0 0.0
    %3473 = vmatpush1.msra.mxu0 0.0
    %3474 = vmatprep.subr.mxu0 0.0
    %3475 = vmatpush1.msra.mxu0 0.0
    %3476 = vmatprep.mubr.f32.mxu0 0.0
    %3477 = vmatmul.mubr.f32.gmra.mrb[0].mxu0 %v3396
    %v3478 = vpop.f32.mrb[0].mxu0
    %v3479 = vadd.f32 0.0, %v3478
    %v3480 = vpop.f32.mrb[0].mxu0
    %3481 = vmatprep.mubr.f32.mxu0 0.0
    %3482 = vmatmul.mubr.f32.gmra.mrb[0].mxu0 %v3399
    %v3483 = vpop.f32.mrb[0].mxu0
    %v3484 = vadd.f32 0.0, %v3483
    %v3485 = vpop.f32.mrb[0].mxu0
    %3486 = vmatprep.mubr.f32.mxu0 0.0
    %3487 = vmatmul.mubr.f32.gmra.mrb[0].mxu0 %v3402
    %v3488 = vpop.f32.mrb[0].mxu0
    %v3489 = vadd.f32 0.0, %v3488
    %v3490 = vpop.f32.mrb[0].mxu0
    %3491 = vmatprep.mubr.f32.mxu0 0.0
    %3492 = vmatmul.mubr.f32.gmra.mrb[0].mxu0 %v3405
    %v3493 = vpop.f32.mrb[0].mxu0
    %v3494 = vadd.f32 0.0, %v3493
    %v3495 = vpop.f32.mrb[0].mxu0
    %3496 = vmatprep.mubr.f32.mxu0 0.0
    %3497 = vmatmul.mubr.f32.gmra.mrb[0].mxu0 %v3408
    %v3498 = vpop.f32.mrb[0].mxu0
    %v3499 = vadd.f32 0.0, %v3498
    %v3500 = vpop.f32.mrb[0].mxu0
    %3501 = vdwg.mxu0
    %3507 = vrot.lane.b32.xlu0 %v2867, 8
    %v3508 = vpop.permute.xlu0 %3507
    %3509 = vrot.lane.b32.xlu0 %v2872, 8
    %v3510 = vpop.permute.xlu0 %3509
    %3511 = vrot.lane.b32.xlu0 %v2877, 8
    %v3512 = vpop.permute.xlu0 %3511
    %3513 = vrot.lane.b32.xlu0 %v2882, 8
    %v3514 = vpop.permute.xlu0 %3513
    %3515 = vrot.lane.b32.xlu0 %v2887, 8
    %v3516 = vpop.permute.xlu0 %3515
    %3527 = vrot.lane.b32.xlu0 %v3173, 16
    %v3528 = vpop.permute.xlu0 %3527
    %3529 = vrot.lane.b32.xlu0 %v3178, 16
    %v3530 = vpop.permute.xlu0 %3529
    %3531 = vrot.lane.b32.xlu0 %v3183, 16
    %v3532 = vpop.permute.xlu0 %3531
    %3533 = vrot.lane.b32.xlu0 %v3188, 16
    %v3534 = vpop.permute.xlu0 %3533
    %3535 = vrot.lane.b32.xlu0 %v3193, 16
    %v3536 = vpop.permute.xlu0 %3535
    %3547 = vrot.lane.b32.xlu0 %v3479, 24
    %v3548 = vpop.permute.xlu0 %3547
    %3549 = vrot.lane.b32.xlu0 %v3484, 24
    %v3550 = vpop.permute.xlu0 %3549
    %3551 = vrot.lane.b32.xlu0 %v3489, 24
    %v3552 = vpop.permute.xlu0 %3551
    %3553 = vrot.lane.b32.xlu0 %v3494, 24
    %v3554 = vpop.permute.xlu0 %3553
    %3555 = vrot.lane.b32.xlu0 %v3499, 24
    %v3556 = vpop.permute.xlu0 %3555
    %v3562 = vsel %vm332, %v2561, %v3508
    %v3563 = vsel %vm332, %v2566, %v3510
    %v3564 = vsel %vm332, %v2571, %v3512
    %v3565 = vsel %vm332, %v2576, %v3514
    %v3566 = vsel %vm332, %v2581, %v3516
    %v3567 = vsel %vm1610, %v3562, %v3528
    %v3568 = vsel %vm1610, %v3563, %v3530
    %v3569 = vsel %vm1610, %v3564, %v3532
    %v3570 = vsel %vm1610, %v3565, %v3534
    %v3571 = vsel %vm1610, %v3566, %v3536
    %v3572 = vsel %vm1616, %v3567, %v3548
    %v3573 = vsel %vm1616, %v3568, %v3550
    %v3574 = vsel %vm1616, %v3569, %v3552
    %v3575 = vsel %vm1616, %v3570, %v3554
    %v3576 = vsel %vm1616, %v3571, %v3556
    %3581 = vrot.lane.b32.xlu0 %v2134, 32
    %v3582 = vpop.permute.xlu0 %3581
    %3583 = vrot.lane.b32.xlu0 %v2135, 32
    %v3584 = vpop.permute.xlu0 %3583
    %3585 = vrot.lane.b32.xlu0 %v2136, 32
    %v3586 = vpop.permute.xlu0 %3585
    %3587 = vrot.lane.b32.xlu0 %v2137, 32
    %v3588 = vpop.permute.xlu0 %3587
    %3594 = vrot.lane.b32.xlu0 %v2167, 32
    %v3595 = vpop.permute.xlu0 %3594
    %v3598 = vsel %vm206, %v3572, 0
    %v3601 = vsel %vm206, %v3573, 0
    %v3604 = vsel %vm206, %v3574, 0
    %v3607 = vsel %vm206, %v3575, 0
    %v3610 = vsel %vm206, %v3576, 0
    %3612 = vmatprep.subr.mxu0 0.0
    %3613 = vmatpush1.msra.mxu0 %v3582
    %3614 = vmatprep.subr.mxu0 0.0
    %3615 = vmatpush1.msra.mxu0 %v3584
    %3616 = vmatprep.subr.mxu0 0.0
    %3617 = vmatpush1.msra.mxu0 %v3586
    %3618 = vmatprep.subr.mxu0 0.0
    %3619 = vmatpush1.msra.mxu0 %v3588
    %3620 = vmatprep.subr.mxu0 0.0
    %3621 = vmatpush1.msra.mxu0 0.0
    %3622 = vmatprep.subr.mxu0 0.0
    %3623 = vmatpush1.msra.mxu0 0.0
    %3624 = vmatprep.subr.mxu0 0.0
    %3625 = vmatpush1.msra.mxu0 0.0
    %3626 = vmatprep.subr.mxu0 0.0
    %3627 = vmatpush1.msra.mxu0 0.0
    %3628 = vmatprep.subr.mxu0 0.0
    %3629 = vmatpush1.msra.mxu0 0.0
    %3630 = vmatprep.subr.mxu0 0.0
    %3631 = vmatpush1.msra.mxu0 0.0
    %3632 = vmatprep.subr.mxu0 0.0
    %3633 = vmatpush1.msra.mxu0 0.0
    %3634 = vmatprep.subr.mxu0 0.0
    %3635 = vmatpush1.msra.mxu0 0.0
    %3636 = vmatprep.subr.mxu0 0.0
    %3637 = vmatpush1.msra.mxu0 0.0
    %3638 = vmatprep.subr.mxu0 0.0
    %3639 = vmatpush1.msra.mxu0 0.0
    %3640 = vmatprep.subr.mxu0 0.0
    %3641 = vmatpush1.msra.mxu0 0.0
    %3642 = vmatprep.subr.mxu0 0.0
    %3643 = vmatpush1.msra.mxu0 0.0
    %3644 = vmatprep.subr.mxu0 0.0
    %3645 = vmatpush1.msra.mxu0 0.0
    %3646 = vmatprep.subr.mxu0 0.0
    %3647 = vmatpush1.msra.mxu0 0.0
    %3648 = vmatprep.subr.mxu0 0.0
    %3649 = vmatpush1.msra.mxu0 0.0
    %3650 = vmatprep.subr.mxu0 0.0
    %3651 = vmatpush1.msra.mxu0 0.0
    %3652 = vmatprep.subr.mxu0 0.0
    %3653 = vmatpush1.msra.mxu0 0.0
    %3654 = vmatprep.subr.mxu0 0.0
    %3655 = vmatpush1.msra.mxu0 0.0
    %3656 = vmatprep.subr.mxu0 0.0
    %3657 = vmatpush1.msra.mxu0 0.0
    %3658 = vmatprep.subr.mxu0 0.0
    %3659 = vmatpush1.msra.mxu0 0.0
    %3660 = vmatprep.subr.mxu0 0.0
    %3661 = vmatpush1.msra.mxu0 0.0
    %3662 = vmatprep.subr.mxu0 0.0
    %3663 = vmatpush1.msra.mxu0 0.0
    %3664 = vmatprep.subr.mxu0 0.0
    %3665 = vmatpush1.msra.mxu0 0.0
    %3666 = vmatprep.subr.mxu0 0.0
    %3667 = vmatpush1.msra.mxu0 0.0
    %3668 = vmatprep.subr.mxu0 0.0
    %3669 = vmatpush1.msra.mxu0 0.0
    %3670 = vmatprep.subr.mxu0 0.0
    %3671 = vmatpush1.msra.mxu0 0.0
    %3672 = vmatprep.subr.mxu0 0.0
    %3673 = vmatpush1.msra.mxu0 0.0
    %3674 = vmatprep.subr.mxu0 0.0
    %3675 = vmatpush1.msra.mxu0 0.0
    %3676 = vmatprep.mubr.f32.mxu0 0.0
    %3677 = vmatmul.mubr.f32.gmra.mrb[0].mxu0 %v3598
    %v3678 = vpop.f32.mrb[0].mxu0
    %v3679 = vadd.f32 %v3595, %v3678
    %v3680 = vpop.f32.mrb[0].mxu0
    %3681 = vmatprep.mubr.f32.mxu0 0.0
    %3682 = vmatmul.mubr.f32.gmra.mrb[0].mxu0 %v3601
    %v3683 = vpop.f32.mrb[0].mxu0
    %v3684 = vadd.f32 %v3595, %v3683
    %v3685 = vpop.f32.mrb[0].mxu0
    %3686 = vmatprep.mubr.f32.mxu0 0.0
    %3687 = vmatmul.mubr.f32.gmra.mrb[0].mxu0 %v3604
    %v3688 = vpop.f32.mrb[0].mxu0
    %v3689 = vadd.f32 %v3595, %v3688
    %v3690 = vpop.f32.mrb[0].mxu0
    %3691 = vmatprep.mubr.f32.mxu0 0.0
    %3692 = vmatmul.mubr.f32.gmra.mrb[0].mxu0 %v3607
    %v3693 = vpop.f32.mrb[0].mxu0
    %v3694 = vadd.f32 %v3595, %v3693
    %v3695 = vpop.f32.mrb[0].mxu0
    %3696 = vmatprep.mubr.f32.mxu0 0.0
    %3697 = vmatmul.mubr.f32.gmra.mrb[0].mxu0 %v3610
    %v3698 = vpop.f32.mrb[0].mxu0
    %v3699 = vadd.f32 %v3595, %v3698
    %v3700 = vpop.f32.mrb[0].mxu0
    %3701 = vdwg.mxu0
    %v3702 = vadd.f32 %v2128, %v3679
    %v3703 = vadd.f32 %v2129, %v3684
    %v3704 = vadd.f32 %v2130, %v3689
    %v3705 = vadd.f32 %v2131, %v3694
    %v3706 = vadd.f32 %v2132, %v3699
    %v3707 = vsel %vm206, %v3702, 0.0
    %3708 = vadd.xlane.f32.xlu0 %v3707
    %v3709 = vpop.xlane.xlu0 %3708
    %v3710 = vsel %vm206, %v3703, 0.0
    %3711 = vadd.xlane.f32.xlu0 %v3710
    %v3712 = vpop.xlane.xlu0 %3711
    %v3713 = vsel %vm206, %v3704, 0.0
    %3714 = vadd.xlane.f32.xlu0 %v3713
    %v3715 = vpop.xlane.xlu0 %3714
    %v3716 = vsel %vm206, %v3705, 0.0
    %3717 = vadd.xlane.f32.xlu0 %v3716
    %v3718 = vpop.xlane.xlu0 %3717
    %v3719 = vsel %vm1764, %v3706, 0.0
    %3720 = vadd.xlane.f32.xlu0 %v3719
    %v3721 = vpop.xlane.xlu0 %3720
    %v3722 = vmul.f32 %v3709, %v1768
    %v3723 = vmul.f32 %v3712, %v1768
    %v3724 = vmul.f32 %v3715, %v1768
    %v3725 = vmul.f32 %v3718, %v1768
    %v3726 = vmul.f32 %v3721, %v1768
    %v3727 = vsub.f32 %v3702, %v3722
    %v3728 = vsub.f32 %v3703, %v3723
    %v3729 = vsub.f32 %v3704, %v3724
    %v3730 = vsub.f32 %v3705, %v3725
    %v3731 = vsub.f32 %v3706, %v3726
    %v3732 = vmul.f32 %v3727, %v3727
    %v3733 = vmul.f32 %v3728, %v3728
    %v3734 = vmul.f32 %v3729, %v3729
    %v3735 = vmul.f32 %v3730, %v3730
    %v3736 = vmul.f32 %v3731, %v3731
    %v3737 = vsel %vm206, %v3732, 0.0
    %3738 = vadd.xlane.f32.xlu0 %v3737
    %v3739 = vpop.xlane.xlu0 %3738
    %v3740 = vsel %vm206, %v3733, 0.0
    %3741 = vadd.xlane.f32.xlu0 %v3740
    %v3742 = vpop.xlane.xlu0 %3741
    %v3743 = vsel %vm206, %v3734, 0.0
    %3744 = vadd.xlane.f32.xlu0 %v3743
    %v3745 = vpop.xlane.xlu0 %3744
    %v3746 = vsel %vm206, %v3735, 0.0
    %3747 = vadd.xlane.f32.xlu0 %v3746
    %v3748 = vpop.xlane.xlu0 %3747
    %v3749 = vsel %vm1764, %v3736, 0.0
    %3750 = vadd.xlane.f32.xlu0 %v3749
    %v3751 = vpop.xlane.xlu0 %3750
    %v3752 = vmul.f32 %v3739, %v1768
    %v3753 = vmul.f32 %v3742, %v1768
    %v3754 = vmul.f32 %v3745, %v1768
    %v3755 = vmul.f32 %v3748, %v1768
    %v3756 = vmul.f32 %v3751, %v1768
    %v3757 = vadd.f32 %v3752, 1e-05
    %v3758 = vadd.f32 %v3753, 1e-05
    %v3759 = vadd.f32 %v3754, 1e-05
    %v3760 = vadd.f32 %v3755, 1e-05
    %v3761 = vadd.f32 %v3756, 1e-05
    %v3762 = vrsqrt.pop %v3757
    %v3763 = vrsqrt.pop %v3758
    %v3764 = vrsqrt.pop %v3759
    %v3765 = vrsqrt.pop %v3760
    %v3766 = vrsqrt.pop %v3761
    %v3767 = vmul.f32 %v3727, %v3762
    %v3768 = vmul.f32 %v3728, %v3763
    %v3769 = vmul.f32 %v3729, %v3764
    %v3770 = vmul.f32 %v3730, %v3765
    %v3771 = vmul.f32 %v3731, %v3766
    %v3772 = vlaneseq
    %v3773 = vshrl.u32 %v3772, 7
    %v3774 = vsub.s32 0, %v3773
    %v3775 = vrot.slane %v2163, %v3774
    %v3776 = vmul.f32 %v3767, %v3775
    %v3777 = vmul.f32 %v3768, %v3775
    %v3778 = vmul.f32 %v3769, %v3775
    %v3779 = vmul.f32 %v3770, %v3775
    %v3780 = vmul.f32 %v3771, %v3775
    %v3781 = vlaneseq
    %v3782 = vshrl.u32 %v3781, 7
    %v3783 = vsub.s32 1, %v3782
    %v3784 = vrot.slane %v2163, %v3783
    %v3785 = vadd.f32 %v3776, %v3784
    %v3786 = vadd.f32 %v3777, %v3784
    %v3787 = vadd.f32 %v3778, %v3784
    %v3788 = vadd.f32 %v3779, %v3784
    %v3789 = vadd.f32 %v3780, %v3784
    %v3790 = vlaneseq
    %v3791 = vshrl.u32 %v3790, 7
    %v3792 = vsub.s32 1, %v3791
    %v3793 = vrot.slane %v2139, %v3792
    %v3795 = vsel %vm206, %v3785, 0
    %v3798 = vsel %vm206, %v3786, 0
    %v3801 = vsel %vm206, %v3787, 0
    %v3804 = vsel %vm206, %v3788, 0
    %v3807 = vsel %vm206, %v3789, 0
    %3809 = vmatprep.subr.mxu0 0.0
    %3810 = vmatpush1.msra.mxu0 %v2141
    %3811 = vmatprep.subr.mxu0 0.0
    %3812 = vmatpush1.msra.mxu0 %v2142
    %3813 = vmatprep.subr.mxu0 0.0
    %3814 = vmatpush1.msra.mxu0 %v2143
    %3815 = vmatprep.subr.mxu0 0.0
    %3816 = vmatpush1.msra.mxu0 %v2144
    %3817 = vmatprep.subr.mxu0 0.0
    %3818 = vmatpush1.msra.mxu0 0.0
    %3819 = vmatprep.subr.mxu0 0.0
    %3820 = vmatpush1.msra.mxu0 0.0
    %3821 = vmatprep.subr.mxu0 0.0
    %3822 = vmatpush1.msra.mxu0 0.0
    %3823 = vmatprep.subr.mxu0 0.0
    %3824 = vmatpush1.msra.mxu0 0.0
    %3825 = vmatprep.subr.mxu0 0.0
    %3826 = vmatpush1.msra.mxu0 0.0
    %3827 = vmatprep.subr.mxu0 0.0
    %3828 = vmatpush1.msra.mxu0 0.0
    %3829 = vmatprep.subr.mxu0 0.0
    %3830 = vmatpush1.msra.mxu0 0.0
    %3831 = vmatprep.subr.mxu0 0.0
    %3832 = vmatpush1.msra.mxu0 0.0
    %3833 = vmatprep.subr.mxu0 0.0
    %3834 = vmatpush1.msra.mxu0 0.0
    %3835 = vmatprep.subr.mxu0 0.0
    %3836 = vmatpush1.msra.mxu0 0.0
    %3837 = vmatprep.subr.mxu0 0.0
    %3838 = vmatpush1.msra.mxu0 0.0
    %3839 = vmatprep.subr.mxu0 0.0
    %3840 = vmatpush1.msra.mxu0 0.0
    %3841 = vmatprep.subr.mxu0 0.0
    %3842 = vmatpush1.msra.mxu0 0.0
    %3843 = vmatprep.subr.mxu0 0.0
    %3844 = vmatpush1.msra.mxu0 0.0
    %3845 = vmatprep.subr.mxu0 0.0
    %3846 = vmatpush1.msra.mxu0 0.0
    %3847 = vmatprep.subr.mxu0 0.0
    %3848 = vmatpush1.msra.mxu0 0.0
    %3849 = vmatprep.subr.mxu0 0.0
    %3850 = vmatpush1.msra.mxu0 0.0
    %3851 = vmatprep.subr.mxu0 0.0
    %3852 = vmatpush1.msra.mxu0 0.0
    %3853 = vmatprep.subr.mxu0 0.0
    %3854 = vmatpush1.msra.mxu0 0.0
    %3855 = vmatprep.subr.mxu0 0.0
    %3856 = vmatpush1.msra.mxu0 0.0
    %3857 = vmatprep.subr.mxu0 0.0
    %3858 = vmatpush1.msra.mxu0 0.0
    %3859 = vmatprep.subr.mxu0 0.0
    %3860 = vmatpush1.msra.mxu0 0.0
    %3861 = vmatprep.subr.mxu0 0.0
    %3862 = vmatpush1.msra.mxu0 0.0
    %3863 = vmatprep.subr.mxu0 0.0
    %3864 = vmatpush1.msra.mxu0 0.0
    %3865 = vmatprep.subr.mxu0 0.0
    %3866 = vmatpush1.msra.mxu0 0.0
    %3867 = vmatprep.subr.mxu0 0.0
    %3868 = vmatpush1.msra.mxu0 0.0
    %3869 = vmatprep.subr.mxu0 0.0
    %3870 = vmatpush1.msra.mxu0 0.0
    %3871 = vmatprep.subr.mxu0 0.0
    %3872 = vmatpush1.msra.mxu0 0.0
    %3873 = vmatprep.mubr.f32.mxu0 0.0
    %3874 = vmatmul.mubr.f32.gmra.mrb[0].mxu0 %v3795
    %v3875 = vpop.f32.mrb[0].mxu0
    %v3876 = vadd.f32 %v3793, %v3875
    %v3877 = vpop.f32.mrb[0].mxu0
    %3878 = vmatprep.mubr.f32.mxu0 0.0
    %3879 = vmatmul.mubr.f32.gmra.mrb[0].mxu0 %v3798
    %v3880 = vpop.f32.mrb[0].mxu0
    %v3881 = vadd.f32 %v3793, %v3880
    %v3882 = vpop.f32.mrb[0].mxu0
    %3883 = vmatprep.mubr.f32.mxu0 0.0
    %3884 = vmatmul.mubr.f32.gmra.mrb[0].mxu0 %v3801
    %v3885 = vpop.f32.mrb[0].mxu0
    %v3886 = vadd.f32 %v3793, %v3885
    %v3887 = vpop.f32.mrb[0].mxu0
    %3888 = vmatprep.mubr.f32.mxu0 0.0
    %3889 = vmatmul.mubr.f32.gmra.mrb[0].mxu0 %v3804
    %v3890 = vpop.f32.mrb[0].mxu0
    %v3891 = vadd.f32 %v3793, %v3890
    %v3892 = vpop.f32.mrb[0].mxu0
    %3893 = vmatprep.mubr.f32.mxu0 0.0
    %3894 = vmatmul.mubr.f32.gmra.mrb[0].mxu0 %v3807
    %v3895 = vpop.f32.mrb[0].mxu0
    %v3896 = vadd.f32 %v3793, %v3895
    %v3897 = vpop.f32.mrb[0].mxu0
    %3898 = vdwg.mxu0
    %v3899 = vmax.f32 %v3876, 0.0
    %v3900 = vmax.f32 %v3881, 0.0
    %v3901 = vmax.f32 %v3886, 0.0
    %v3902 = vmax.f32 %v3891, 0.0
    %v3903 = vmax.f32 %v3896, 0.0
    %v3904 = vlaneseq
    %v3905 = vshrl.u32 %v3904, 7
    %v3906 = vsub.s32 2, %v3905
    %v3907 = vrot.slane %v2163, %v3906
    %3908 = vmatprep.subr.mxu0 0.0
    %3909 = vmatpush1.msra.mxu0 %v2146
    %3910 = vmatprep.subr.mxu0 0.0
    %3911 = vmatpush1.msra.mxu0 %v2147
    %3912 = vmatprep.subr.mxu0 0.0
    %3913 = vmatpush1.msra.mxu0 %v2148
    %3914 = vmatprep.subr.mxu0 0.0
    %3915 = vmatpush1.msra.mxu0 %v2149
    %3916 = vmatprep.subr.mxu0 0.0
    %3917 = vmatpush1.msra.mxu0 %v2150
    %3918 = vmatprep.subr.mxu0 0.0
    %3919 = vmatpush1.msra.mxu0 %v2151
    %3920 = vmatprep.subr.mxu0 0.0
    %3921 = vmatpush1.msra.mxu0 %v2152
    %3922 = vmatprep.subr.mxu0 0.0
    %3923 = vmatpush1.msra.mxu0 %v2153
    %3924 = vmatprep.subr.mxu0 0.0
    %3925 = vmatpush1.msra.mxu0 %v2154
    %3926 = vmatprep.subr.mxu0 0.0
    %3927 = vmatpush1.msra.mxu0 %v2155
    %3928 = vmatprep.subr.mxu0 0.0
    %3929 = vmatpush1.msra.mxu0 %v2156
    %3930 = vmatprep.subr.mxu0 0.0
    %3931 = vmatpush1.msra.mxu0 %v2157
    %3932 = vmatprep.subr.mxu0 0.0
    %3933 = vmatpush1.msra.mxu0 %v2158
    %3934 = vmatprep.subr.mxu0 0.0
    %3935 = vmatpush1.msra.mxu0 %v2159
    %3936 = vmatprep.subr.mxu0 0.0
    %3937 = vmatpush1.msra.mxu0 %v2160
    %3938 = vmatprep.subr.mxu0 0.0
    %3939 = vmatpush1.msra.mxu0 %v2161
    %3940 = vmatprep.subr.mxu0 0.0
    %3941 = vmatpush1.msra.mxu0 0.0
    %3942 = vmatprep.subr.mxu0 0.0
    %3943 = vmatpush1.msra.mxu0 0.0
    %3944 = vmatprep.subr.mxu0 0.0
    %3945 = vmatpush1.msra.mxu0 0.0
    %3946 = vmatprep.subr.mxu0 0.0
    %3947 = vmatpush1.msra.mxu0 0.0
    %3948 = vmatprep.subr.mxu0 0.0
    %3949 = vmatpush1.msra.mxu0 0.0
    %3950 = vmatprep.subr.mxu0 0.0
    %3951 = vmatpush1.msra.mxu0 0.0
    %3952 = vmatprep.subr.mxu0 0.0
    %3953 = vmatpush1.msra.mxu0 0.0
    %3954 = vmatprep.subr.mxu0 0.0
    %3955 = vmatpush1.msra.mxu0 0.0
    %3956 = vmatprep.subr.mxu0 0.0
    %3957 = vmatpush1.msra.mxu0 0.0
    %3958 = vmatprep.subr.mxu0 0.0
    %3959 = vmatpush1.msra.mxu0 0.0
    %3960 = vmatprep.subr.mxu0 0.0
    %3961 = vmatpush1.msra.mxu0 0.0
    %3962 = vmatprep.subr.mxu0 0.0
    %3963 = vmatpush1.msra.mxu0 0.0
    %3964 = vmatprep.subr.mxu0 0.0
    %3965 = vmatpush1.msra.mxu0 0.0
    %3966 = vmatprep.subr.mxu0 0.0
    %3967 = vmatpush1.msra.mxu0 0.0
    %3968 = vmatprep.subr.mxu0 0.0
    %3969 = vmatpush1.msra.mxu0 0.0
    %3970 = vmatprep.subr.mxu0 0.0
    %3971 = vmatpush1.msra.mxu0 0.0
    %3972 = vmatprep.mubr.f32.mxu0 0.0
    %3973 = vmatmul.mubr.f32.gmra.mrb[0].mxu0 %v3899
    %v3974 = vpop.f32.mrb[0].mxu0
    %v3975 = vadd.f32 %v3907, %v3974
    %v3976 = vpop.f32.mrb[0].mxu0
    %3977 = vmatprep.mubr.f32.mxu0 0.0
    %3978 = vmatmul.mubr.f32.gmra.mrb[0].mxu0 %v3900
    %v3979 = vpop.f32.mrb[0].mxu0
    %v3980 = vpop.f32.mrb[0].mxu0
    %3981 = vmatprep.mubr.f32.mxu0 0.0
    %3982 = vmatmul.mubr.f32.gmra.mrb[0].mxu0 %v3901
    %v3983 = vpop.f32.mrb[0].mxu0
    %v3984 = vadd.f32 %v3907, %v3983
    %v3985 = vpop.f32.mrb[0].mxu0
    %3986 = vmatprep.mubr.f32.mxu0 0.0
    %3987 = vmatmul.mubr.f32.gmra.mrb[0].mxu0 %v3902
    %v3988 = vpop.f32.mrb[0].mxu0
    %v3989 = vpop.f32.mrb[0].mxu0
    %3990 = vmatprep.mubr.f32.mxu0 0.0
    %3991 = vmatmul.mubr.f32.gmra.mrb[0].mxu0 %v3903
    %v3992 = vpop.f32.mrb[0].mxu0
    %v3993 = vpop.f32.mrb[0].mxu0
    %3994 = vdwg.mxu0
    %v3995 = vadd.f32 %v3785, %v3975
    %v3996 = vadd.f32 %v3787, %v3984
    %v3997 = vsel %vm206, %v3995, 0.0
    %3998 = vadd.xlane.f32.xlu0 %v3997
    %v3999 = vpop.xlane.xlu0 %3998
    %v4000 = vsel %vm206, %v3996, 0.0
    %4001 = vadd.xlane.f32.xlu0 %v4000
    %v4002 = vpop.xlane.xlu0 %4001
    %v4003 = vmul.f32 %v3999, %v1768
    %v4004 = vmul.f32 %v4002, %v1768
    %v4005 = vsub.f32 %v3995, %v4003
    %v4006 = vsub.f32 %v3996, %v4004
    %v4007 = vmul.f32 %v4005, %v4005
    %v4008 = vmul.f32 %v4006, %v4006
    %v4009 = vsel %vm206, %v4007, 0.0
    %4010 = vadd.xlane.f32.xlu0 %v4009
    %v4011 = vpop.xlane.xlu0 %4010
    %v4012 = vsel %vm206, %v4008, 0.0
    %4013 = vadd.xlane.f32.xlu0 %v4012
    %v4014 = vpop.xlane.xlu0 %4013
    %v4015 = vmul.f32 %v4011, %v1768
    %v4016 = vmul.f32 %v4014, %v1768
    %v4017 = vadd.f32 %v4015, 1e-05
    %v4018 = vadd.f32 %v4016, 1e-05
    %v4019 = vrsqrt.pop %v4017
    %v4020 = vrsqrt.pop %v4018
    %v4021 = vmul.f32 %v4005, %v4019
    %v4022 = vmul.f32 %v4006, %v4020
    %v4023 = vlaneseq
    %v4024 = vshrl.u32 %v4023, 7
    %v4025 = vsub.s32 3, %v4024
    %v4026 = vrot.slane %v2163, %v4025
    %v4027 = vmul.f32 %v4021, %v4026
    %v4028 = vmul.f32 %v4022, %v4026
    %v4029 = vlaneseq
    %v4030 = vshrl.u32 %v4029, 7
    %v4031 = vsub.s32 4, %v4030
    %v4032 = vrot.slane %v2163, %v4031
    %v4033 = vadd.f32 %v4027, %v4032
    %v4034 = vadd.f32 %v4028, %v4032
    %v4035 = vsel %vm42, %v4033, %v4034
    %v4036 = vld [vmem:[%s9] sm:$0x3]
    %v4037 = vsel %vm1764, %v4035, 0.0
    %4038 = vadd.xlane.f32.xlu0 %v4037
    %v4039 = vpop.xlane.xlu0 %4038
    %v4040 = vmul.f32 %v4039, %v1768
    %v4041 = vsub.f32 %v4035, %v4040
    %v4042 = vmul.f32 %v4041, %v4041
    %v4043 = vsel %vm1764, %v4042, 0.0
    %4044 = vadd.xlane.f32.xlu0 %v4043
    %v4045 = vpop.xlane.xlu0 %4044
    %v4046 = vmul.f32 %v4045, %v1768
    %v4047 = vadd.f32 %v4046, 1e-05
    %v4048 = vrsqrt.pop %v4047
    %v4049 = vmul.f32 %v4041, %v4048
    %v4050 = vlaneseq
    %v4051 = vshrl.u32 %v4050, 7
    %v4052 = vsub.s32 0, %v4051
    %v4053 = vrot.slane %v4036, %v4052
    %v4054 = vmul.f32 %v4049, %v4053
    %v4055 = vlaneseq
    %v4056 = vshrl.u32 %v4055, 7
    %v4057 = vsub.s32 1, %v4056
    %v4058 = vrot.slane %v4036, %v4057
    %v4059 = vadd.f32 %v4054, %v4058
    %4060 = vst.msk [vmem:[#allocation2] sm:$0x3] %vm1764, %v4059
    // Predicated region
    $region42: #{image_bert_forward.1} parent=1 // pred_check
      _
    $region43: #{image_bert_forward.1} parent=1 // pred_check_branch
      %4062 = sbr.rel (0) target = $region45
    $region44: #{image_bert_forward.1} parent=1 // pred_region
      %s4064 = ssub.s32 32, 32
      %4065 = vsyncadd [#allocation3], %s4064
      %s4067 = sshll.u32 [#allocation2], 4
      %s4068 = int_to_ptr.vmem [resolvable:$true] %s4067
      %4070 = dma.vmem_to_hbm [thread:$0]  %s4068, 32, %s10, [#allocation3]
    $region45: #{image_bert_forward.1} parent=1 // pred_fallthru
      _
    // Predicated region
    $region46: #{image_bert_forward.1} parent=1 // pred_check
      _
    $region47: #{image_bert_forward.1} parent=1 // pred_check_branch
      %4072 = sbr.rel (0) target = $region49
    $region48: #{image_bert_forward.1} parent=1 // pred_region
      %4073 = dma.done [#allocation3], 32
    $region49: #{image_bert_forward.1} parent=1 // pred_fallthru
      _
    %4074 = vsyncpa [#allocation3], 1

</llo_original>
